<compile_context>
chip_gen: v7x
topology: tpu7x:2x2x1
jax: 0.10.0
libtpu: 0.0.40
codegen_flags: <defaults>
</compile_context>

<pallas_src>
import numpy as np
import jax
import jax.numpy as jnp
from jax import lax
from jax.experimental import pallas as pl
from jax.experimental.pallas import tpu as pltpu

EMBEDDING_DIM = 32        # embedding_dim
H_DIM = 32                # h_dim
MLP_HID = 512             # hardcoded middle dim of mlp_pre_pool
BOTTLENECK_DIM = 128      # bottleneck_dim
BN_EPS = 1e-5


def _pool_kernel(count_ref,            # SMEM (num_seqs_pad,) int32  [scalar prefetch]
                 pos_ref,              # (G, Pmax, 2)    f32   end positions (clamped-gather padded)
                 h_ref,                # (G, Pmax, H)    bf16  hidden states
                 a_ref,                # (2, 512)        f32   A = Wspa @ W1a
                 w1b_ref,              # (H, 512)        bf16
                 g1_ref, be1_ref,      # (1, 512)        f32
                 w2_ref,               # (512, BOT)      bf16
                 g2_ref, be2_ref,      # (1, BOT)        f32
                 out_ref):             # (G, Pmax, BOT)  f32
    G, Pmax, _ = pos_ref.shape
    h_dim = h_ref.shape[2]
    mlp_hid = w1b_ref.shape[1]
    bot = out_ref.shape[2]

    # per-sequence valid ped counts for this grid step (G is a small static constant)
    g0 = pl.program_id(0) * G
    seq_iota = lax.broadcasted_iota(jnp.int32, (G, 1), 0)
    p_col = jnp.zeros((G, 1), jnp.int32)
    for k in range(G):
        p_col = jnp.where(seq_iota == k, count_ref[g0 + k], p_col)       # (G,1)
    pf = p_col.astype(jnp.float32)                                       # (G,1)
    pf3 = pf[..., None]                                                  # (G,1,1)
    inv_p = 1.0 / pf3                                                    # (G,1,1)
    inv_n = inv_p * inv_p                                                # 1/(p*p)

    # ---- layer 1: Linear(E+H, 512) via affine decomposition -------------------
    pos = pos_ref[...]                                                   # (G,Pmax,2)
    a = a_ref[...]                                                       # (2,512)
    # rel_pos @ (Wspa@W1a): K=2 contraction kept on the VPU (broadcast mul-adds)
    pos_proj = pos[..., 0:1] * a[0:1, :] + pos[..., 1:2] * a[1:2, :]     # (G,Pmax,512)
    u = pos_proj + jnp.dot(h_ref[...].reshape(G * Pmax, h_dim), w1b_ref[...],
                           preferred_element_type=jnp.float32
                           ).reshape(G, Pmax, mlp_hid)                   # (G,Pmax,512)

    # BN1 stats by linearity: z1[g, i*P+j] = u[g,j] - pos_proj[g,i], i,j < p_g.
    vj = lax.broadcasted_iota(jnp.int32, (G, Pmax, 1), 1) < p_col[..., None]   # (G,Pmax,1)
    um = jnp.where(vj, u, 0.0)
    pm = jnp.where(vj, pos_proj, 0.0)
    su  = jnp.sum(um,      axis=1, keepdims=True)                        # (G,1,512)
    sp  = jnp.sum(pm,      axis=1, keepdims=True)
    su2 = jnp.sum(um * um, axis=1, keepdims=True)
    sp2 = jnp.sum(pm * pm, axis=1, keepdims=True)
    mu1 = (su - sp) * inv_p                                              # (G,1,512)
    ex1 = (pf3 * su2 - 2.0 * su * sp + pf3 * sp2) * inv_n
    var1 = jnp.maximum(ex1 - mu1 * mu1, 0.0)                             # clamp E[x^2]-E[x]^2
    s1 = g1_ref[...] * lax.rsqrt(var1 + BN_EPS)                          # (G,1,512)
    t1 = be1_ref[...] - mu1 * s1

    # Fused z1 -> BN affine -> ReLU -> bf16: the only (P^2,512) buffer is bf16 h1.
    # (z1*s1 + t1) == (u*s1 + t1)[j] - (pos_proj*s1)[i]
    u_s = u * s1 + t1                                                    # (G,Pmax,512)
    p_s = pos_proj * s1                                                  # (G,Pmax,512)
    h1_bf = jnp.maximum(u_s[:, None, :, :] - p_s[:, :, None, :], 0.0
                        ).astype(jnp.bfloat16)                           # (G,Pi,Pj,512)

    # ---- layer 2: Linear(512, BOT) + BatchNorm1d(BOT) + ReLU -------------------
    z2 = jnp.dot(h1_bf.reshape(G * Pmax * Pmax, mlp_hid), w2_ref[...],
                 preferred_element_type=jnp.float32
                 ).reshape(G, Pmax, Pmax, bot)                           # f32
    pc4 = p_col[..., None, None]                                         # (G,1,1,1)
    ii = lax.broadcasted_iota(jnp.int32, (G, Pmax, Pmax, 1), 1)
    jj = lax.broadcasted_iota(jnp.int32, (G, Pmax, Pmax, 1), 2)
    valid = jnp.logical_and(ii < pc4, jj < pc4).astype(jnp.float32)      # (G,Pi,Pj,1)

    z2m = z2 * valid
    inv_n4 = inv_n[..., None]                                            # (G,1,1,1)
    mu2 = jnp.sum(jnp.sum(z2m, axis=2, keepdims=True),
                  axis=1, keepdims=True) * inv_n4                        # (G,1,1,BOT)
    ex2 = jnp.sum(jnp.sum(z2m * z2m, axis=2, keepdims=True),
                  axis=1, keepdims=True) * inv_n4
    var2 = jnp.maximum(ex2 - mu2 * mu2, 0.0)
    s2 = g2_ref[...] * lax.rsqrt(var2 + BN_EPS)
    t2 = be2_ref[...] - mu2 * s2
    # masked ReLU: invalid pairs -> 0, safe for the max since valid ReLU outputs >= 0
    h2 = jnp.maximum((z2 * s2 + t2) * valid, 0.0)                        # (G,Pi,Pj,BOT)

    # ---- max-pool over the "other ped" index j ----------------------------------
    out_ref[...] = jnp.max(h2, axis=2).astype(out_ref.dtype)             # (G,Pmax,BOT)


def init_params(key,
                embedding_dim=EMBEDDING_DIM, h_dim=H_DIM,
                mlp_hid=MLP_HID, bottleneck_dim=BOTTLENECK_DIM):
    """Deterministic synthetic parameters (same shapes as the PyTorch module)."""
    ks = jax.random.split(key, 10)
    f32 = jnp.float32
    wspa = 0.1 * jax.random.normal(ks[0], (2, embedding_dim), f32)
    bspa = 0.1 * jax.random.normal(ks[1], (1, embedding_dim), f32)
    w1 = 0.1 * jax.random.normal(ks[2], (embedding_dim + h_dim, mlp_hid), f32)
    b1 = 0.1 * jax.random.normal(ks[3], (1, mlp_hid), f32)
    w2 = 0.1 * jax.random.normal(ks[4], (mlp_hid, bottleneck_dim), f32)
    b2 = 0.1 * jax.random.normal(ks[5], (1, bottleneck_dim), f32)
    g1 = 1.0 + 0.05 * jax.random.normal(ks[6], (1, mlp_hid), f32)
    be1 = 0.05 * jax.random.normal(ks[7], (1, mlp_hid), f32)
    g2 = 1.0 + 0.05 * jax.random.normal(ks[8], (1, bottleneck_dim), f32)
    be2 = 0.05 * jax.random.normal(ks[9], (1, bottleneck_dim), f32)
    return {"wspa": wspa, "bspa": bspa,
            "w1a": w1[:embedding_dim], "w1b": w1[embedding_dim:], "b1": b1,
            "g1": g1, "be1": be1, "w2": w2, "b2": b2, "g2": g2, "be2": be2}


def _vmem_limit_bytes(G, Pmax, h_dim, mlp_hid, bot):
    """Size the scoped-VMEM limit from the actual working set, capped per chip."""
    try:
        info = pltpu.get_tpu_info()
        phys = (getattr(info, "vmem_capacity_bytes", None)
                or getattr(info, "vmem_size_bytes", None)
                or (128 << 20))
    except Exception:
        phys = 128 << 20
    cap = int(phys) * 3 // 4          # ~48 MiB on v7x (64 MiB VMEM), ~96 MiB on v5e/v6e
    m = G * Pmax * Pmax
    pair = m * (mlp_hid * 4 + mlp_hid * 2 + bot * 4 + bot * 4)   # f32 pair temp + bf16 h1 + z2 + h2
    weights = 2 * (4 * mlp_hid * 4 + 2 * bot * 4
                   + (h_dim * mlp_hid + mlp_hid * bot) * 2)
    io = 2 * G * Pmax * (2 * 4 + h_dim * 2 + bot * 4)            # double-buffered per-step blocks
    need = pair + pair // 4 + weights + io + (4 << 20)
    return int(max(16 << 20, min(need, cap)))


def _build_pool_call(num_seqs_pad, G, Pmax, h_dim, mlp_hid, bot,
                     vmem_limit, single_buffer_weights):
    wmode = (pl.Buffered(1)
             if (single_buffer_weights and hasattr(pl, "Buffered")) else None)

    def cidx(s, cnt):                 # weights: constant block index -> VMEM-resident
        return (0, 0)

    def wspec(shape):
        return pl.BlockSpec(shape, cidx, pipeline_mode=wmode)

    grid_spec = pltpu.PrefetchScalarGridSpec(
        num_scalar_prefetch=1,
        grid=(num_seqs_pad // G,),
        in_specs=[
            pl.BlockSpec((G, Pmax, 2), lambda s, cnt: (s, 0, 0)),
            pl.BlockSpec((G, Pmax, h_dim), lambda s, cnt: (s, 0, 0)),
            wspec((2, mlp_hid)),
            wspec((h_dim, mlp_hid)),
            wspec((1, mlp_hid)),
            wspec((1, mlp_hid)),
            wspec((mlp_hid, bot)),
            wspec((1, bot)),
            wspec((1, bot)),
        ],
        out_specs=pl.BlockSpec((G, Pmax, bot), lambda s, cnt: (s, 0, 0)),
    )
    return pl.pallas_call(
        _pool_kernel,
        out_shape=jax.ShapeDtypeStruct((num_seqs_pad, Pmax, bot), jnp.float32),
        grid_spec=grid_spec,
        compiler_params=pltpu.CompilerParams(
            dimension_semantics=("parallel",),     # sequences shard across v7x's 2 TCs
            vmem_limit_bytes=vmem_limit),
    )


def pool_hidden_net_forward(params, h_states, seq_start_end, end_pos):
    """Pallas-backed equivalent of PoolHiddenNet.forward.

    h_states:      (num_layers, batch, h_dim)
    seq_start_end: python list of (start, end) int pairs (static, mirrors .item())
    end_pos:       (batch, 2)
    returns:       (batch, bottleneck_dim)
    """
    h_dim = params["w1b"].shape[0]
    mlp_hid = params["w1b"].shape[1]
    bot = params["w2"].shape[1]
    h_flat = h_states.reshape(-1, h_dim)

    num_seqs = len(seq_start_end)
    starts = np.asarray([int(s) for s, _ in seq_start_end], np.int32)
    ends = np.asarray([int(e) for _, e in seq_start_end], np.int32)
    counts_np = (ends - starts).astype(np.int32)
    p_max = int(counts_np.max())
    Pmax = max(8, ((p_max + 7) // 8) * 8)          # multiple of 8 (sublane alignment)

    # Sequences per grid step: target >=256 pair rows (256-wide MXU on v6e/v7x) but
    # keep >=2 grid steps when possible so both v7x TensorCores get work.
    g_fill = max(1, -(-256 // (Pmax * Pmax)))
    g_par = max(1, -(-num_seqs // 2))
    G = max(1, min(g_fill, g_par))
    num_seqs_pad = -(-num_seqs // G) * G
    n_dummy = num_seqs_pad - num_seqs
    counts_pad = (np.concatenate([counts_np, np.ones(n_dummy, np.int32)])
                  if n_dummy else counts_np)
    starts_pad = (np.concatenate([starts, np.zeros(n_dummy, np.int32)])
                  if n_dummy else starts)

    # One clamped gather builds the padded (seq, ped) layout (no per-seq .at[].set
    # loop).  Padded rows hold copies of real rows; they are masked in the kernel.
    slot = np.arange(Pmax, dtype=np.int32)
    gidx = jnp.asarray(starts_pad[:, None]
                       + np.minimum(slot[None, :], counts_pad[:, None] - 1))
    pos_pad = end_pos[gidx]                                   # (num_seqs_pad, Pmax, 2) f32
    h_pad = h_flat[gidx].astype(jnp.bfloat16)                 # MXU operand
    counts = jnp.asarray(counts_pad, dtype=jnp.int32)

    # Fold spatial_embedding into layer 1: (rel @ Wspa) @ W1a == rel @ (Wspa @ W1a)
    a_mat = params["wspa"] @ params["w1a"]                    # (2, mlp_hid) f32
    w1b_bf = params["w1b"].astype(jnp.bfloat16)
    w2_bf = params["w2"].astype(jnp.bfloat16)

    vmem_limit = _vmem_limit_bytes(G, Pmax, h_dim, mlp_hid, bot)
    args = (counts, pos_pad, h_pad, a_mat, w1b_bf,
            params["g1"], params["be1"], w2_bf, params["g2"], params["be2"])
    try:
        out_pad = _build_pool_call(num_seqs_pad, G, Pmax, h_dim, mlp_hid, bot,
                                   vmem_limit, single_buffer_weights=True)(*args)
    except Exception:
        # pipeline_mode=pl.Buffered(1) not accepted on this jax version: fall back
        # to default double-buffered weight blocks (lowering errors are synchronous).
        out_pad = _build_pool_call(num_seqs_pad, G, Pmax, h_dim, mlp_hid, bot,
                                   vmem_limit, single_buffer_weights=False)(*args)

    # One gather undoes the padding (no per-sequence slice + concatenate).
    k_of = np.repeat(np.arange(num_seqs, dtype=np.int32), counts_np)
    slot_of = np.concatenate([np.arange(c, dtype=np.int32) for c in counts_np])
    flat_idx = jnp.asarray(k_of * Pmax + slot_of)
    return out_pad.reshape(num_seqs_pad * Pmax, bot)[flat_idx]

    # TODO(synk): for very large P (Pmax >~128 on v7x) tile the anchor (i) axis with
    # an inner grid dim; layer-1 stats already use the linearity trick, so only
    # layer-2 BN needs a two-pass sum/sumsq-scratch scheme.


def _reference(params, h_states, seq_start_end, end_pos):
    """Pure-JAX f32 mirror of the PyTorch forward (training-mode BatchNorm)."""
    h_dim = params["w1b"].shape[0]
    h_flat = h_states.reshape(-1, h_dim)
    w1 = jnp.concatenate([params["w1a"], params["w1b"]], axis=0)
    outs = []
    for (start, end) in seq_start_end:
        P = int(end) - int(start)
        curr_h = h_flat[start:end]
        curr_pos = end_pos[start:end]
        rel = jnp.tile(curr_pos, (P, 1)) - jnp.repeat(curr_pos, P, axis=0)
        hid = jnp.tile(curr_h, (P, 1))
        emb = rel @ params["wspa"] + params["bspa"]
        x = jnp.concatenate([emb, hid], axis=1)
        z1 = x @ w1 + params["b1"]
        mu1 = z1.mean(0, keepdims=True)
        v1 = jnp.square(z1 - mu1).mean(0, keepdims=True)
        h1 = jnp.maximum(params["g1"] * (z1 - mu1) / jnp.sqrt(v1 + BN_EPS)
                         + params["be1"], 0.0)
        z2 = h1 @ params["w2"] + params["b2"]
        mu2 = z2.mean(0, keepdims=True)
        v2 = jnp.square(z2 - mu2).mean(0, keepdims=True)
        h2 = jnp.maximum(params["g2"] * (z2 - mu2) / jnp.sqrt(v2 + BN_EPS)
                         + params["be2"], 0.0)
        outs.append(h2.reshape(P, P, -1).max(axis=1))
    return jnp.concatenate(outs, axis=0)


if __name__ == "__main__":
    key = jax.random.PRNGKey(0)
    kp, kh, ke = jax.random.split(key, 3)

    params = init_params(kp)

    # three ragged sequences (8, 5, 3 peds) -> batch = 16; exercises masking and
    # the per-grid-step sequence batching / dummy-sequence padding paths.
    seq_start_end = [(0, 8), (8, 13), (13, 16)]
    batch = 16
    h_states = jax.random.normal(kh, (1, batch, H_DIM), jnp.float32)   # (layers, batch, h_dim)
    end_pos = jax.random.normal(ke, (batch, 2), jnp.float32)           # (batch, 2)

    out = pool_hidden_net_forward(params, h_states, seq_start_end, end_pos)
    out = jax.block_until_ready(out)

    assert out.shape == (batch, BOTTLENECK_DIM), out.shape
    ref = _reference(params, h_states, seq_start_end, end_pos)
    # tolerance widened vs pure-f32 because both matmuls use bf16 MXU operands
    assert jnp.allclose(out, ref, rtol=4e-2, atol=4e-2), "mismatch vs pure-JAX reference"

    # TODO(synk): BatchNorm running-stat updates (training-mode side effect) are not
    # materialized; P == 1 sequences normalize with rsqrt(eps) instead of raising
    # like PyTorch's batch-size-1 BatchNorm, and the bias cancellation is only valid
    # for training-mode (batch-statistics) BN.
    print("KERNEL_OK")
</pallas_src>

<mosaic_0001>
module attributes {stable_mosaic.version = 11 : i64} {
  func.func @_pool_kernel(%arg0: i32, %arg1: memref<4xi32, #tpu.memory_space<smem>>, %arg2: memref<2x8x2xf32, #tpu.memory_space<vmem>>, %arg3: memref<2x8x32xbf16, #tpu.memory_space<vmem>>, %arg4: memref<2x512xf32, #tpu.memory_space<vmem>>, %arg5: memref<32x512xbf16, #tpu.memory_space<vmem>>, %arg6: memref<1x512xf32, #tpu.memory_space<vmem>>, %arg7: memref<1x512xf32, #tpu.memory_space<vmem>>, %arg8: memref<512x128xbf16, #tpu.memory_space<vmem>>, %arg9: memref<1x128xf32, #tpu.memory_space<vmem>>, %arg10: memref<1x128xf32, #tpu.memory_space<vmem>>, %arg11: memref<2x8x128xf32, #tpu.memory_space<vmem>>) attributes {dimension_semantics = [#tpu.dimension_semantics<parallel>], iteration_bounds = array<i64: 2>, scalar_prefetch = 1 : i64, scratch_operands = 0 : i64, tpu.core_type = #tpu.core_type<tc>, window_params = [{transform_indices = @transform_0, window_bounds = array<i64: 2, 8, 2>}, {transform_indices = @transform_1, window_bounds = array<i64: 2, 8, 32>}, {pipeline_mode = #tpu.pipeline_mode<synchronous>, transform_indices = @transform_2, window_bounds = array<i64: 2, 512>}, {pipeline_mode = #tpu.pipeline_mode<synchronous>, transform_indices = @transform_3, window_bounds = array<i64: 32, 512>}, {pipeline_mode = #tpu.pipeline_mode<synchronous>, transform_indices = @transform_4, window_bounds = array<i64: 1, 512>}, {pipeline_mode = #tpu.pipeline_mode<synchronous>, transform_indices = @transform_5, window_bounds = array<i64: 1, 512>}, {pipeline_mode = #tpu.pipeline_mode<synchronous>, transform_indices = @transform_6, window_bounds = array<i64: 512, 128>}, {pipeline_mode = #tpu.pipeline_mode<synchronous>, transform_indices = @transform_7, window_bounds = array<i64: 1, 128>}, {pipeline_mode = #tpu.pipeline_mode<synchronous>, transform_indices = @transform_8, window_bounds = array<i64: 1, 128>}, {transform_indices = @transform_9, window_bounds = array<i64: 2, 8, 128>}]} {
    %c2_i32 = arith.constant 2 : i32
    %0 = arith.muli %arg0, %c2_i32 : i32
    %1 = tpu.iota {dimensions = array<i32: 0>} : vector<2x1xi32>
    %c0_i32 = arith.constant 0 : i32
    %2 = vector.broadcast %c0_i32 : i32 to vector<2x1xi32>
    %c0_i32_0 = arith.constant 0 : i32
    %3 = vector.broadcast %c0_i32_0 : i32 to vector<2x1xi32>
    %4 = arith.cmpi eq, %1, %3 : vector<2x1xi32>
    %c0_i32_1 = arith.constant 0 : i32
    %5 = arith.addi %0, %c0_i32_1 : i32
    %6 = arith.index_cast %5 : i32 to index
    %7 = memref.load %arg1[%6] : memref<4xi32, #tpu.memory_space<smem>>
    %8 = vector.broadcast %7 : i32 to vector<2x1xi32>
    %9 = arith.select %4, %8, %2 : vector<2x1xi1>, vector<2x1xi32>
    %c1_i32 = arith.constant 1 : i32
    %10 = vector.broadcast %c1_i32 : i32 to vector<2x1xi32>
    %11 = arith.cmpi eq, %1, %10 : vector<2x1xi32>
    %c1_i32_2 = arith.constant 1 : i32
    %12 = arith.addi %0, %c1_i32_2 : i32
    %13 = arith.index_cast %12 : i32 to index
    %14 = memref.load %arg1[%13] : memref<4xi32, #tpu.memory_space<smem>>
    %15 = vector.broadcast %14 : i32 to vector<2x1xi32>
    %16 = arith.select %11, %15, %9 : vector<2x1xi1>, vector<2x1xi32>
    %17 = arith.sitofp %16 : vector<2x1xi32> to vector<2x1xf32>
    %18 = vector.shape_cast %17 : vector<2x1xf32> to vector<2x1x1xf32>
    %cst = arith.constant 1.000000e+00 : f32
    %19 = vector.broadcast %cst : f32 to vector<2x1x1xf32>
    %20 = arith.divf %19, %18 : vector<2x1x1xf32>
    %21 = arith.mulf %20, %20 : vector<2x1x1xf32>
    %c0 = arith.constant 0 : index
    %c0_3 = arith.constant 0 : index
    %c0_4 = arith.constant 0 : index
    %22 = vector.load %arg2[%c0, %c0_3, %c0_4] : memref<2x8x2xf32, #tpu.memory_space<vmem>>, vector<2x8x2xf32>
    %c0_5 = arith.constant 0 : index
    %c0_6 = arith.constant 0 : index
    %23 = vector.load %arg4[%c0_5, %c0_6] : memref<2x512xf32, #tpu.memory_space<vmem>>, vector<2x512xf32>
    %24 = vector.extract_strided_slice %22 {offsets = [0, 0, 0], sizes = [2, 8, 1], strides = [1, 1, 1]} : vector<2x8x2xf32> to vector<2x8x1xf32>
    %25 = vector.extract_strided_slice %23 {offsets = [0, 0], sizes = [1, 512], strides = [1, 1]} : vector<2x512xf32> to vector<1x512xf32>
    %26 = vector.shape_cast %25 : vector<1x512xf32> to vector<1x1x512xf32>
    %27 = vector.broadcast %24 : vector<2x8x1xf32> to vector<2x8x512xf32>
    %28 = vector.broadcast %26 : vector<1x1x512xf32> to vector<2x8x512xf32>
    %29 = arith.mulf %27, %28 : vector<2x8x512xf32>
    %30 = vector.extract_strided_slice %22 {offsets = [0, 0, 1], sizes = [2, 8, 1], strides = [1, 1, 1]} : vector<2x8x2xf32> to vector<2x8x1xf32>
    %31 = vector.extract_strided_slice %23 {offsets = [1, 0], sizes = [1, 512], strides = [1, 1]} : vector<2x512xf32> to vector<1x512xf32>
    %32 = vector.shape_cast %31 : vector<1x512xf32> to vector<1x1x512xf32>
    %33 = vector.broadcast %30 : vector<2x8x1xf32> to vector<2x8x512xf32>
    %34 = vector.broadcast %32 : vector<1x1x512xf32> to vector<2x8x512xf32>
    %35 = arith.mulf %33, %34 : vector<2x8x512xf32>
    %36 = arith.addf %29, %35 : vector<2x8x512xf32>
    %c0_7 = arith.constant 0 : index
    %c0_8 = arith.constant 0 : index
    %c0_9 = arith.constant 0 : index
    %37 = vector.load %arg3[%c0_7, %c0_8, %c0_9] : memref<2x8x32xbf16, #tpu.memory_space<vmem>>, vector<2x8x32xbf16>
    %38 = vector.shape_cast %37 : vector<2x8x32xbf16> to vector<16x32xbf16>
    %c0_10 = arith.constant 0 : index
    %c0_11 = arith.constant 0 : index
    %39 = vector.load %arg5[%c0_10, %c0_11] : memref<32x512xbf16, #tpu.memory_space<vmem>>, vector<32x512xbf16>
    %cst_12 = arith.constant dense<0.000000e+00> : vector<16x512xf32>
    %40 = tpu.matmul %38, %39, %cst_12 {dimension_numbers = #tpu.dot_dimension_numbers<[1], [0], [0], [1], [0, 0, 1, 1], [], []>} : vector<16x32xbf16>, vector<32x512xbf16>, vector<16x512xf32> -> vector<16x512xf32>
    %41 = vector.shape_cast %40 : vector<16x512xf32> to vector<2x8x512xf32>
    %42 = arith.addf %36, %41 : vector<2x8x512xf32>
    %43 = tpu.iota {dimensions = array<i32: 1>} : vector<2x8x1xi32>
    %44 = vector.shape_cast %16 : vector<2x1xi32> to vector<2x1x1xi32>
    %45 = vector.broadcast %44 : vector<2x1x1xi32> to vector<2x8x1xi32>
    %46 = arith.cmpi slt, %43, %45 : vector<2x8x1xi32>
    %cst_13 = arith.constant 0.000000e+00 : f32
    %47 = vector.shape_cast %46 : vector<2x8x1xi1> to vector<2x8x1xi1>
    %48 = vector.broadcast %47 : vector<2x8x1xi1> to vector<2x8x512xi1>
    %49 = vector.broadcast %cst_13 : f32 to vector<2x8x512xf32>
    %50 = arith.select %48, %42, %49 : vector<2x8x512xi1>, vector<2x8x512xf32>
    %cst_14 = arith.constant 0.000000e+00 : f32
    %51 = vector.shape_cast %46 : vector<2x8x1xi1> to vector<2x8x1xi1>
    %52 = vector.broadcast %51 : vector<2x8x1xi1> to vector<2x8x512xi1>
    %53 = vector.broadcast %cst_14 : f32 to vector<2x8x512xf32>
    %54 = arith.select %52, %36, %53 : vector<2x8x512xi1>, vector<2x8x512xf32>
    %cst_15 = arith.constant dense<0.000000e+00> : vector<2x512xf32>
    %55 = vector.multi_reduction <add>, %50, %cst_15 [1] : vector<2x8x512xf32> to vector<2x512xf32>
    %56 = vector.shape_cast %55 : vector<2x512xf32> to vector<2x1x512xf32>
    %cst_16 = arith.constant dense<0.000000e+00> : vector<2x512xf32>
    %57 = vector.multi_reduction <add>, %54, %cst_16 [1] : vector<2x8x512xf32> to vector<2x512xf32>
    %58 = vector.shape_cast %57 : vector<2x512xf32> to vector<2x1x512xf32>
    %59 = arith.mulf %50, %50 : vector<2x8x512xf32>
    %cst_17 = arith.constant dense<0.000000e+00> : vector<2x512xf32>
    %60 = vector.multi_reduction <add>, %59, %cst_17 [1] : vector<2x8x512xf32> to vector<2x512xf32>
    %61 = vector.shape_cast %60 : vector<2x512xf32> to vector<2x1x512xf32>
    %62 = arith.mulf %54, %54 : vector<2x8x512xf32>
    %cst_18 = arith.constant dense<0.000000e+00> : vector<2x512xf32>
    %63 = vector.multi_reduction <add>, %62, %cst_18 [1] : vector<2x8x512xf32> to vector<2x512xf32>
    %64 = vector.shape_cast %63 : vector<2x512xf32> to vector<2x1x512xf32>
    %65 = arith.subf %56, %58 : vector<2x1x512xf32>
    %66 = vector.broadcast %20 : vector<2x1x1xf32> to vector<2x1x512xf32>
    %67 = arith.mulf %65, %66 : vector<2x1x512xf32>
    %68 = vector.broadcast %18 : vector<2x1x1xf32> to vector<2x1x512xf32>
    %69 = arith.mulf %68, %61 : vector<2x1x512xf32>
    %cst_19 = arith.constant 2.000000e+00 : f32
    %70 = vector.broadcast %cst_19 : f32 to vector<2x1x512xf32>
    %71 = arith.mulf %70, %56 : vector<2x1x512xf32>
    %72 = arith.mulf %71, %58 : vector<2x1x512xf32>
    %73 = arith.subf %69, %72 : vector<2x1x512xf32>
    %74 = vector.broadcast %18 : vector<2x1x1xf32> to vector<2x1x512xf32>
    %75 = arith.mulf %74, %64 : vector<2x1x512xf32>
    %76 = arith.addf %73, %75 : vector<2x1x512xf32>
    %77 = vector.broadcast %21 : vector<2x1x1xf32> to vector<2x1x512xf32>
    %78 = arith.mulf %76, %77 : vector<2x1x512xf32>
    %79 = arith.mulf %67, %67 : vector<2x1x512xf32>
    %80 = arith.subf %78, %79 : vector<2x1x512xf32>
    %cst_20 = arith.constant 0.000000e+00 : f32
    %81 = vector.broadcast %cst_20 : f32 to vector<2x1x512xf32>
    %82 = arith.maximumf %80, %81 : vector<2x1x512xf32>
    %c0_21 = arith.constant 0 : index
    %c0_22 = arith.constant 0 : index
    %83 = vector.load %arg6[%c0_21, %c0_22] : memref<1x512xf32, #tpu.memory_space<vmem>>, vector<1x512xf32>
    %cst_23 = arith.constant 9.99999974E-6 : f32
    %84 = vector.broadcast %cst_23 : f32 to vector<2x1x512xf32>
    %85 = arith.addf %82, %84 : vector<2x1x512xf32>
    %86 = math.rsqrt %85 : vector<2x1x512xf32>
    %87 = vector.shape_cast %83 : vector<1x512xf32> to vector<1x1x512xf32>
    %88 = vector.broadcast %87 : vector<1x1x512xf32> to vector<2x1x512xf32>
    %89 = arith.mulf %88, %86 : vector<2x1x512xf32>
    %c0_24 = arith.constant 0 : index
    %c0_25 = arith.constant 0 : index
    %90 = vector.load %arg7[%c0_24, %c0_25] : memref<1x512xf32, #tpu.memory_space<vmem>>, vector<1x512xf32>
    %91 = arith.mulf %67, %89 : vector<2x1x512xf32>
    %92 = vector.shape_cast %90 : vector<1x512xf32> to vector<1x1x512xf32>
    %93 = vector.broadcast %92 : vector<1x1x512xf32> to vector<2x1x512xf32>
    %94 = arith.subf %93, %91 : vector<2x1x512xf32>
    %95 = vector.broadcast %89 : vector<2x1x512xf32> to vector<2x8x512xf32>
    %96 = arith.mulf %42, %95 : vector<2x8x512xf32>
    %97 = vector.broadcast %94 : vector<2x1x512xf32> to vector<2x8x512xf32>
    %98 = arith.addf %96, %97 : vector<2x8x512xf32>
    %99 = vector.broadcast %89 : vector<2x1x512xf32> to vector<2x8x512xf32>
    %100 = arith.mulf %36, %99 : vector<2x8x512xf32>
    %101 = vector.shape_cast %98 : vector<2x8x512xf32> to vector<2x1x8x512xf32>
    %102 = vector.shape_cast %100 : vector<2x8x512xf32> to vector<2x8x1x512xf32>
    %103 = vector.broadcast %101 : vector<2x1x8x512xf32> to vector<2x8x8x512xf32>
    %104 = vector.broadcast %102 : vector<2x8x1x512xf32> to vector<2x8x8x512xf32>
    %105 = arith.subf %103, %104 : vector<2x8x8x512xf32>
    %cst_26 = arith.constant 0.000000e+00 : f32
    %106 = vector.broadcast %cst_26 : f32 to vector<2x8x8x512xf32>
    %107 = arith.maximumf %105, %106 : vector<2x8x8x512xf32>
    %108 = arith.truncf %107 : vector<2x8x8x512xf32> to vector<2x8x8x512xbf16>
    %109 = vector.shape_cast %108 : vector<2x8x8x512xbf16> to vector<128x512xbf16>
    %c0_27 = arith.constant 0 : index
    %c0_28 = arith.constant 0 : index
    %110 = vector.load %arg8[%c0_27, %c0_28] : memref<512x128xbf16, #tpu.memory_space<vmem>>, vector<512x128xbf16>
    %cst_29 = arith.constant dense<0.000000e+00> : vector<128x128xf32>
    %111 = tpu.matmul %109, %110, %cst_29 {dimension_numbers = #tpu.dot_dimension_numbers<[1], [0], [0], [1], [0, 0, 1, 1], [], []>} : vector<128x512xbf16>, vector<512x128xbf16>, vector<128x128xf32> -> vector<128x128xf32>
    %112 = vector.shape_cast %111 : vector<128x128xf32> to vector<2x8x8x128xf32>
    %113 = vector.shape_cast %16 : vector<2x1xi32> to vector<2x1x1x1xi32>
    %114 = tpu.iota {dimensions = array<i32: 1>} : vector<2x8x8x1xi32>
    %115 = tpu.iota {dimensions = array<i32: 2>} : vector<2x8x8x1xi32>
    %116 = vector.broadcast %113 : vector<2x1x1x1xi32> to vector<2x8x8x1xi32>
    %117 = arith.cmpi slt, %114, %116 : vector<2x8x8x1xi32>
    %118 = vector.broadcast %113 : vector<2x1x1x1xi32> to vector<2x8x8x1xi32>
    %119 = arith.cmpi slt, %115, %118 : vector<2x8x8x1xi32>
    %120 = arith.andi %117, %119 : vector<2x8x8x1xi1>
    %121 = arith.extui %120 : vector<2x8x8x1xi1> to vector<2x8x8x1xi32>
    %122 = arith.sitofp %121 : vector<2x8x8x1xi32> to vector<2x8x8x1xf32>
    %123 = vector.broadcast %122 : vector<2x8x8x1xf32> to vector<2x8x8x128xf32>
    %124 = arith.mulf %112, %123 : vector<2x8x8x128xf32>
    %125 = vector.shape_cast %21 : vector<2x1x1xf32> to vector<2x1x1x1xf32>
    %cst_30 = arith.constant dense<0.000000e+00> : vector<2x8x128xf32>
    %126 = vector.multi_reduction <add>, %124, %cst_30 [2] : vector<2x8x8x128xf32> to vector<2x8x128xf32>
    %127 = vector.shape_cast %126 : vector<2x8x128xf32> to vector<2x8x1x128xf32>
    %cst_31 = arith.constant dense<0.000000e+00> : vector<2x1x128xf32>
    %128 = vector.multi_reduction <add>, %127, %cst_31 [1] : vector<2x8x1x128xf32> to vector<2x1x128xf32>
    %129 = vector.shape_cast %128 : vector<2x1x128xf32> to vector<2x1x1x128xf32>
    %130 = vector.broadcast %125 : vector<2x1x1x1xf32> to vector<2x1x1x128xf32>
    %131 = arith.mulf %129, %130 : vector<2x1x1x128xf32>
    %132 = arith.mulf %124, %124 : vector<2x8x8x128xf32>
    %cst_32 = arith.constant dense<0.000000e+00> : vector<2x8x128xf32>
    %133 = vector.multi_reduction <add>, %132, %cst_32 [2] : vector<2x8x8x128xf32> to vector<2x8x128xf32>
    %134 = vector.shape_cast %133 : vector<2x8x128xf32> to vector<2x8x1x128xf32>
    %cst_33 = arith.constant dense<0.000000e+00> : vector<2x1x128xf32>
    %135 = vector.multi_reduction <add>, %134, %cst_33 [1] : vector<2x8x1x128xf32> to vector<2x1x128xf32>
    %136 = vector.shape_cast %135 : vector<2x1x128xf32> to vector<2x1x1x128xf32>
    %137 = vector.broadcast %125 : vector<2x1x1x1xf32> to vector<2x1x1x128xf32>
    %138 = arith.mulf %136, %137 : vector<2x1x1x128xf32>
    %139 = arith.mulf %131, %131 : vector<2x1x1x128xf32>
    %140 = arith.subf %138, %139 : vector<2x1x1x128xf32>
    %cst_34 = arith.constant 0.000000e+00 : f32
    %141 = vector.broadcast %cst_34 : f32 to vector<2x1x1x128xf32>
    %142 = arith.maximumf %140, %141 : vector<2x1x1x128xf32>
    %c0_35 = arith.constant 0 : index
    %c0_36 = arith.constant 0 : index
    %143 = vector.load %arg9[%c0_35, %c0_36] : memref<1x128xf32, #tpu.memory_space<vmem>>, vector<1x128xf32>
    %cst_37 = arith.constant 9.99999974E-6 : f32
    %144 = vector.broadcast %cst_37 : f32 to vector<2x1x1x128xf32>
    %145 = arith.addf %142, %144 : vector<2x1x1x128xf32>
    %146 = math.rsqrt %145 : vector<2x1x1x128xf32>
    %147 = vector.shape_cast %143 : vector<1x128xf32> to vector<1x1x1x128xf32>
    %148 = vector.broadcast %147 : vector<1x1x1x128xf32> to vector<2x1x1x128xf32>
    %149 = arith.mulf %148, %146 : vector<2x1x1x128xf32>
    %c0_38 = arith.constant 0 : index
    %c0_39 = arith.constant 0 : index
    %150 = vector.load %arg10[%c0_38, %c0_39] : memref<1x128xf32, #tpu.memory_space<vmem>>, vector<1x128xf32>
    %151 = arith.mulf %131, %149 : vector<2x1x1x128xf32>
    %152 = vector.shape_cast %150 : vector<1x128xf32> to vector<1x1x1x128xf32>
    %153 = vector.broadcast %152 : vector<1x1x1x128xf32> to vector<2x1x1x128xf32>
    %154 = arith.subf %153, %151 : vector<2x1x1x128xf32>
    %155 = vector.broadcast %149 : vector<2x1x1x128xf32> to vector<2x8x8x128xf32>
    %156 = arith.mulf %112, %155 : vector<2x8x8x128xf32>
    %157 = vector.broadcast %154 : vector<2x1x1x128xf32> to vector<2x8x8x128xf32>
    %158 = arith.addf %156, %157 : vector<2x8x8x128xf32>
    %159 = vector.broadcast %122 : vector<2x8x8x1xf32> to vector<2x8x8x128xf32>
    %160 = arith.mulf %158, %159 : vector<2x8x8x128xf32>
    %cst_40 = arith.constant 0.000000e+00 : f32
    %161 = vector.broadcast %cst_40 : f32 to vector<2x8x8x128xf32>
    %162 = arith.maximumf %160, %161 : vector<2x8x8x128xf32>
    %cst_41 = arith.constant dense<0xFF800000> : vector<2x8x128xf32>
    %163 = vector.multi_reduction <maximumf>, %162, %cst_41 [2] : vector<2x8x8x128xf32> to vector<2x8x128xf32>
    %c0_42 = arith.constant 0 : index
    %c0_43 = arith.constant 0 : index
    %c0_44 = arith.constant 0 : index
    %164 = vector.load %arg11[%c0_42, %c0_43, %c0_44] : memref<2x8x128xf32, #tpu.memory_space<vmem>>, vector<2x8x128xf32>
    tpu.vector_store %arg11[%c0_42, %c0_43, %c0_44], %163 {strides = array<i32>} : memref<2x8x128xf32, #tpu.memory_space<vmem>>, vector<2x8x128xf32>,
    return
  }
  func.func @transform_0(%arg0: i32, %arg1: memref<4xi32, #tpu.memory_space<smem>>) -> (i32, i32, i32) {
    %c0_i32 = arith.constant 0 : i32
    %c0_i32_0 = arith.constant 0 : i32
    %c0_i32_1 = arith.constant 0 : i32
    return %arg0, %c0_i32, %c0_i32_0 : i32, i32, i32
  }
  func.func @transform_1(%arg0: i32, %arg1: memref<4xi32, #tpu.memory_space<smem>>) -> (i32, i32, i32) {
    %c0_i32 = arith.constant 0 : i32
    %c0_i32_0 = arith.constant 0 : i32
    %c0_i32_1 = arith.constant 0 : i32
    return %arg0, %c0_i32, %c0_i32_0 : i32, i32, i32
  }
  func.func @transform_2(%arg0: i32, %arg1: memref<4xi32, #tpu.memory_space<smem>>) -> (i32, i32) {
    %c0_i32 = arith.constant 0 : i32
    %c0_i32_0 = arith.constant 0 : i32
    %c0_i32_1 = arith.constant 0 : i32
    return %c0_i32, %c0_i32_0 : i32, i32
  }
  func.func @transform_3(%arg0: i32, %arg1: memref<4xi32, #tpu.memory_space<smem>>) -> (i32, i32) {
    %c0_i32 = arith.constant 0 : i32
    %c0_i32_0 = arith.constant 0 : i32
    %c0_i32_1 = arith.constant 0 : i32
    return %c0_i32, %c0_i32_0 : i32, i32
  }
  func.func @transform_4(%arg0: i32, %arg1: memref<4xi32, #tpu.memory_space<smem>>) -> (i32, i32) {
    %c0_i32 = arith.constant 0 : i32
    %c0_i32_0 = arith.constant 0 : i32
    %c0_i32_1 = arith.constant 0 : i32
    return %c0_i32, %c0_i32_0 : i32, i32
  }
  func.func @transform_5(%arg0: i32, %arg1: memref<4xi32, #tpu.memory_space<smem>>) -> (i32, i32) {
    %c0_i32 = arith.constant 0 : i32
    %c0_i32_0 = arith.constant 0 : i32
    %c0_i32_1 = arith.constant 0 : i32
    return %c0_i32, %c0_i32_0 : i32, i32
  }
  func.func @transform_6(%arg0: i32, %arg1: memref<4xi32, #tpu.memory_space<smem>>) -> (i32, i32) {
    %c0_i32 = arith.constant 0 : i32
    %c0_i32_0 = arith.constant 0 : i32
    %c0_i32_1 = arith.constant 0 : i32
    return %c0_i32, %c0_i32_0 : i32, i32
  }
  func.func @transform_7(%arg0: i32, %arg1: memref<4xi32, #tpu.memory_space<smem>>) -> (i32, i32) {
    %c0_i32 = arith.constant 0 : i32
    %c0_i32_0 = arith.constant 0 : i32
    %c0_i32_1 = arith.constant 0 : i32
    return %c0_i32, %c0_i32_0 : i32, i32
  }
  func.func @transform_8(%arg0: i32, %arg1: memref<4xi32, #tpu.memory_space<smem>>) -> (i32, i32) {
    %c0_i32 = arith.constant 0 : i32
    %c0_i32_0 = arith.constant 0 : i32
    %c0_i32_1 = arith.constant 0 : i32
    return %c0_i32, %c0_i32_0 : i32, i32
  }
  func.func @transform_9(%arg0: i32, %arg1: memref<4xi32, #tpu.memory_space<smem>>) -> (i32, i32, i32) {
    %c0_i32 = arith.constant 0 : i32
    %c0_i32_0 = arith.constant 0 : i32
    %c0_i32_1 = arith.constant 0 : i32
    return %arg0, %c0_i32, %c0_i32_0 : i32, i32, i32
  }
}

module attributes {stable_mosaic.version = 11 : i64} {
  func.func @_pool_kernel(%arg0: i32, %arg1: memref<4xi32, #tpu.memory_space<smem>>, %arg2: memref<2x8x2xf32, #tpu.memory_space<vmem>>, %arg3: memref<2x8x32xbf16, #tpu.memory_space<vmem>>, %arg4: memref<2x512xf32, #tpu.memory_space<vmem>>, %arg5: memref<32x512xbf16, #tpu.memory_space<vmem>>, %arg6: memref<1x512xf32, #tpu.memory_space<vmem>>, %arg7: memref<1x512xf32, #tpu.memory_space<vmem>>, %arg8: memref<512x128xbf16, #tpu.memory_space<vmem>>, %arg9: memref<1x128xf32, #tpu.memory_space<vmem>>, %arg10: memref<1x128xf32, #tpu.memory_space<vmem>>, %arg11: memref<2x8x128xf32, #tpu.memory_space<vmem>>) attributes {dimension_semantics = [#tpu.dimension_semantics<parallel>], iteration_bounds = array<i64: 2>, scalar_prefetch = 1 : i64, scratch_operands = 0 : i64, tpu.core_type = #tpu.core_type<tc>, window_params = [{transform_indices = @transform_0, window_bounds = array<i64: 2, 8, 2>}, {transform_indices = @transform_1, window_bounds = array<i64: 2, 8, 32>}, {pipeline_mode = #tpu.pipeline_mode<synchronous>, transform_indices = @transform_2, window_bounds = array<i64: 2, 512>}, {pipeline_mode = #tpu.pipeline_mode<synchronous>, transform_indices = @transform_3, window_bounds = array<i64: 32, 512>}, {pipeline_mode = #tpu.pipeline_mode<synchronous>, transform_indices = @transform_4, window_bounds = array<i64: 1, 512>}, {pipeline_mode = #tpu.pipeline_mode<synchronous>, transform_indices = @transform_5, window_bounds = array<i64: 1, 512>}, {pipeline_mode = #tpu.pipeline_mode<synchronous>, transform_indices = @transform_6, window_bounds = array<i64: 512, 128>}, {pipeline_mode = #tpu.pipeline_mode<synchronous>, transform_indices = @transform_7, window_bounds = array<i64: 1, 128>}, {pipeline_mode = #tpu.pipeline_mode<synchronous>, transform_indices = @transform_8, window_bounds = array<i64: 1, 128>}, {transform_indices = @transform_9, window_bounds = array<i64: 2, 8, 128>}]} {
    %c2_i32 = arith.constant 2 : i32
    %0 = arith.muli %arg0, %c2_i32 : i32
    %1 = tpu.iota {dimensions = array<i32: 0>} : vector<2x1xi32>
    %c0_i32 = arith.constant 0 : i32
    %2 = vector.broadcast %c0_i32 : i32 to vector<2x1xi32>
    %c0_i32_0 = arith.constant 0 : i32
    %3 = vector.broadcast %c0_i32_0 : i32 to vector<2x1xi32>
    %4 = arith.cmpi eq, %1, %3 : vector<2x1xi32>
    %c0_i32_1 = arith.constant 0 : i32
    %5 = arith.addi %0, %c0_i32_1 : i32
    %6 = arith.index_cast %5 : i32 to index
    %7 = memref.load %arg1[%6] : memref<4xi32, #tpu.memory_space<smem>>
    %8 = vector.broadcast %7 : i32 to vector<2x1xi32>
    %9 = arith.select %4, %8, %2 : vector<2x1xi1>, vector<2x1xi32>
    %c1_i32 = arith.constant 1 : i32
    %10 = vector.broadcast %c1_i32 : i32 to vector<2x1xi32>
    %11 = arith.cmpi eq, %1, %10 : vector<2x1xi32>
    %c1_i32_2 = arith.constant 1 : i32
    %12 = arith.addi %0, %c1_i32_2 : i32
    %13 = arith.index_cast %12 : i32 to index
    %14 = memref.load %arg1[%13] : memref<4xi32, #tpu.memory_space<smem>>
    %15 = vector.broadcast %14 : i32 to vector<2x1xi32>
    %16 = arith.select %11, %15, %9 : vector<2x1xi1>, vector<2x1xi32>
    %17 = arith.sitofp %16 : vector<2x1xi32> to vector<2x1xf32>
    %18 = vector.shape_cast %17 : vector<2x1xf32> to vector<2x1x1xf32>
    %cst = arith.constant 1.000000e+00 : f32
    %19 = vector.broadcast %cst : f32 to vector<2x1x1xf32>
    %20 = arith.divf %19, %18 : vector<2x1x1xf32>
    %21 = arith.mulf %20, %20 : vector<2x1x1xf32>
    %c0 = arith.constant 0 : index
    %c0_3 = arith.constant 0 : index
    %c0_4 = arith.constant 0 : index
    %22 = vector.load %arg2[%c0, %c0_3, %c0_4] : memref<2x8x2xf32, #tpu.memory_space<vmem>>, vector<2x8x2xf32>
    %c0_5 = arith.constant 0 : index
    %c0_6 = arith.constant 0 : index
    %23 = vector.load %arg4[%c0_5, %c0_6] : memref<2x512xf32, #tpu.memory_space<vmem>>, vector<2x512xf32>
    %24 = vector.extract_strided_slice %22 {offsets = [0, 0, 0], sizes = [2, 8, 1], strides = [1, 1, 1]} : vector<2x8x2xf32> to vector<2x8x1xf32>
    %25 = vector.extract_strided_slice %23 {offsets = [0, 0], sizes = [1, 512], strides = [1, 1]} : vector<2x512xf32> to vector<1x512xf32>
    %26 = vector.shape_cast %25 : vector<1x512xf32> to vector<1x1x512xf32>
    %27 = vector.broadcast %24 : vector<2x8x1xf32> to vector<2x8x512xf32>
    %28 = vector.broadcast %26 : vector<1x1x512xf32> to vector<2x8x512xf32>
    %29 = arith.mulf %27, %28 : vector<2x8x512xf32>
    %30 = vector.extract_strided_slice %22 {offsets = [0, 0, 1], sizes = [2, 8, 1], strides = [1, 1, 1]} : vector<2x8x2xf32> to vector<2x8x1xf32>
    %31 = vector.extract_strided_slice %23 {offsets = [1, 0], sizes = [1, 512], strides = [1, 1]} : vector<2x512xf32> to vector<1x512xf32>
    %32 = vector.shape_cast %31 : vector<1x512xf32> to vector<1x1x512xf32>
    %33 = vector.broadcast %30 : vector<2x8x1xf32> to vector<2x8x512xf32>
    %34 = vector.broadcast %32 : vector<1x1x512xf32> to vector<2x8x512xf32>
    %35 = arith.mulf %33, %34 : vector<2x8x512xf32>
    %36 = arith.addf %29, %35 : vector<2x8x512xf32>
    %c0_7 = arith.constant 0 : index
    %c0_8 = arith.constant 0 : index
    %c0_9 = arith.constant 0 : index
    %37 = vector.load %arg3[%c0_7, %c0_8, %c0_9] : memref<2x8x32xbf16, #tpu.memory_space<vmem>>, vector<2x8x32xbf16>
    %38 = vector.shape_cast %37 : vector<2x8x32xbf16> to vector<16x32xbf16>
    %c0_10 = arith.constant 0 : index
    %c0_11 = arith.constant 0 : index
    %39 = vector.load %arg5[%c0_10, %c0_11] : memref<32x512xbf16, #tpu.memory_space<vmem>>, vector<32x512xbf16>
    %cst_12 = arith.constant dense<0.000000e+00> : vector<16x512xf32>
    %40 = tpu.matmul %38, %39, %cst_12 {dimension_numbers = #tpu.dot_dimension_numbers<[1], [0], [0], [1], [0, 0, 1, 1], [], []>} : vector<16x32xbf16>, vector<32x512xbf16>, vector<16x512xf32> -> vector<16x512xf32>
    %41 = vector.shape_cast %40 : vector<16x512xf32> to vector<2x8x512xf32>
    %42 = arith.addf %36, %41 : vector<2x8x512xf32>
    %43 = tpu.iota {dimensions = array<i32: 1>} : vector<2x8x1xi32>
    %44 = vector.shape_cast %16 : vector<2x1xi32> to vector<2x1x1xi32>
    %45 = vector.broadcast %44 : vector<2x1x1xi32> to vector<2x8x1xi32>
    %46 = arith.cmpi slt, %43, %45 : vector<2x8x1xi32>
    %cst_13 = arith.constant 0.000000e+00 : f32
    %47 = vector.shape_cast %46 : vector<2x8x1xi1> to vector<2x8x1xi1>
    %48 = vector.broadcast %47 : vector<2x8x1xi1> to vector<2x8x512xi1>
    %49 = vector.broadcast %cst_13 : f32 to vector<2x8x512xf32>
    %50 = arith.select %48, %42, %49 : vector<2x8x512xi1>, vector<2x8x512xf32>
    %cst_14 = arith.constant 0.000000e+00 : f32
    %51 = vector.shape_cast %46 : vector<2x8x1xi1> to vector<2x8x1xi1>
    %52 = vector.broadcast %51 : vector<2x8x1xi1> to vector<2x8x512xi1>
    %53 = vector.broadcast %cst_14 : f32 to vector<2x8x512xf32>
    %54 = arith.select %52, %36, %53 : vector<2x8x512xi1>, vector<2x8x512xf32>
    %cst_15 = arith.constant dense<0.000000e+00> : vector<2x512xf32>
    %55 = vector.multi_reduction <add>, %50, %cst_15 [1] : vector<2x8x512xf32> to vector<2x512xf32>
    %56 = vector.shape_cast %55 : vector<2x512xf32> to vector<2x1x512xf32>
    %cst_16 = arith.constant dense<0.000000e+00> : vector<2x512xf32>
    %57 = vector.multi_reduction <add>, %54, %cst_16 [1] : vector<2x8x512xf32> to vector<2x512xf32>
    %58 = vector.shape_cast %57 : vector<2x512xf32> to vector<2x1x512xf32>
    %59 = arith.mulf %50, %50 : vector<2x8x512xf32>
    %cst_17 = arith.constant dense<0.000000e+00> : vector<2x512xf32>
    %60 = vector.multi_reduction <add>, %59, %cst_17 [1] : vector<2x8x512xf32> to vector<2x512xf32>
    %61 = vector.shape_cast %60 : vector<2x512xf32> to vector<2x1x512xf32>
    %62 = arith.mulf %54, %54 : vector<2x8x512xf32>
    %cst_18 = arith.constant dense<0.000000e+00> : vector<2x512xf32>
    %63 = vector.multi_reduction <add>, %62, %cst_18 [1] : vector<2x8x512xf32> to vector<2x512xf32>
    %64 = vector.shape_cast %63 : vector<2x512xf32> to vector<2x1x512xf32>
    %65 = arith.subf %56, %58 : vector<2x1x512xf32>
    %66 = vector.broadcast %20 : vector<2x1x1xf32> to vector<2x1x512xf32>
    %67 = arith.mulf %65, %66 : vector<2x1x512xf32>
    %68 = vector.broadcast %18 : vector<2x1x1xf32> to vector<2x1x512xf32>
    %69 = arith.mulf %68, %61 : vector<2x1x512xf32>
    %cst_19 = arith.constant 2.000000e+00 : f32
    %70 = vector.broadcast %cst_19 : f32 to vector<2x1x512xf32>
    %71 = arith.mulf %70, %56 : vector<2x1x512xf32>
    %72 = arith.mulf %71, %58 : vector<2x1x512xf32>
    %73 = arith.subf %69, %72 : vector<2x1x512xf32>
    %74 = vector.broadcast %18 : vector<2x1x1xf32> to vector<2x1x512xf32>
    %75 = arith.mulf %74, %64 : vector<2x1x512xf32>
    %76 = arith.addf %73, %75 : vector<2x1x512xf32>
    %77 = vector.broadcast %21 : vector<2x1x1xf32> to vector<2x1x512xf32>
    %78 = arith.mulf %76, %77 : vector<2x1x512xf32>
    %79 = arith.mulf %67, %67 : vector<2x1x512xf32>
    %80 = arith.subf %78, %79 : vector<2x1x512xf32>
    %cst_20 = arith.constant 0.000000e+00 : f32
    %81 = vector.broadcast %cst_20 : f32 to vector<2x1x512xf32>
    %82 = arith.maximumf %80, %81 : vector<2x1x512xf32>
    %c0_21 = arith.constant 0 : index
    %c0_22 = arith.constant 0 : index
    %83 = vector.load %arg6[%c0_21, %c0_22] : memref<1x512xf32, #tpu.memory_space<vmem>>, vector<1x512xf32>
    %cst_23 = arith.constant 9.99999974E-6 : f32
    %84 = vector.broadcast %cst_23 : f32 to vector<2x1x512xf32>
    %85 = arith.addf %82, %84 : vector<2x1x512xf32>
    %86 = math.rsqrt %85 : vector<2x1x512xf32>
    %87 = vector.shape_cast %83 : vector<1x512xf32> to vector<1x1x512xf32>
    %88 = vector.broadcast %87 : vector<1x1x512xf32> to vector<2x1x512xf32>
    %89 = arith.mulf %88, %86 : vector<2x1x512xf32>
    %c0_24 = arith.constant 0 : index
    %c0_25 = arith.constant 0 : index
    %90 = vector.load %arg7[%c0_24, %c0_25] : memref<1x512xf32, #tpu.memory_space<vmem>>, vector<1x512xf32>
    %91 = arith.mulf %67, %89 : vector<2x1x512xf32>
    %92 = vector.shape_cast %90 : vector<1x512xf32> to vector<1x1x512xf32>
    %93 = vector.broadcast %92 : vector<1x1x512xf32> to vector<2x1x512xf32>
    %94 = arith.subf %93, %91 : vector<2x1x512xf32>
    %95 = vector.broadcast %89 : vector<2x1x512xf32> to vector<2x8x512xf32>
    %96 = arith.mulf %42, %95 : vector<2x8x512xf32>
    %97 = vector.broadcast %94 : vector<2x1x512xf32> to vector<2x8x512xf32>
    %98 = arith.addf %96, %97 : vector<2x8x512xf32>
    %99 = vector.broadcast %89 : vector<2x1x512xf32> to vector<2x8x512xf32>
    %100 = arith.mulf %36, %99 : vector<2x8x512xf32>
    %101 = vector.shape_cast %98 : vector<2x8x512xf32> to vector<2x1x8x512xf32>
    %102 = vector.shape_cast %100 : vector<2x8x512xf32> to vector<2x8x1x512xf32>
    %103 = vector.broadcast %101 : vector<2x1x8x512xf32> to vector<2x8x8x512xf32>
    %104 = vector.broadcast %102 : vector<2x8x1x512xf32> to vector<2x8x8x512xf32>
    %105 = arith.subf %103, %104 : vector<2x8x8x512xf32>
    %cst_26 = arith.constant 0.000000e+00 : f32
    %106 = vector.broadcast %cst_26 : f32 to vector<2x8x8x512xf32>
    %107 = arith.maximumf %105, %106 : vector<2x8x8x512xf32>
    %108 = arith.truncf %107 : vector<2x8x8x512xf32> to vector<2x8x8x512xbf16>
    %109 = vector.shape_cast %108 : vector<2x8x8x512xbf16> to vector<128x512xbf16>
    %c0_27 = arith.constant 0 : index
    %c0_28 = arith.constant 0 : index
    %110 = vector.load %arg8[%c0_27, %c0_28] : memref<512x128xbf16, #tpu.memory_space<vmem>>, vector<512x128xbf16>
    %cst_29 = arith.constant dense<0.000000e+00> : vector<128x128xf32>
    %111 = tpu.matmul %109, %110, %cst_29 {dimension_numbers = #tpu.dot_dimension_numbers<[1], [0], [0], [1], [0, 0, 1, 1], [], []>} : vector<128x512xbf16>, vector<512x128xbf16>, vector<128x128xf32> -> vector<128x128xf32>
    %112 = vector.shape_cast %111 : vector<128x128xf32> to vector<2x8x8x128xf32>
    %113 = vector.shape_cast %16 : vector<2x1xi32> to vector<2x1x1x1xi32>
    %114 = tpu.iota {dimensions = array<i32: 1>} : vector<2x8x8x1xi32>
    %115 = tpu.iota {dimensions = array<i32: 2>} : vector<2x8x8x1xi32>
    %116 = vector.broadcast %113 : vector<2x1x1x1xi32> to vector<2x8x8x1xi32>
    %117 = arith.cmpi slt, %114, %116 : vector<2x8x8x1xi32>
    %118 = vector.broadcast %113 : vector<2x1x1x1xi32> to vector<2x8x8x1xi32>
    %119 = arith.cmpi slt, %115, %118 : vector<2x8x8x1xi32>
    %120 = arith.andi %117, %119 : vector<2x8x8x1xi1>
    %121 = arith.extui %120 : vector<2x8x8x1xi1> to vector<2x8x8x1xi32>
    %122 = arith.sitofp %121 : vector<2x8x8x1xi32> to vector<2x8x8x1xf32>
    %123 = vector.broadcast %122 : vector<2x8x8x1xf32> to vector<2x8x8x128xf32>
    %124 = arith.mulf %112, %123 : vector<2x8x8x128xf32>
    %125 = vector.shape_cast %21 : vector<2x1x1xf32> to vector<2x1x1x1xf32>
    %cst_30 = arith.constant dense<0.000000e+00> : vector<2x8x128xf32>
    %126 = vector.multi_reduction <add>, %124, %cst_30 [2] : vector<2x8x8x128xf32> to vector<2x8x128xf32>
    %127 = vector.shape_cast %126 : vector<2x8x128xf32> to vector<2x8x1x128xf32>
    %cst_31 = arith.constant dense<0.000000e+00> : vector<2x1x128xf32>
    %128 = vector.multi_reduction <add>, %127, %cst_31 [1] : vector<2x8x1x128xf32> to vector<2x1x128xf32>
    %129 = vector.shape_cast %128 : vector<2x1x128xf32> to vector<2x1x1x128xf32>
    %130 = vector.broadcast %125 : vector<2x1x1x1xf32> to vector<2x1x1x128xf32>
    %131 = arith.mulf %129, %130 : vector<2x1x1x128xf32>
    %132 = arith.mulf %124, %124 : vector<2x8x8x128xf32>
    %cst_32 = arith.constant dense<0.000000e+00> : vector<2x8x128xf32>
    %133 = vector.multi_reduction <add>, %132, %cst_32 [2] : vector<2x8x8x128xf32> to vector<2x8x128xf32>
    %134 = vector.shape_cast %133 : vector<2x8x128xf32> to vector<2x8x1x128xf32>
    %cst_33 = arith.constant dense<0.000000e+00> : vector<2x1x128xf32>
    %135 = vector.multi_reduction <add>, %134, %cst_33 [1] : vector<2x8x1x128xf32> to vector<2x1x128xf32>
    %136 = vector.shape_cast %135 : vector<2x1x128xf32> to vector<2x1x1x128xf32>
    %137 = vector.broadcast %125 : vector<2x1x1x1xf32> to vector<2x1x1x128xf32>
    %138 = arith.mulf %136, %137 : vector<2x1x1x128xf32>
    %139 = arith.mulf %131, %131 : vector<2x1x1x128xf32>
    %140 = arith.subf %138, %139 : vector<2x1x1x128xf32>
    %cst_34 = arith.constant 0.000000e+00 : f32
    %141 = vector.broadcast %cst_34 : f32 to vector<2x1x1x128xf32>
    %142 = arith.maximumf %140, %141 : vector<2x1x1x128xf32>
    %c0_35 = arith.constant 0 : index
    %c0_36 = arith.constant 0 : index
    %143 = vector.load %arg9[%c0_35, %c0_36] : memref<1x128xf32, #tpu.memory_space<vmem>>, vector<1x128xf32>
    %cst_37 = arith.constant 9.99999974E-6 : f32
    %144 = vector.broadcast %cst_37 : f32 to vector<2x1x1x128xf32>
    %145 = arith.addf %142, %144 : vector<2x1x1x128xf32>
    %146 = math.rsqrt %145 : vector<2x1x1x128xf32>
    %147 = vector.shape_cast %143 : vector<1x128xf32> to vector<1x1x1x128xf32>
    %148 = vector.broadcast %147 : vector<1x1x1x128xf32> to vector<2x1x1x128xf32>
    %149 = arith.mulf %148, %146 : vector<2x1x1x128xf32>
    %c0_38 = arith.constant 0 : index
    %c0_39 = arith.constant 0 : index
    %150 = vector.load %arg10[%c0_38, %c0_39] : memref<1x128xf32, #tpu.memory_space<vmem>>, vector<1x128xf32>
    %151 = arith.mulf %131, %149 : vector<2x1x1x128xf32>
    %152 = vector.shape_cast %150 : vector<1x128xf32> to vector<1x1x1x128xf32>
    %153 = vector.broadcast %152 : vector<1x1x1x128xf32> to vector<2x1x1x128xf32>
    %154 = arith.subf %153, %151 : vector<2x1x1x128xf32>
    %155 = vector.broadcast %149 : vector<2x1x1x128xf32> to vector<2x8x8x128xf32>
    %156 = arith.mulf %112, %155 : vector<2x8x8x128xf32>
    %157 = vector.broadcast %154 : vector<2x1x1x128xf32> to vector<2x8x8x128xf32>
    %158 = arith.addf %156, %157 : vector<2x8x8x128xf32>
    %159 = vector.broadcast %122 : vector<2x8x8x1xf32> to vector<2x8x8x128xf32>
    %160 = arith.mulf %158, %159 : vector<2x8x8x128xf32>
    %cst_40 = arith.constant 0.000000e+00 : f32
    %161 = vector.broadcast %cst_40 : f32 to vector<2x8x8x128xf32>
    %162 = arith.maximumf %160, %161 : vector<2x8x8x128xf32>
    %cst_41 = arith.constant dense<0xFF800000> : vector<2x8x128xf32>
    %163 = vector.multi_reduction <maximumf>, %162, %cst_41 [2] : vector<2x8x8x128xf32> to vector<2x8x128xf32>
    %c0_42 = arith.constant 0 : index
    %c0_43 = arith.constant 0 : index
    %c0_44 = arith.constant 0 : index
    %164 = vector.load %arg11[%c0_42, %c0_43, %c0_44] : memref<2x8x128xf32, #tpu.memory_space<vmem>>, vector<2x8x128xf32>
    tpu.vector_store %arg11[%c0_42, %c0_43, %c0_44], %163 {strides = array<i32>} : memref<2x8x128xf32, #tpu.memory_space<vmem>>, vector<2x8x128xf32>,
    return
  }
  func.func @transform_0(%arg0: i32, %arg1: memref<4xi32, #tpu.memory_space<smem>>) -> (i32, i32, i32) {
    %c0_i32 = arith.constant 0 : i32
    %c0_i32_0 = arith.constant 0 : i32
    %c0_i32_1 = arith.constant 0 : i32
    return %arg0, %c0_i32, %c0_i32_0 : i32, i32, i32
  }
  func.func @transform_1(%arg0: i32, %arg1: memref<4xi32, #tpu.memory_space<smem>>) -> (i32, i32, i32) {
    %c0_i32 = arith.constant 0 : i32
    %c0_i32_0 = arith.constant 0 : i32
    %c0_i32_1 = arith.constant 0 : i32
    return %arg0, %c0_i32, %c0_i32_0 : i32, i32, i32
  }
  func.func @transform_2(%arg0: i32, %arg1: memref<4xi32, #tpu.memory_space<smem>>) -> (i32, i32) {
    %c0_i32 = arith.constant 0 : i32
    %c0_i32_0 = arith.constant 0 : i32
    %c0_i32_1 = arith.constant 0 : i32
    return %c0_i32, %c0_i32_0 : i32, i32
  }
  func.func @transform_3(%arg0: i32, %arg1: memref<4xi32, #tpu.memory_space<smem>>) -> (i32, i32) {
    %c0_i32 = arith.constant 0 : i32
    %c0_i32_0 = arith.constant 0 : i32
    %c0_i32_1 = arith.constant 0 : i32
    return %c0_i32, %c0_i32_0 : i32, i32
  }
  func.func @transform_4(%arg0: i32, %arg1: memref<4xi32, #tpu.memory_space<smem>>) -> (i32, i32) {
    %c0_i32 = arith.constant 0 : i32
    %c0_i32_0 = arith.constant 0 : i32
    %c0_i32_1 = arith.constant 0 : i32
    return %c0_i32, %c0_i32_0 : i32, i32
  }
  func.func @transform_5(%arg0: i32, %arg1: memref<4xi32, #tpu.memory_space<smem>>) -> (i32, i32) {
    %c0_i32 = arith.constant 0 : i32
    %c0_i32_0 = arith.constant 0 : i32
    %c0_i32_1 = arith.constant 0 : i32
    return %c0_i32, %c0_i32_0 : i32, i32
  }
  func.func @transform_6(%arg0: i32, %arg1: memref<4xi32, #tpu.memory_space<smem>>) -> (i32, i32) {
    %c0_i32 = arith.constant 0 : i32
    %c0_i32_0 = arith.constant 0 : i32
    %c0_i32_1 = arith.constant 0 : i32
    return %c0_i32, %c0_i32_0 : i32, i32
  }
  func.func @transform_7(%arg0: i32, %arg1: memref<4xi32, #tpu.memory_space<smem>>) -> (i32, i32) {
    %c0_i32 = arith.constant 0 : i32
    %c0_i32_0 = arith.constant 0 : i32
    %c0_i32_1 = arith.constant 0 : i32
    return %c0_i32, %c0_i32_0 : i32, i32
  }
  func.func @transform_8(%arg0: i32, %arg1: memref<4xi32, #tpu.memory_space<smem>>) -> (i32, i32) {
    %c0_i32 = arith.constant 0 : i32
    %c0_i32_0 = arith.constant 0 : i32
    %c0_i32_1 = arith.constant 0 : i32
    return %c0_i32, %c0_i32_0 : i32, i32
  }
  func.func @transform_9(%arg0: i32, %arg1: memref<4xi32, #tpu.memory_space<smem>>) -> (i32, i32, i32) {
    %c0_i32 = arith.constant 0 : i32
    %c0_i32_0 = arith.constant 0 : i32
    %c0_i32_1 = arith.constant 0 : i32
    return %arg0, %c0_i32, %c0_i32_0 : i32, i32, i32
  }
}

</mosaic_0001>

<llo_original>
// kernel: tpu_custom_call.1
$region0: #{tpu_custom_call.1}
  #allocation0 [shape = 'u32[]', space=smem, size = 0x4, offset = 0x4, fixed_abs, tag = 'smem constant byte address 0x4 - core index']
  #allocation1 [shape = 'u32[144,128]{1,0:T(1,128)}', space=vmem, size = 0x12000, scoped, tag = 'internal scratch']
  #allocation2 [shape = 's32[1]{0}', space=sflag, size = 0x4, scoped, tag = 'scoped memory for tpu_custom_call.1']
  #allocation3 [shape = 'u8[512]{0}', space=smem, size = 0x200, scoped, tag = 'prefetched SMEM operand 0']
  %s0 = inlined_call_operand.vmem [shape: s32[4], index: 0, kind: input, shape index: {}]
  %s1 = inlined_call_operand.vmem [shape: f32[4,8,2], index: 1, kind: input, shape index: {}]
  %s2 = inlined_call_operand.vmem [shape: bf16[4,8,32], index: 2, kind: input, shape index: {}]
  %s3 = inlined_call_operand.vmem [shape: f32[2,512], index: 3, kind: input, shape index: {}]
  %s4 = inlined_call_operand.hbm [shape: bf16[32,512], index: 4, kind: input, shape index: {}]
  %s5 = inlined_call_operand.vmem [shape: f32[1,512], index: 5, kind: input, shape index: {}]
  %s6 = inlined_call_operand.vmem [shape: f32[1,512], index: 6, kind: input, shape index: {}]
  %s7 = inlined_call_operand.hbm [shape: bf16[512,128], index: 7, kind: input, shape index: {}]
  %s8 = inlined_call_operand.vmem [shape: f32[1,128], index: 8, kind: input, shape index: {}]
  %s9 = inlined_call_operand.vmem [shape: f32[1,128], index: 9, kind: input, shape index: {}]
  %s10 = inlined_call_operand.hbm [shape: f32[4,8,128], index: 10, kind: output, shape index: {}]
  %s11 = sld [smem:[#allocation0]]
  $region77: #{tpu_custom_call.1} parent=0
    _
  %s13 = ssub.s32 1, %s11
  %s14 = scalar_select 0, %s13, %s11
  %s15 = sshll.u32 %s0, 4
  %s16 = int_to_ptr.vmem [resolvable:$true] %s15
  %18 = dma.vmem_to_smem %s16, 16, [#allocation3], [#allocation2]
  %19 = dma.done [#allocation2], 16
  %20 = sfence
  $region1: #{tpu_custom_call.1} parent=0
    #allocation4 [shape = 'u8[32768]{0}', space=vmem, size = 0x8000, scoped, tag = 'input window, operand 4, single buffered']
    #allocation5 [shape = 's32[2]{0}', space=sflag, size = 0x8, scoped, tag = 'scoped memory for tpu_custom_call.1']
    #allocation6 [shape = 's32[2]{0}', space=sflag, size = 0x8, scoped, tag = 'scoped memory for tpu_custom_call.1']
    #allocation7 [shape = 'u8[131072]{0}', space=vmem, size = 0x20000, scoped, tag = 'input window, operand 7, single buffered']
    #allocation8 [shape = 's32[1]{0}', space=sflag, size = 0x4, scoped, tag = 'scoped memory for tpu_custom_call.1']
    #allocation9 [shape = 'u8[16384]{0}', space=vmem, size = 0x4000, scoped, tag = 'output window, operand 0']
    %21 = vsyncpa [#allocation5], 0
    %22 = vsyncpa [#allocation8], 0
    %23 = vsyncpa [#allocation6], 0
    %s24 = scalar_lea.sflag [#allocation6], 1
    %25 = vsyncpa %s24, 0
    loop: start=0, step=1, limit=4
    $region2: #{tpu_custom_call.1} parent=1 // loop_pre_header
      _
    $region3: #{tpu_custom_call.1} parent=1 // loop_header
      %s27 = sphi 0, %s31
      %p28 = scmp.ge.s32.totalorder %s27, 4
      %s37 = sphi 0, %s39
      %s40 = sphi 0, %s37
      %s41 = sphi 0, %s40
      %s57 = sphi 0, %s41
      %s63 = sphi 0, %s65
      %s66 = sphi 0, %s63
      %s67 = sphi 0, %s66
      %s83 = sphi 0, %s67
      %s87 = sphi 0, %s87
      %s89 = sphi 0, %s87
      %s90 = sphi 0, %s89
      %s104 = sphi 0, %s90
      %s108 = sphi 0, %s108
      %s110 = sphi 0, %s108
      %s111 = sphi 0, %s110
      %s125 = sphi 0, %s111
      %s129 = sphi 0, %s129
      %s131 = sphi 0, %s129
      %s132 = sphi 0, %s131
      %s146 = sphi 0, %s132
      %s150 = sphi 0, %s150
      %s152 = sphi 0, %s150
      %s153 = sphi 0, %s152
      %s167 = sphi 0, %s153
      %s171 = sphi 0, %s171
      %s173 = sphi 0, %s171
      %s174 = sphi 0, %s173
      %s188 = sphi 0, %s174
      %s192 = sphi 0, %s192
      %s194 = sphi 0, %s192
      %s195 = sphi 0, %s194
      %s209 = sphi 0, %s195
      %s213 = sphi 0, %s213
      %s215 = sphi 0, %s213
      %s216 = sphi 0, %s215
      %s230 = sphi 0, %s216
      %s236 = sphi 0, %s238
      %s239 = sphi 0, %s236
      %s240 = sphi 0, %s239
      %s256 = sphi 0, %s240
    $region4: #{tpu_custom_call.1} parent=1 // loop_header_branch
      %30 = sbr.rel (%p28) target = $region8
    $region5: #{tpu_custom_call.1} parent=1 // loop_body
      %s32 = ssub.s32 %s27, 1
      %s33 = ssub.s32 %s27, 2
      %s34 = sadd.s32 %s27, 1
      %s35 = ssub.s32 %s27, %s34
      %p36 = scmp.eq.s32.totalorder %s35, 0
      %s38 = sadd.s32 %s37, 1
      %s39 = scalar_select %p36, %s37, %s38
      %p42 = pneg %p36
      %p43 = scmp.eq.s32.totalorder %s27, 1
      %p44 = por %p42, %p43
      %p45 = scmp.ne.s32.totalorder %s37, %s40
      %p46 = scmp.eq.s32.totalorder %s27, 0
      %p47 = por %p45, %p46
      %p48 = scmp.ne.s32.totalorder %s37, %s40
      %p49 = scmp.eq.s32.totalorder %s32, 1
      %p50 = por %p48, %p49
      %p51 = scmp.ne.s32.totalorder %s40, %s41
      %p52 = scmp.eq.s32.totalorder %s32, 0
      %p53 = por %p51, %p52
      %p54 = scmp.ne.s32.totalorder %s40, %s41
      %p55 = scmp.eq.s32.totalorder %s33, 1
      %p56 = por %p54, %p55
      %p58 = scmp.ne.s32.totalorder %s41, %s57
      %p59 = scmp.eq.s32.totalorder %s33, 0
      %p60 = por %p58, %p59
      %s61 = ssub.s32 %s27, %s34
      %p62 = scmp.eq.s32.totalorder %s61, 0
      %s64 = sadd.s32 %s63, 1
      %s65 = scalar_select %p62, %s63, %s64
      %p68 = pneg %p62
      %p69 = scmp.eq.s32.totalorder %s27, 1
      %p70 = por %p68, %p69
      %p71 = scmp.ne.s32.totalorder %s63, %s66
      %p72 = scmp.eq.s32.totalorder %s27, 0
      %p73 = por %p71, %p72
      %p74 = scmp.ne.s32.totalorder %s63, %s66
      %p75 = scmp.eq.s32.totalorder %s32, 1
      %p76 = por %p74, %p75
      %p77 = scmp.ne.s32.totalorder %s66, %s67
      %p78 = scmp.eq.s32.totalorder %s32, 0
      %p79 = por %p77, %p78
      %p80 = scmp.ne.s32.totalorder %s66, %s67
      %p81 = scmp.eq.s32.totalorder %s33, 1
      %p82 = por %p80, %p81
      %p84 = scmp.ne.s32.totalorder %s67, %s83
      %p85 = scmp.eq.s32.totalorder %s33, 0
      %p86 = por %p84, %p85
      %s88 = sadd.s32 %s87, 1
      %p91 = scmp.eq.s32.totalorder %s27, 1
      %p92 = scmp.ne.s32.totalorder %s87, %s89
      %p93 = scmp.eq.s32.totalorder %s27, 0
      %p94 = por %p92, %p93
      %p95 = scmp.ne.s32.totalorder %s87, %s89
      %p96 = scmp.eq.s32.totalorder %s32, 1
      %p97 = por %p95, %p96
      %p98 = scmp.ne.s32.totalorder %s89, %s90
      %p99 = scmp.eq.s32.totalorder %s32, 0
      %p100 = por %p98, %p99
      %p101 = scmp.ne.s32.totalorder %s89, %s90
      %p102 = scmp.eq.s32.totalorder %s33, 1
      %p103 = por %p101, %p102
      %p105 = scmp.ne.s32.totalorder %s90, %s104
      %p106 = scmp.eq.s32.totalorder %s33, 0
      %p107 = por %p105, %p106
      %s109 = sadd.s32 %s108, 1
      %p112 = scmp.eq.s32.totalorder %s27, 1
      %p113 = scmp.ne.s32.totalorder %s108, %s110
      %p114 = scmp.eq.s32.totalorder %s27, 0
      %p115 = por %p113, %p114
      %p116 = scmp.ne.s32.totalorder %s108, %s110
      %p117 = scmp.eq.s32.totalorder %s32, 1
      %p118 = por %p116, %p117
      %p119 = scmp.ne.s32.totalorder %s110, %s111
      %p120 = scmp.eq.s32.totalorder %s32, 0
      %p121 = por %p119, %p120
      %p122 = scmp.ne.s32.totalorder %s110, %s111
      %p123 = scmp.eq.s32.totalorder %s33, 1
      %p124 = por %p122, %p123
      %p126 = scmp.ne.s32.totalorder %s111, %s125
      %p127 = scmp.eq.s32.totalorder %s33, 0
      %p128 = por %p126, %p127
      %s130 = sadd.s32 %s129, 1
      %p133 = scmp.eq.s32.totalorder %s27, 1
      %p134 = scmp.ne.s32.totalorder %s129, %s131
      %p135 = scmp.eq.s32.totalorder %s27, 0
      %p136 = por %p134, %p135
      %p137 = scmp.ne.s32.totalorder %s129, %s131
      %p138 = scmp.eq.s32.totalorder %s32, 1
      %p139 = por %p137, %p138
      %p140 = scmp.ne.s32.totalorder %s131, %s132
      %p141 = scmp.eq.s32.totalorder %s32, 0
      %p142 = por %p140, %p141
      %p143 = scmp.ne.s32.totalorder %s131, %s132
      %p144 = scmp.eq.s32.totalorder %s33, 1
      %p145 = por %p143, %p144
      %p147 = scmp.ne.s32.totalorder %s132, %s146
      %p148 = scmp.eq.s32.totalorder %s33, 0
      %p149 = por %p147, %p148
      %s151 = sadd.s32 %s150, 1
      %p154 = scmp.eq.s32.totalorder %s27, 1
      %p155 = scmp.ne.s32.totalorder %s150, %s152
      %p156 = scmp.eq.s32.totalorder %s27, 0
      %p157 = por %p155, %p156
      %p158 = scmp.ne.s32.totalorder %s150, %s152
      %p159 = scmp.eq.s32.totalorder %s32, 1
      %p160 = por %p158, %p159
      %p161 = scmp.ne.s32.totalorder %s152, %s153
      %p162 = scmp.eq.s32.totalorder %s32, 0
      %p163 = por %p161, %p162
      %p164 = scmp.ne.s32.totalorder %s152, %s153
      %p165 = scmp.eq.s32.totalorder %s33, 1
      %p166 = por %p164, %p165
      %p168 = scmp.ne.s32.totalorder %s153, %s167
      %p169 = scmp.eq.s32.totalorder %s33, 0
      %p170 = por %p168, %p169
      %s172 = sadd.s32 %s171, 1
      %p175 = scmp.eq.s32.totalorder %s27, 1
      %p176 = scmp.ne.s32.totalorder %s171, %s173
      %p177 = scmp.eq.s32.totalorder %s27, 0
      %p178 = por %p176, %p177
      %p179 = scmp.ne.s32.totalorder %s171, %s173
      %p180 = scmp.eq.s32.totalorder %s32, 1
      %p181 = por %p179, %p180
      %p182 = scmp.ne.s32.totalorder %s173, %s174
      %p183 = scmp.eq.s32.totalorder %s32, 0
      %p184 = por %p182, %p183
      %p185 = scmp.ne.s32.totalorder %s173, %s174
      %p186 = scmp.eq.s32.totalorder %s33, 1
      %p187 = por %p185, %p186
      %p189 = scmp.ne.s32.totalorder %s174, %s188
      %p190 = scmp.eq.s32.totalorder %s33, 0
      %p191 = por %p189, %p190
      %s193 = sadd.s32 %s192, 1
      %p196 = scmp.eq.s32.totalorder %s27, 1
      %p197 = scmp.ne.s32.totalorder %s192, %s194
      %p198 = scmp.eq.s32.totalorder %s27, 0
      %p199 = por %p197, %p198
      %p200 = scmp.ne.s32.totalorder %s192, %s194
      %p201 = scmp.eq.s32.totalorder %s32, 1
      %p202 = por %p200, %p201
      %p203 = scmp.ne.s32.totalorder %s194, %s195
      %p204 = scmp.eq.s32.totalorder %s32, 0
      %p205 = por %p203, %p204
      %p206 = scmp.ne.s32.totalorder %s194, %s195
      %p207 = scmp.eq.s32.totalorder %s33, 1
      %p208 = por %p206, %p207
      %p210 = scmp.ne.s32.totalorder %s195, %s209
      %p211 = scmp.eq.s32.totalorder %s33, 0
      %p212 = por %p210, %p211
      %s214 = sadd.s32 %s213, 1
      %p217 = scmp.eq.s32.totalorder %s27, 1
      %p218 = scmp.ne.s32.totalorder %s213, %s215
      %p219 = scmp.eq.s32.totalorder %s27, 0
      %p220 = por %p218, %p219
      %p221 = scmp.ne.s32.totalorder %s213, %s215
      %p222 = scmp.eq.s32.totalorder %s32, 1
      %p223 = por %p221, %p222
      %p224 = scmp.ne.s32.totalorder %s215, %s216
      %p225 = scmp.eq.s32.totalorder %s32, 0
      %p226 = por %p224, %p225
      %p227 = scmp.ne.s32.totalorder %s215, %s216
      %p228 = scmp.eq.s32.totalorder %s33, 1
      %p229 = por %p227, %p228
      %p231 = scmp.ne.s32.totalorder %s216, %s230
      %p232 = scmp.eq.s32.totalorder %s33, 0
      %p233 = por %p231, %p232
      %s234 = ssub.s32 %s27, %s34
      %p235 = scmp.eq.s32.totalorder %s234, 0
      %s237 = sadd.s32 %s236, 1
      %s238 = scalar_select %p235, %s236, %s237
      %p241 = pneg %p235
      %p242 = scmp.eq.s32.totalorder %s27, 1
      %p243 = por %p241, %p242
      %p244 = scmp.ne.s32.totalorder %s236, %s239
      %p245 = scmp.eq.s32.totalorder %s27, 0
      %p246 = por %p244, %p245
      %p247 = scmp.ne.s32.totalorder %s236, %s239
      %p248 = scmp.eq.s32.totalorder %s32, 1
      %p249 = por %p247, %p248
      %p250 = scmp.ne.s32.totalorder %s239, %s240
      %p251 = scmp.eq.s32.totalorder %s32, 0
      %p252 = por %p250, %p251
      %p253 = scmp.ne.s32.totalorder %s239, %s240
      %p254 = scmp.eq.s32.totalorder %s33, 1
      %p255 = por %p253, %p254
      %p257 = scmp.ne.s32.totalorder %s240, %s256
      %p258 = scmp.eq.s32.totalorder %s33, 0
      %p259 = por %p257, %p258
      %p260 = scmp.le.s32.totalorder 1, %s27
      %p261 = scmp.lt.s32.totalorder %s27, 3
      %p262 = pnand %p260, %p261
      %p263 = pneg %p262
      // Predicated region
      $region9: #{tpu_custom_call.1} parent=5 // pred_check
        _
      $region10: #{tpu_custom_call.1} parent=5 // pred_check_branch
        %265 = sbr.rel (%p262) target = $region12
      $region11: #{tpu_custom_call.1} parent=5 // pred_region
        %s266 = ssub.s32 %s27, 1
        // Predicated region
        $region13: #{tpu_custom_call.1} parent=11 // pred_check
          %p267 = pneg %p100
        $region14: #{tpu_custom_call.1} parent=11 // pred_check_branch
          %269 = sbr.rel (%p267) target = $region16
        $region15: #{tpu_custom_call.1} parent=11 // pred_region
          _
        $region16: #{tpu_custom_call.1} parent=11 // pred_fallthru
          _
        // Predicated region
        $region17: #{tpu_custom_call.1} parent=11 // pred_check
          %p270 = pneg %p121
        $region18: #{tpu_custom_call.1} parent=11 // pred_check_branch
          %272 = sbr.rel (%p270) target = $region20
        $region19: #{tpu_custom_call.1} parent=11 // pred_region
          %s274 = ssub.s32 1024, 1024
          %275 = vsyncadd [#allocation5], %s274
          %s276 = sshll.u32 [#allocation4], 4
          %s277 = int_to_ptr.vmem [resolvable:$true] %s276
          %282 = dma.hbm_to_vmem [thread:$0]  %s4, 1024, %s277, [#allocation5], 256, 256, 16
        $region20: #{tpu_custom_call.1} parent=11 // pred_fallthru
          _
        // Predicated region
        $region21: #{tpu_custom_call.1} parent=11 // pred_check
          %p283 = pneg %p142
        $region22: #{tpu_custom_call.1} parent=11 // pred_check_branch
          %285 = sbr.rel (%p283) target = $region24
        $region23: #{tpu_custom_call.1} parent=11 // pred_region
          _
        $region24: #{tpu_custom_call.1} parent=11 // pred_fallthru
          _
        // Predicated region
        $region25: #{tpu_custom_call.1} parent=11 // pred_check
          %p286 = pneg %p163
        $region26: #{tpu_custom_call.1} parent=11 // pred_check_branch
          %288 = sbr.rel (%p286) target = $region28
        $region27: #{tpu_custom_call.1} parent=11 // pred_region
          _
        $region28: #{tpu_custom_call.1} parent=11 // pred_fallthru
          _
        // Predicated region
        $region29: #{tpu_custom_call.1} parent=11 // pred_check
          %p289 = pneg %p184
        $region30: #{tpu_custom_call.1} parent=11 // pred_check_branch
          %291 = sbr.rel (%p289) target = $region32
        $region31: #{tpu_custom_call.1} parent=11 // pred_region
          %s293 = ssub.s32 4096, 4096
          %294 = vsyncadd [#allocation8], %s293
          %s295 = sshll.u32 [#allocation7], 4
          %s296 = int_to_ptr.vmem [resolvable:$true] %s295
          %301 = dma.hbm_to_vmem [thread:$0]  %s7, 4096, %s296, [#allocation8], 64, 64, 4
        $region32: #{tpu_custom_call.1} parent=11 // pred_fallthru
          _
        // Predicated region
        $region33: #{tpu_custom_call.1} parent=11 // pred_check
          %p302 = pneg %p205
        $region34: #{tpu_custom_call.1} parent=11 // pred_check_branch
          %304 = sbr.rel (%p302) target = $region36
        $region35: #{tpu_custom_call.1} parent=11 // pred_region
          _
        $region36: #{tpu_custom_call.1} parent=11 // pred_fallthru
          _
        // Predicated region
        $region37: #{tpu_custom_call.1} parent=11 // pred_check
          %p305 = pneg %p226
        $region38: #{tpu_custom_call.1} parent=11 // pred_check_branch
          %307 = sbr.rel (%p305) target = $region40
        $region39: #{tpu_custom_call.1} parent=11 // pred_region
          _
        $region40: #{tpu_custom_call.1} parent=11 // pred_fallthru
          _
      $region12: #{tpu_custom_call.1} parent=5 // pred_fallthru
        _
      %p308 = scmp.lt.s32.totalorder %s27, 2
      // Predicated region
      $region41: #{tpu_custom_call.1} parent=5 // pred_check
        %p309 = pneg %p308
      $region42: #{tpu_custom_call.1} parent=5 // pred_check_branch
        %311 = sbr.rel (%p309) target = $region44
      $region43: #{tpu_custom_call.1} parent=5 // pred_region
        // Predicated region
        $region45: #{tpu_custom_call.1} parent=43 // pred_check
          %p312 = pneg %p47
        $region46: #{tpu_custom_call.1} parent=43 // pred_check_branch
          %314 = sbr.rel (%p312) target = $region48
        $region47: #{tpu_custom_call.1} parent=43 // pred_region
          %s315 = smul.u32 2, %s27
          %p316 = scmp.lt.s32.totalorder %s315, 3
          %s317 = scalar_select %p316, %s315, 3
          %s318 = smul.addr %s317, 8
          %s319 = scalar_lea.vmem %s1, %s318
          %s320 = smul.u32 2, %s27
        $region48: #{tpu_custom_call.1} parent=43 // pred_fallthru
          _
        // Predicated region
        $region49: #{tpu_custom_call.1} parent=43 // pred_check
          %p321 = pneg %p73
        $region50: #{tpu_custom_call.1} parent=43 // pred_check_branch
          %323 = sbr.rel (%p321) target = $region52
        $region51: #{tpu_custom_call.1} parent=43 // pred_region
          %s324 = smul.u32 2, %s27
          %p325 = scmp.lt.s32.totalorder %s324, 3
          %s326 = scalar_select %p325, %s324, 3
          %s327 = smul.addr %s326, 4
          %s328 = scalar_lea.vmem %s2, %s327
          %s329 = smul.u32 2, %s27
        $region52: #{tpu_custom_call.1} parent=43 // pred_fallthru
          _
      $region44: #{tpu_custom_call.1} parent=5 // pred_fallthru
        _
      %p330 = scmp.le.s32.totalorder 1, %s27
      %p331 = scmp.lt.s32.totalorder %s27, 3
      %p332 = pnand %p330, %p331
      %p333 = pneg %p332
      // Predicated region
      $region53: #{tpu_custom_call.1} parent=5 // pred_check
        _
      $region54: #{tpu_custom_call.1} parent=5 // pred_check_branch
        %335 = sbr.rel (%p332) target = $region56
      $region55: #{tpu_custom_call.1} parent=5 // pred_region
        %s336 = ssub.s32 %s27, 1
        // Predicated region
        $region57: #{tpu_custom_call.1} parent=55 // pred_check
          %p337 = pneg %p121
        $region58: #{tpu_custom_call.1} parent=55 // pred_check_branch
          %339 = sbr.rel (%p337) target = $region60
        $region59: #{tpu_custom_call.1} parent=55 // pred_region
          %340 = dma.done [#allocation5], 1024
        $region60: #{tpu_custom_call.1} parent=55 // pred_fallthru
          _
        // Predicated region
        $region61: #{tpu_custom_call.1} parent=55 // pred_check
          %p341 = pneg %p184
        $region62: #{tpu_custom_call.1} parent=55 // pred_check_branch
          %343 = sbr.rel (%p341) target = $region64
        $region63: #{tpu_custom_call.1} parent=55 // pred_region
          %344 = dma.done [#allocation8], 4096
        $region64: #{tpu_custom_call.1} parent=55 // pred_fallthru
          _
        %s345 = smul.u32 2, %s32
        %p346 = scmp.lt.s32.totalorder %s345, 3
        %s347 = scalar_select %p346, %s345, 3
        %s348 = smul.addr %s347, 8
        %s349 = scalar_lea.vmem %s1, %s348
        %p350 = pneg %p53
        %p351 = pneg %p50
        %s352 = smul.u32 2, %s32
        %p353 = scmp.lt.s32.totalorder %s352, 3
        %s354 = scalar_select %p353, %s352, 3
        %s355 = smul.addr %s354, 4
        %s356 = scalar_lea.vmem %s2, %s355
        %p357 = pneg %p79
        %p358 = pneg %p76
        %p359 = pneg %p100
        %p360 = pneg %p97
        %p361 = pneg %p121
        %p362 = pneg %p118
        %p363 = pneg %p142
        %p364 = pneg %p139
        %p365 = pneg %p163
        %p366 = pneg %p160
        %p367 = pneg %p184
        %p368 = pneg %p181
        %p369 = pneg %p205
        %p370 = pneg %p202
        %p371 = pneg %p226
        %p372 = pneg %p223
        %p373 = pneg %p252
        %p374 = pneg %p249
        %s375 = sand.u32 %s239, 1
        %s376 = scalar_lea.sflag [#allocation6], %s375
        %s377 = sand.u32 %s239, 1
        %s378 = smul.addr %s377, 16
        %s379 = scalar_lea.vmem [#allocation9], %s378
        %s380 = smul.u32 2, %s32
        %p381 = scmp.lt.s32.totalorder %s380, 3
        %s382 = scalar_select %p381, %s380, 3
        %s383 = smul.addr %s382, 8
        %s384 = scalar_lea.vmem %s1, %s383
        %s385 = smul.u32 2, %s32
        %s386 = smul.u32 2, %s32
        %p387 = scmp.lt.s32.totalorder %s386, 3
        %s388 = scalar_select %p387, %s386, 3
        %s389 = smul.addr %s388, 4
        %s390 = scalar_lea.vmem %s2, %s389
        %s391 = smul.u32 2, %s32
        %s392 = smul.u32 2, %s32
        %s394 = smul.u32 %s32, 2
        %v395 = vlaneseq
        %v396 = vshrl.u32 %v395, 7
        %vm397 = vcmp.eq.s32.totalorder %v396, 0
        %s398 = sld [smem:[#allocation3 + %s394]]
        %v399 = vstv %s398
        %v400 = vsel %vm397, %v399, 0
        %vm401 = vcmp.eq.s32.totalorder %v396, 1
        %s402 = sadd.s32 %s394, 1
        %s403 = sld [smem:[#allocation3 + %s402]]
        %v404 = vstv %s403
        %v405 = vsel %vm401, %v404, %v400
        %v406 = vcvt.s32.f32 %v405
        %v408 = vlaneseq
        %v409 = vshrl.u32 %v408, 7
        %v410 = vsub.s32 0, %v409
        %v411 = vrot.slane %v406, %v410
        %v412 = vlaneseq
        %v413 = vshrl.u32 %v412, 7
        %v414 = vsub.s32 1, %v413
        %v415 = vrot.slane %v406, %v414
        %v418 = vrcp.pop %v411
        %v419 = vmul.f32 1.0, %v418
        %v420 = vrcp.pop %v415
        %v421 = vmul.f32 1.0, %v420
        %v422 = vmul.f32 %v419, %v419
        %v423 = vmul.f32 %v421, %v421
        %v424 = vld [vmem:[%s384] sm:$0xff]
        %v425 = vld [vmem:[%s384 + $0x8] sm:$0xff]
        %v426 = vld [vmem:[%s3] sm:$0xff]
        %428 = vset.pattern.permute.xlu0 0
        %429 = vperm.xlu0 %428, %v424
        %v430 = vpop.permute.xlu0 %429
        %433 = vset.pattern.permute.xlu0 0
        %434 = vperm.xlu0 %433, %v425
        %v435 = vpop.permute.xlu0 %434
        %v438 = vlaneseq
        %v439 = vshrl.u32 %v438, 7
        %v440 = vsub.s32 0, %v439
        %v441 = vrot.slane %v426, %v440
        %v442 = vlaneseq
        %v443 = vshrl.u32 %v442, 7
        %v444 = vsub.s32 2, %v443
        %v445 = vrot.slane %v426, %v444
        %v446 = vlaneseq
        %v447 = vshrl.u32 %v446, 7
        %v448 = vsub.s32 4, %v447
        %v449 = vrot.slane %v426, %v448
        %v450 = vlaneseq
        %v451 = vshrl.u32 %v450, 7
        %v452 = vsub.s32 6, %v451
        %v453 = vrot.slane %v426, %v452
        %v458 = vlaneseq
        %v459 = vshrl.u32 %v458, 7
        %v460 = vsub.s32 0, %v459
        %v461 = vrot.slane %v441, %v460
        %v462 = vlaneseq
        %v463 = vshrl.u32 %v462, 7
        %v464 = vsub.s32 0, %v463
        %v465 = vrot.slane %v445, %v464
        %v466 = vlaneseq
        %v467 = vshrl.u32 %v466, 7
        %v468 = vsub.s32 0, %v467
        %v469 = vrot.slane %v449, %v468
        %v470 = vlaneseq
        %v471 = vshrl.u32 %v470, 7
        %v472 = vsub.s32 0, %v471
        %v473 = vrot.slane %v453, %v472
        %v474 = vmul.f32 %v430, %v461
        %v475 = vmul.f32 %v430, %v465
        %v476 = vmul.f32 %v430, %v469
        %v477 = vmul.f32 %v430, %v473
        %v478 = vmul.f32 %v435, %v461
        %v479 = vmul.f32 %v435, %v465
        %v480 = vmul.f32 %v435, %v469
        %v481 = vmul.f32 %v435, %v473
        %482 = vset.pattern.permute.xlu0 1
        %483 = vperm.xlu0 %482, %v424
        %v484 = vpop.permute.xlu0 %483
        %486 = vset.pattern.permute.xlu0 1
        %487 = vperm.xlu0 %486, %v425
        %v488 = vpop.permute.xlu0 %487
        %v490 = vlaneseq
        %v491 = vshrl.u32 %v490, 7
        %v492 = vsub.s32 1, %v491
        %v493 = vrot.slane %v426, %v492
        %v494 = vlaneseq
        %v495 = vshrl.u32 %v494, 7
        %v496 = vsub.s32 3, %v495
        %v497 = vrot.slane %v426, %v496
        %v498 = vlaneseq
        %v499 = vshrl.u32 %v498, 7
        %v500 = vsub.s32 5, %v499
        %v501 = vrot.slane %v426, %v500
        %v502 = vlaneseq
        %v503 = vshrl.u32 %v502, 7
        %v504 = vsub.s32 7, %v503
        %v505 = vrot.slane %v426, %v504
        %v510 = vlaneseq
        %v511 = vshrl.u32 %v510, 7
        %v512 = vsub.s32 1, %v511
        %v513 = vrot.slane %v493, %v512
        %v514 = vlaneseq
        %v515 = vshrl.u32 %v514, 7
        %v516 = vsub.s32 1, %v515
        %v517 = vrot.slane %v497, %v516
        %v518 = vlaneseq
        %v519 = vshrl.u32 %v518, 7
        %v520 = vsub.s32 1, %v519
        %v521 = vrot.slane %v501, %v520
        %v522 = vlaneseq
        %v523 = vshrl.u32 %v522, 7
        %v524 = vsub.s32 1, %v523
        %v525 = vrot.slane %v505, %v524
        %v526 = vmul.f32 %v484, %v513
        %v527 = vmul.f32 %v484, %v517
        %v528 = vmul.f32 %v484, %v521
        %v529 = vmul.f32 %v484, %v525
        %v530 = vmul.f32 %v488, %v513
        %v531 = vmul.f32 %v488, %v517
        %v532 = vmul.f32 %v488, %v521
        %v533 = vmul.f32 %v488, %v525
        %v534 = vadd.f32 %v474, %v526
        %v535 = vadd.f32 %v475, %v527
        %v536 = vadd.f32 %v476, %v528
        %v537 = vadd.f32 %v477, %v529
        %v538 = vadd.f32 %v478, %v530
        %v539 = vadd.f32 %v479, %v531
        %v540 = vadd.f32 %v480, %v532
        %v541 = vadd.f32 %v481, %v533
        %v542 = vld [vmem:[%s390] sm:$0xf]
        %v543 = vld [vmem:[%s390 + $0x4] sm:$0xf]
        %v544 = vld [vmem:[#allocation4] sm:$0xff]
        %v545 = vld [vmem:[#allocation4 + $0x8] sm:$0xff]
        %v546 = vld [vmem:[#allocation4 + $0x10] sm:$0xff]
        %v547 = vld [vmem:[#allocation4 + $0x18] sm:$0xff]
        %v548 = vld [vmem:[#allocation4 + $0x20] sm:$0xff]
        %v549 = vld [vmem:[#allocation4 + $0x28] sm:$0xff]
        %v550 = vld [vmem:[#allocation4 + $0x30] sm:$0xff]
        %v551 = vld [vmem:[#allocation4 + $0x38] sm:$0xff]
        %v554 = vunpack.c.l.b16 %v542
        %v555 = vunpack.c.l.b16 %v543
        %v556 = vpack.c.b16 %v555, %v554
        %v565 = vunpack.c.l.b16 %v544
        %v566 = vunpack.c.h.b16 %v544
        %v567 = vunpack.c.l.b16 %v545
        %v568 = vunpack.c.h.b16 %v545
        %v569 = vunpack.c.l.b16 %v546
        %v570 = vunpack.c.h.b16 %v546
        %v571 = vunpack.c.l.b16 %v547
        %v572 = vunpack.c.h.b16 %v547
        %v573 = vunpack.c.l.b16 %v548
        %v574 = vunpack.c.h.b16 %v548
        %v575 = vunpack.c.l.b16 %v549
        %v576 = vunpack.c.h.b16 %v549
        %v577 = vunpack.c.l.b16 %v550
        %v578 = vunpack.c.h.b16 %v550
        %v579 = vunpack.c.l.b16 %v551
        %v580 = vunpack.c.h.b16 %v551
        %v581 = vpack.c.b16 %v569, %v565
        %v582 = vpack.c.b16 %v570, %v566
        %v583 = vpack.c.b16 %v571, %v567
        %v584 = vpack.c.b16 %v572, %v568
        %v585 = vpack.c.b16 %v577, %v573
        %v586 = vpack.c.b16 %v578, %v574
        %v587 = vpack.c.b16 %v579, %v575
        %v588 = vpack.c.b16 %v580, %v576
        %vm597 = vcmask 261120
        %v599 = vsel %vm597, %v556, 0
        %601 = vmatprep.subr.bf16.mxu0 %v582
        %602 = vmatpush1.bf16.msra.mxu0 %v581
        %603 = vmatprep.subr.bf16.mxu0 %v586
        %604 = vmatpush1.bf16.msra.mxu0 %v585
        %605 = vmatprep.subr.bf16.mxu0 0
        %606 = vmatpush1.bf16.msra.mxu0 0
        %607 = vmatprep.subr.bf16.mxu0 0
        %608 = vmatpush1.bf16.msra.mxu0 0
        %609 = vmatprep.subr.bf16.mxu0 0
        %610 = vmatpush1.bf16.msra.mxu0 0
        %611 = vmatprep.subr.bf16.mxu0 0
        %612 = vmatpush1.bf16.msra.mxu0 0
        %613 = vmatprep.subr.bf16.mxu0 0
        %614 = vmatpush1.bf16.msra.mxu0 0
        %615 = vmatprep.subr.bf16.mxu0 0
        %616 = vmatpush1.bf16.msra.mxu0 0
        %617 = vmatprep.subr.bf16.mxu0 0
        %618 = vmatpush1.bf16.msra.mxu0 0
        %619 = vmatprep.subr.bf16.mxu0 0
        %620 = vmatpush1.bf16.msra.mxu0 0
        %621 = vmatprep.subr.bf16.mxu0 0
        %622 = vmatpush1.bf16.msra.mxu0 0
        %623 = vmatprep.subr.bf16.mxu0 0
        %624 = vmatpush1.bf16.msra.mxu0 0
        %625 = vmatprep.subr.bf16.mxu0 0
        %626 = vmatpush1.bf16.msra.mxu0 0
        %627 = vmatprep.subr.bf16.mxu0 0
        %628 = vmatpush1.bf16.msra.mxu0 0
        %629 = vmatprep.subr.bf16.mxu0 0
        %630 = vmatpush1.bf16.msra.mxu0 0
        %631 = vmatprep.subr.bf16.mxu0 0
        %632 = vmatpush1.bf16.msra.mxu0 0
        %633 = vmatprep.mubr.bf16.mxu0 0
        %634 = vmatmul.mubr.bf16.gmra.mrb[0].mxu0 %v599
        %v635 = vpop.f32.mrb[0].mxu0
        %v636 = vadd.f32 0.0, %v635
        %v637 = vpop.f32.mrb[0].mxu0
        %v638 = vadd.f32 0.0, %v637
        %v639 = vpop.f32.mrb[0].mxu0
        %v640 = vadd.f32 0.0, %v639
        %v641 = vpop.f32.mrb[0].mxu0
        %v642 = vadd.f32 0.0, %v641
        %643 = vdwg.mxu0
        %644 = vmatprep.subr.bf16.mxu0 %v584
        %645 = vmatpush1.bf16.msra.mxu0 %v583
        %646 = vmatprep.subr.bf16.mxu0 %v588
        %647 = vmatpush1.bf16.msra.mxu0 %v587
        %648 = vmatprep.subr.bf16.mxu0 0
        %649 = vmatpush1.bf16.msra.mxu0 0
        %650 = vmatprep.subr.bf16.mxu0 0
        %651 = vmatpush1.bf16.msra.mxu0 0
        %652 = vmatprep.subr.bf16.mxu0 0
        %653 = vmatpush1.bf16.msra.mxu0 0
        %654 = vmatprep.subr.bf16.mxu0 0
        %655 = vmatpush1.bf16.msra.mxu0 0
        %656 = vmatprep.subr.bf16.mxu0 0
        %657 = vmatpush1.bf16.msra.mxu0 0
        %658 = vmatprep.subr.bf16.mxu0 0
        %659 = vmatpush1.bf16.msra.mxu0 0
        %660 = vmatprep.subr.bf16.mxu0 0
        %661 = vmatpush1.bf16.msra.mxu0 0
        %662 = vmatprep.subr.bf16.mxu0 0
        %663 = vmatpush1.bf16.msra.mxu0 0
        %664 = vmatprep.subr.bf16.mxu0 0
        %665 = vmatpush1.bf16.msra.mxu0 0
        %666 = vmatprep.subr.bf16.mxu0 0
        %667 = vmatpush1.bf16.msra.mxu0 0
        %668 = vmatprep.subr.bf16.mxu0 0
        %669 = vmatpush1.bf16.msra.mxu0 0
        %670 = vmatprep.subr.bf16.mxu0 0
        %671 = vmatpush1.bf16.msra.mxu0 0
        %672 = vmatprep.subr.bf16.mxu0 0
        %673 = vmatpush1.bf16.msra.mxu0 0
        %674 = vmatprep.subr.bf16.mxu0 0
        %675 = vmatpush1.bf16.msra.mxu0 0
        %676 = vmatprep.mubr.bf16.mxu0 0
        %677 = vmatmul.mubr.bf16.gmra.mrb[0].mxu0 %v599
        %v678 = vpop.f32.mrb[0].mxu0
        %v679 = vadd.f32 0.0, %v678
        %v680 = vpop.f32.mrb[0].mxu0
        %v681 = vadd.f32 0.0, %v680
        %v682 = vpop.f32.mrb[0].mxu0
        %v683 = vadd.f32 0.0, %v682
        %v684 = vpop.f32.mrb[0].mxu0
        %v685 = vadd.f32 0.0, %v684
        %686 = vdwg.mxu0
        %v687 = vadd.f32 %v534, %v636
        %v688 = vadd.f32 %v535, %v638
        %v689 = vadd.f32 %v536, %v679
        %v690 = vadd.f32 %v537, %v681
        %v691 = vadd.f32 %v538, %v640
        %v692 = vadd.f32 %v539, %v642
        %v693 = vadd.f32 %v540, %v683
        %v694 = vadd.f32 %v541, %v685
        %v695 = vlaneseq
        %v696 = vshrl.u32 %v695, 7
        %v697 = vsub.s32 0, %v696
        %v698 = vrot.slane %v405, %v697
        %v699 = vlaneseq
        %v700 = vshrl.u32 %v699, 7
        %v701 = vsub.s32 1, %v700
        %v702 = vrot.slane %v405, %v701
        %vm703 = vcmp.lt.s32.totalorder %v396, %v698
        %vm704 = vcmp.lt.s32.totalorder %v396, %v702
        %v705 = vsel %vm703, 1, 0
        %v706 = vsel %vm704, 1, 0
        %vm707 = vcmp.eq.s32.totalorder %v705, 1
        %vm708 = vcmp.eq.s32.totalorder %v706, 1
        %v709 = vsel %vm707, %v687, 0.0
        %v710 = vsel %vm707, %v688, 0.0
        %v711 = vsel %vm707, %v689, 0.0
        %v712 = vsel %vm707, %v690, 0.0
        %v713 = vsel %vm708, %v691, 0.0
        %v714 = vsel %vm708, %v692, 0.0
        %v715 = vsel %vm708, %v693, 0.0
        %v716 = vsel %vm708, %v694, 0.0
        %v717 = vsel %vm707, %v534, 0.0
        %v718 = vsel %vm707, %v535, 0.0
        %v719 = vsel %vm707, %v536, 0.0
        %v720 = vsel %vm707, %v537, 0.0
        %v721 = vsel %vm708, %v538, 0.0
        %v722 = vsel %vm708, %v539, 0.0
        %v723 = vsel %vm708, %v540, 0.0
        %v724 = vsel %vm708, %v541, 0.0
        %v725 = vrot.slane %v709, 4
        %v726 = vadd.f32 %v709, %v725
        %v727 = vrot.slane %v726, 2
        %v728 = vadd.f32 %v726, %v727
        %v729 = vrot.slane %v728, 1
        %v730 = vadd.f32 %v728, %v729
        %v731 = vrot.slane %v710, 4
        %v732 = vadd.f32 %v710, %v731
        %v733 = vrot.slane %v732, 2
        %v734 = vadd.f32 %v732, %v733
        %v735 = vrot.slane %v734, 1
        %v736 = vadd.f32 %v734, %v735
        %v737 = vrot.slane %v711, 4
        %v738 = vadd.f32 %v711, %v737
        %v739 = vrot.slane %v738, 2
        %v740 = vadd.f32 %v738, %v739
        %v741 = vrot.slane %v740, 1
        %v742 = vadd.f32 %v740, %v741
        %v743 = vrot.slane %v712, 4
        %v744 = vadd.f32 %v712, %v743
        %v745 = vrot.slane %v744, 2
        %v746 = vadd.f32 %v744, %v745
        %v747 = vrot.slane %v746, 1
        %v748 = vadd.f32 %v746, %v747
        %v749 = vrot.slane %v713, 4
        %v750 = vadd.f32 %v713, %v749
        %v751 = vrot.slane %v750, 2
        %v752 = vadd.f32 %v750, %v751
        %v753 = vrot.slane %v752, 1
        %v754 = vadd.f32 %v752, %v753
        %v755 = vrot.slane %v714, 4
        %v756 = vadd.f32 %v714, %v755
        %v757 = vrot.slane %v756, 2
        %v758 = vadd.f32 %v756, %v757
        %v759 = vrot.slane %v758, 1
        %v760 = vadd.f32 %v758, %v759
        %v761 = vrot.slane %v715, 4
        %v762 = vadd.f32 %v715, %v761
        %v763 = vrot.slane %v762, 2
        %v764 = vadd.f32 %v762, %v763
        %v765 = vrot.slane %v764, 1
        %v766 = vadd.f32 %v764, %v765
        %v767 = vrot.slane %v716, 4
        %v768 = vadd.f32 %v716, %v767
        %v769 = vrot.slane %v768, 2
        %v770 = vadd.f32 %v768, %v769
        %v771 = vrot.slane %v770, 1
        %v772 = vadd.f32 %v770, %v771
        %v773 = vrot.slane %v717, 4
        %v774 = vadd.f32 %v717, %v773
        %v775 = vrot.slane %v774, 2
        %v776 = vadd.f32 %v774, %v775
        %v777 = vrot.slane %v776, 1
        %v778 = vadd.f32 %v776, %v777
        %v779 = vrot.slane %v718, 4
        %v780 = vadd.f32 %v718, %v779
        %v781 = vrot.slane %v780, 2
        %v782 = vadd.f32 %v780, %v781
        %v783 = vrot.slane %v782, 1
        %v784 = vadd.f32 %v782, %v783
        %v785 = vrot.slane %v719, 4
        %v786 = vadd.f32 %v719, %v785
        %v787 = vrot.slane %v786, 2
        %v788 = vadd.f32 %v786, %v787
        %v789 = vrot.slane %v788, 1
        %v790 = vadd.f32 %v788, %v789
        %v791 = vrot.slane %v720, 4
        %v792 = vadd.f32 %v720, %v791
        %v793 = vrot.slane %v792, 2
        %v794 = vadd.f32 %v792, %v793
        %v795 = vrot.slane %v794, 1
        %v796 = vadd.f32 %v794, %v795
        %v797 = vrot.slane %v721, 4
        %v798 = vadd.f32 %v721, %v797
        %v799 = vrot.slane %v798, 2
        %v800 = vadd.f32 %v798, %v799
        %v801 = vrot.slane %v800, 1
        %v802 = vadd.f32 %v800, %v801
        %v803 = vrot.slane %v722, 4
        %v804 = vadd.f32 %v722, %v803
        %v805 = vrot.slane %v804, 2
        %v806 = vadd.f32 %v804, %v805
        %v807 = vrot.slane %v806, 1
        %v808 = vadd.f32 %v806, %v807
        %v809 = vrot.slane %v723, 4
        %v810 = vadd.f32 %v723, %v809
        %v811 = vrot.slane %v810, 2
        %v812 = vadd.f32 %v810, %v811
        %v813 = vrot.slane %v812, 1
        %v814 = vadd.f32 %v812, %v813
        %v815 = vrot.slane %v724, 4
        %v816 = vadd.f32 %v724, %v815
        %v817 = vrot.slane %v816, 2
        %v818 = vadd.f32 %v816, %v817
        %v819 = vrot.slane %v818, 1
        %v820 = vadd.f32 %v818, %v819
        %v821 = vmul.f32 %v709, %v709
        %v822 = vmul.f32 %v710, %v710
        %v823 = vmul.f32 %v711, %v711
        %v824 = vmul.f32 %v712, %v712
        %v825 = vmul.f32 %v713, %v713
        %v826 = vmul.f32 %v714, %v714
        %v827 = vmul.f32 %v715, %v715
        %v828 = vmul.f32 %v716, %v716
        %v829 = vrot.slane %v821, 4
        %v830 = vadd.f32 %v821, %v829
        %v831 = vrot.slane %v830, 2
        %v832 = vadd.f32 %v830, %v831
        %v833 = vrot.slane %v832, 1
        %v834 = vadd.f32 %v832, %v833
        %v835 = vrot.slane %v822, 4
        %v836 = vadd.f32 %v822, %v835
        %v837 = vrot.slane %v836, 2
        %v838 = vadd.f32 %v836, %v837
        %v839 = vrot.slane %v838, 1
        %v840 = vadd.f32 %v838, %v839
        %v841 = vrot.slane %v823, 4
        %v842 = vadd.f32 %v823, %v841
        %v843 = vrot.slane %v842, 2
        %v844 = vadd.f32 %v842, %v843
        %v845 = vrot.slane %v844, 1
        %v846 = vadd.f32 %v844, %v845
        %v847 = vrot.slane %v824, 4
        %v848 = vadd.f32 %v824, %v847
        %v849 = vrot.slane %v848, 2
        %v850 = vadd.f32 %v848, %v849
        %v851 = vrot.slane %v850, 1
        %v852 = vadd.f32 %v850, %v851
        %v853 = vrot.slane %v825, 4
        %v854 = vadd.f32 %v825, %v853
        %v855 = vrot.slane %v854, 2
        %v856 = vadd.f32 %v854, %v855
        %v857 = vrot.slane %v856, 1
        %v858 = vadd.f32 %v856, %v857
        %v859 = vrot.slane %v826, 4
        %v860 = vadd.f32 %v826, %v859
        %v861 = vrot.slane %v860, 2
        %v862 = vadd.f32 %v860, %v861
        %v863 = vrot.slane %v862, 1
        %v864 = vadd.f32 %v862, %v863
        %v865 = vrot.slane %v827, 4
        %v866 = vadd.f32 %v827, %v865
        %v867 = vrot.slane %v866, 2
        %v868 = vadd.f32 %v866, %v867
        %v869 = vrot.slane %v868, 1
        %v870 = vadd.f32 %v868, %v869
        %v871 = vrot.slane %v828, 4
        %v872 = vadd.f32 %v828, %v871
        %v873 = vrot.slane %v872, 2
        %v874 = vadd.f32 %v872, %v873
        %v875 = vrot.slane %v874, 1
        %v876 = vadd.f32 %v874, %v875
        %v877 = vmul.f32 %v717, %v717
        %v878 = vmul.f32 %v718, %v718
        %v879 = vmul.f32 %v719, %v719
        %v880 = vmul.f32 %v720, %v720
        %v881 = vmul.f32 %v721, %v721
        %v882 = vmul.f32 %v722, %v722
        %v883 = vmul.f32 %v723, %v723
        %v884 = vmul.f32 %v724, %v724
        %v885 = vrot.slane %v877, 4
        %v886 = vadd.f32 %v877, %v885
        %v887 = vrot.slane %v886, 2
        %v888 = vadd.f32 %v886, %v887
        %v889 = vrot.slane %v888, 1
        %v890 = vadd.f32 %v888, %v889
        %v891 = vrot.slane %v878, 4
        %v892 = vadd.f32 %v878, %v891
        %v893 = vrot.slane %v892, 2
        %v894 = vadd.f32 %v892, %v893
        %v895 = vrot.slane %v894, 1
        %v896 = vadd.f32 %v894, %v895
        %v897 = vrot.slane %v879, 4
        %v898 = vadd.f32 %v879, %v897
        %v899 = vrot.slane %v898, 2
        %v900 = vadd.f32 %v898, %v899
        %v901 = vrot.slane %v900, 1
        %v902 = vadd.f32 %v900, %v901
        %v903 = vrot.slane %v880, 4
        %v904 = vadd.f32 %v880, %v903
        %v905 = vrot.slane %v904, 2
        %v906 = vadd.f32 %v904, %v905
        %v907 = vrot.slane %v906, 1
        %v908 = vadd.f32 %v906, %v907
        %v909 = vrot.slane %v881, 4
        %v910 = vadd.f32 %v881, %v909
        %v911 = vrot.slane %v910, 2
        %v912 = vadd.f32 %v910, %v911
        %v913 = vrot.slane %v912, 1
        %v914 = vadd.f32 %v912, %v913
        %v915 = vrot.slane %v882, 4
        %v916 = vadd.f32 %v882, %v915
        %v917 = vrot.slane %v916, 2
        %v918 = vadd.f32 %v916, %v917
        %v919 = vrot.slane %v918, 1
        %v920 = vadd.f32 %v918, %v919
        %v921 = vrot.slane %v883, 4
        %v922 = vadd.f32 %v883, %v921
        %v923 = vrot.slane %v922, 2
        %v924 = vadd.f32 %v922, %v923
        %v925 = vrot.slane %v924, 1
        %v926 = vadd.f32 %v924, %v925
        %v927 = vrot.slane %v884, 4
        %v928 = vadd.f32 %v884, %v927
        %v929 = vrot.slane %v928, 2
        %v930 = vadd.f32 %v928, %v929
        %v931 = vrot.slane %v930, 1
        %v932 = vadd.f32 %v930, %v931
        %v933 = vsub.f32 %v730, %v778
        %v934 = vsub.f32 %v736, %v784
        %v935 = vsub.f32 %v742, %v790
        %v936 = vsub.f32 %v748, %v796
        %v937 = vsub.f32 %v754, %v802
        %v938 = vsub.f32 %v760, %v808
        %v939 = vsub.f32 %v766, %v814
        %v940 = vsub.f32 %v772, %v820
        %v941 = vmul.f32 %v933, %v419
        %v942 = vmul.f32 %v934, %v419
        %v943 = vmul.f32 %v935, %v419
        %v944 = vmul.f32 %v936, %v419
        %v945 = vmul.f32 %v937, %v421
        %v946 = vmul.f32 %v938, %v421
        %v947 = vmul.f32 %v939, %v421
        %v948 = vmul.f32 %v940, %v421
        %v949 = vmul.f32 %v411, %v834
        %v950 = vmul.f32 %v411, %v840
        %v951 = vmul.f32 %v411, %v846
        %v952 = vmul.f32 %v411, %v852
        %v953 = vmul.f32 %v415, %v858
        %v954 = vmul.f32 %v415, %v864
        %v955 = vmul.f32 %v415, %v870
        %v956 = vmul.f32 %v415, %v876
        %v957 = vmul.f32 %v730, 2.0
        %v958 = vmul.f32 %v736, 2.0
        %v959 = vmul.f32 %v742, 2.0
        %v960 = vmul.f32 %v748, 2.0
        %v961 = vmul.f32 %v754, 2.0
        %v962 = vmul.f32 %v760, 2.0
        %v963 = vmul.f32 %v766, 2.0
        %v964 = vmul.f32 %v772, 2.0
        %v965 = vmul.f32 %v957, %v778
        %v966 = vmul.f32 %v958, %v784
        %v967 = vmul.f32 %v959, %v790
        %v968 = vmul.f32 %v960, %v796
        %v969 = vmul.f32 %v961, %v802
        %v970 = vmul.f32 %v962, %v808
        %v971 = vmul.f32 %v963, %v814
        %v972 = vmul.f32 %v964, %v820
        %v973 = vsub.f32 %v949, %v965
        %v974 = vsub.f32 %v950, %v966
        %v975 = vsub.f32 %v951, %v967
        %v976 = vsub.f32 %v952, %v968
        %v977 = vsub.f32 %v953, %v969
        %v978 = vsub.f32 %v954, %v970
        %v979 = vsub.f32 %v955, %v971
        %v980 = vsub.f32 %v956, %v972
        %v981 = vmul.f32 %v411, %v890
        %v982 = vmul.f32 %v411, %v896
        %v983 = vmul.f32 %v411, %v902
        %v984 = vmul.f32 %v411, %v908
        %v985 = vmul.f32 %v415, %v914
        %v986 = vmul.f32 %v415, %v920
        %v987 = vmul.f32 %v415, %v926
        %v988 = vmul.f32 %v415, %v932
        %v989 = vadd.f32 %v973, %v981
        %v990 = vadd.f32 %v974, %v982
        %v991 = vadd.f32 %v975, %v983
        %v992 = vadd.f32 %v976, %v984
        %v993 = vadd.f32 %v977, %v985
        %v994 = vadd.f32 %v978, %v986
        %v995 = vadd.f32 %v979, %v987
        %v996 = vadd.f32 %v980, %v988
        %v997 = vmul.f32 %v989, %v422
        %v998 = vmul.f32 %v990, %v422
        %v999 = vmul.f32 %v991, %v422
        %v1000 = vmul.f32 %v992, %v422
        %v1001 = vmul.f32 %v993, %v423
        %v1002 = vmul.f32 %v994, %v423
        %v1003 = vmul.f32 %v995, %v423
        %v1004 = vmul.f32 %v996, %v423
        %v1005 = vmul.f32 %v941, %v941
        %v1006 = vmul.f32 %v942, %v942
        %v1007 = vmul.f32 %v943, %v943
        %v1008 = vmul.f32 %v944, %v944
        %v1009 = vmul.f32 %v945, %v945
        %v1010 = vmul.f32 %v946, %v946
        %v1011 = vmul.f32 %v947, %v947
        %v1012 = vmul.f32 %v948, %v948
        %v1013 = vsub.f32 %v997, %v1005
        %v1014 = vsub.f32 %v998, %v1006
        %v1015 = vsub.f32 %v999, %v1007
        %v1016 = vsub.f32 %v1000, %v1008
        %v1017 = vsub.f32 %v1001, %v1009
        %v1018 = vsub.f32 %v1002, %v1010
        %v1019 = vsub.f32 %v1003, %v1011
        %v1020 = vsub.f32 %v1004, %v1012
        %v1021 = vmax.f32 %v1013, 0.0
        %v1022 = vmax.f32 %v1014, 0.0
        %v1023 = vmax.f32 %v1015, 0.0
        %v1024 = vmax.f32 %v1016, 0.0
        %v1025 = vmax.f32 %v1017, 0.0
        %v1026 = vmax.f32 %v1018, 0.0
        %v1027 = vmax.f32 %v1019, 0.0
        %v1028 = vmax.f32 %v1020, 0.0
        %v1029 = vld [vmem:[%s5] sm:$0xf]
        %v1030 = vadd.f32 %v1021, 1e-05
        %v1031 = vadd.f32 %v1022, 1e-05
        %v1032 = vadd.f32 %v1023, 1e-05
        %v1033 = vadd.f32 %v1024, 1e-05
        %v1034 = vadd.f32 %v1025, 1e-05
        %v1035 = vadd.f32 %v1026, 1e-05
        %v1036 = vadd.f32 %v1027, 1e-05
        %v1037 = vadd.f32 %v1028, 1e-05
        %v1038 = vrsqrt.pop %v1030
        %v1039 = vrsqrt.pop %v1031
        %v1040 = vrsqrt.pop %v1032
        %v1041 = vrsqrt.pop %v1033
        %v1042 = vrsqrt.pop %v1034
        %v1043 = vrsqrt.pop %v1035
        %v1044 = vrsqrt.pop %v1036
        %v1045 = vrsqrt.pop %v1037
        %v1054 = vcombine.low %v1038, %v1039
        %v1055 = vcombine.low %v1040, %v1041
        %v1057 = vunpack.c.l.s4 1966171168
        %v1058 = vunpack.c.0.s8 %v1057
        %v1059 = vlaneseq
        %v1060 = vshrl.u32 %v1059, 7
        %v1061 = vsub.s32 %v1058, %v1060
        %v1062 = vrot.slane %v1054, %v1061
        %v1064 = vunpack.c.l.s4 1966171168
        %v1065 = vunpack.c.0.s8 %v1064
        %v1066 = vlaneseq
        %v1067 = vshrl.u32 %v1066, 7
        %v1068 = vsub.s32 %v1065, %v1067
        %v1069 = vrot.slane %v1055, %v1068
        %v1070 = vcombine.low %v1062, %v1069
        %v1072 = vunpack.c.l.s4 1966171168
        %v1073 = vunpack.c.0.s8 %v1072
        %v1074 = vlaneseq
        %v1075 = vshrl.u32 %v1074, 7
        %v1076 = vsub.s32 %v1073, %v1075
        %v1077 = vrot.slane %v1070, %v1076
        %v1078 = vcombine.low %v1042, %v1043
        %v1079 = vcombine.low %v1044, %v1045
        %v1081 = vunpack.c.l.s4 1966171168
        %v1082 = vunpack.c.0.s8 %v1081
        %v1083 = vlaneseq
        %v1084 = vshrl.u32 %v1083, 7
        %v1085 = vsub.s32 %v1082, %v1084
        %v1086 = vrot.slane %v1078, %v1085
        %v1088 = vunpack.c.l.s4 1966171168
        %v1089 = vunpack.c.0.s8 %v1088
        %v1090 = vlaneseq
        %v1091 = vshrl.u32 %v1090, 7
        %v1092 = vsub.s32 %v1089, %v1091
        %v1093 = vrot.slane %v1079, %v1092
        %v1094 = vcombine.low %v1086, %v1093
        %v1096 = vunpack.c.l.s4 1966171168
        %v1097 = vunpack.c.0.s8 %v1096
        %v1098 = vlaneseq
        %v1099 = vshrl.u32 %v1098, 7
        %v1100 = vsub.s32 %v1097, %v1099
        %v1101 = vrot.slane %v1094, %v1100
        %v1104 = vmul.f32 %v1029, %v1077
        %v1105 = vmul.f32 %v1029, %v1101
        %v1106 = vld [vmem:[%s6] sm:$0xf]
        %v1109 = vlaneseq
        %v1110 = vshrl.u32 %v1109, 7
        %v1111 = vsub.s32 0, %v1110
        %v1112 = vrot.slane %v1104, %v1111
        %v1113 = vlaneseq
        %v1114 = vshrl.u32 %v1113, 7
        %v1115 = vsub.s32 1, %v1114
        %v1116 = vrot.slane %v1104, %v1115
        %v1117 = vlaneseq
        %v1118 = vshrl.u32 %v1117, 7
        %v1119 = vsub.s32 2, %v1118
        %v1120 = vrot.slane %v1104, %v1119
        %v1121 = vlaneseq
        %v1122 = vshrl.u32 %v1121, 7
        %v1123 = vsub.s32 3, %v1122
        %v1124 = vrot.slane %v1104, %v1123
        %v1125 = vlaneseq
        %v1126 = vshrl.u32 %v1125, 7
        %v1127 = vsub.s32 0, %v1126
        %v1128 = vrot.slane %v1105, %v1127
        %v1129 = vlaneseq
        %v1130 = vshrl.u32 %v1129, 7
        %v1131 = vsub.s32 1, %v1130
        %v1132 = vrot.slane %v1105, %v1131
        %v1133 = vlaneseq
        %v1134 = vshrl.u32 %v1133, 7
        %v1135 = vsub.s32 2, %v1134
        %v1136 = vrot.slane %v1105, %v1135
        %v1137 = vlaneseq
        %v1138 = vshrl.u32 %v1137, 7
        %v1139 = vsub.s32 3, %v1138
        %v1140 = vrot.slane %v1105, %v1139
        %v1149 = vmul.f32 %v941, %v1112
        %v1150 = vmul.f32 %v942, %v1116
        %v1151 = vmul.f32 %v943, %v1120
        %v1152 = vmul.f32 %v944, %v1124
        %v1153 = vmul.f32 %v945, %v1128
        %v1154 = vmul.f32 %v946, %v1132
        %v1155 = vmul.f32 %v947, %v1136
        %v1156 = vmul.f32 %v948, %v1140
        %v1165 = vcombine.low %v1149, %v1150
        %v1166 = vcombine.low %v1151, %v1152
        %v1168 = vunpack.c.l.s4 1966171168
        %v1169 = vunpack.c.0.s8 %v1168
        %v1170 = vlaneseq
        %v1171 = vshrl.u32 %v1170, 7
        %v1172 = vsub.s32 %v1169, %v1171
        %v1173 = vrot.slane %v1165, %v1172
        %v1175 = vunpack.c.l.s4 1966171168
        %v1176 = vunpack.c.0.s8 %v1175
        %v1177 = vlaneseq
        %v1178 = vshrl.u32 %v1177, 7
        %v1179 = vsub.s32 %v1176, %v1178
        %v1180 = vrot.slane %v1166, %v1179
        %v1181 = vcombine.low %v1173, %v1180
        %v1183 = vunpack.c.l.s4 1966171168
        %v1184 = vunpack.c.0.s8 %v1183
        %v1185 = vlaneseq
        %v1186 = vshrl.u32 %v1185, 7
        %v1187 = vsub.s32 %v1184, %v1186
        %v1188 = vrot.slane %v1181, %v1187
        %v1189 = vcombine.low %v1153, %v1154
        %v1190 = vcombine.low %v1155, %v1156
        %v1192 = vunpack.c.l.s4 1966171168
        %v1193 = vunpack.c.0.s8 %v1192
        %v1194 = vlaneseq
        %v1195 = vshrl.u32 %v1194, 7
        %v1196 = vsub.s32 %v1193, %v1195
        %v1197 = vrot.slane %v1189, %v1196
        %v1199 = vunpack.c.l.s4 1966171168
        %v1200 = vunpack.c.0.s8 %v1199
        %v1201 = vlaneseq
        %v1202 = vshrl.u32 %v1201, 7
        %v1203 = vsub.s32 %v1200, %v1202
        %v1204 = vrot.slane %v1190, %v1203
        %v1205 = vcombine.low %v1197, %v1204
        %v1207 = vunpack.c.l.s4 1966171168
        %v1208 = vunpack.c.0.s8 %v1207
        %v1209 = vlaneseq
        %v1210 = vshrl.u32 %v1209, 7
        %v1211 = vsub.s32 %v1208, %v1210
        %v1212 = vrot.slane %v1205, %v1211
        %v1215 = vsub.f32 %v1106, %v1188
        %v1216 = vsub.f32 %v1106, %v1212
        %v1217 = vmul.f32 %v687, %v1112
        %v1218 = vmul.f32 %v688, %v1116
        %v1219 = vmul.f32 %v689, %v1120
        %v1220 = vmul.f32 %v690, %v1124
        %v1221 = vmul.f32 %v691, %v1128
        %v1222 = vmul.f32 %v692, %v1132
        %v1223 = vmul.f32 %v693, %v1136
        %v1224 = vmul.f32 %v694, %v1140
        %v1227 = vlaneseq
        %v1228 = vshrl.u32 %v1227, 7
        %v1229 = vsub.s32 0, %v1228
        %v1230 = vrot.slane %v1215, %v1229
        %v1231 = vlaneseq
        %v1232 = vshrl.u32 %v1231, 7
        %v1233 = vsub.s32 1, %v1232
        %v1234 = vrot.slane %v1215, %v1233
        %v1235 = vlaneseq
        %v1236 = vshrl.u32 %v1235, 7
        %v1237 = vsub.s32 2, %v1236
        %v1238 = vrot.slane %v1215, %v1237
        %v1239 = vlaneseq
        %v1240 = vshrl.u32 %v1239, 7
        %v1241 = vsub.s32 3, %v1240
        %v1242 = vrot.slane %v1215, %v1241
        %v1243 = vlaneseq
        %v1244 = vshrl.u32 %v1243, 7
        %v1245 = vsub.s32 0, %v1244
        %v1246 = vrot.slane %v1216, %v1245
        %v1247 = vlaneseq
        %v1248 = vshrl.u32 %v1247, 7
        %v1249 = vsub.s32 1, %v1248
        %v1250 = vrot.slane %v1216, %v1249
        %v1251 = vlaneseq
        %v1252 = vshrl.u32 %v1251, 7
        %v1253 = vsub.s32 2, %v1252
        %v1254 = vrot.slane %v1216, %v1253
        %v1255 = vlaneseq
        %v1256 = vshrl.u32 %v1255, 7
        %v1257 = vsub.s32 3, %v1256
        %v1258 = vrot.slane %v1216, %v1257
        %v1267 = vadd.f32 %v1217, %v1230
        %v1268 = vadd.f32 %v1218, %v1234
        %v1269 = vadd.f32 %v1219, %v1238
        %v1270 = vadd.f32 %v1220, %v1242
        %v1271 = vadd.f32 %v1221, %v1246
        %v1272 = vadd.f32 %v1222, %v1250
        %v1273 = vadd.f32 %v1223, %v1254
        %v1274 = vadd.f32 %v1224, %v1258
        %v1275 = vmul.f32 %v534, %v1112
        %v1276 = vmul.f32 %v535, %v1116
        %v1277 = vmul.f32 %v536, %v1120
        %v1278 = vmul.f32 %v537, %v1124
        %v1279 = vmul.f32 %v538, %v1128
        %v1280 = vmul.f32 %v539, %v1132
        %v1281 = vmul.f32 %v540, %v1136
        %v1282 = vmul.f32 %v541, %v1140
        %v1291 = vcombine.low %v1275, %v1276
        %v1292 = vcombine.high %v1275, %v1276
        %v1293 = vcombine.low %v1277, %v1278
        %v1294 = vcombine.high %v1277, %v1278
        %v1296 = vunpack.c.l.s4 1966171168
        %v1297 = vunpack.c.0.s8 %v1296
        %v1298 = vlaneseq
        %v1299 = vshrl.u32 %v1298, 7
        %v1300 = vsub.s32 %v1297, %v1299
        %v1301 = vrot.slane %v1291, %v1300
        %v1303 = vunpack.c.l.s4 1966171168
        %v1304 = vunpack.c.0.s8 %v1303
        %v1305 = vlaneseq
        %v1306 = vshrl.u32 %v1305, 7
        %v1307 = vsub.s32 %v1304, %v1306
        %v1308 = vrot.slane %v1292, %v1307
        %v1310 = vunpack.c.l.s4 1966171168
        %v1311 = vunpack.c.0.s8 %v1310
        %v1312 = vlaneseq
        %v1313 = vshrl.u32 %v1312, 7
        %v1314 = vsub.s32 %v1311, %v1313
        %v1315 = vrot.slane %v1293, %v1314
        %v1317 = vunpack.c.l.s4 1966171168
        %v1318 = vunpack.c.0.s8 %v1317
        %v1319 = vlaneseq
        %v1320 = vshrl.u32 %v1319, 7
        %v1321 = vsub.s32 %v1318, %v1320
        %v1322 = vrot.slane %v1294, %v1321
        %v1323 = vcombine.low %v1301, %v1315
        %v1324 = vcombine.high %v1301, %v1315
        %v1325 = vcombine.low %v1308, %v1322
        %v1326 = vcombine.high %v1308, %v1322
        %v1328 = vunpack.c.l.s4 1966171168
        %v1329 = vunpack.c.0.s8 %v1328
        %v1330 = vlaneseq
        %v1331 = vshrl.u32 %v1330, 7
        %v1332 = vsub.s32 %v1329, %v1331
        %v1333 = vrot.slane %v1323, %v1332
        %v1335 = vunpack.c.l.s4 1966171168
        %v1336 = vunpack.c.0.s8 %v1335
        %v1337 = vlaneseq
        %v1338 = vshrl.u32 %v1337, 7
        %v1339 = vsub.s32 %v1336, %v1338
        %v1340 = vrot.slane %v1325, %v1339
        %v1342 = vunpack.c.l.s4 1966171168
        %v1343 = vunpack.c.0.s8 %v1342
        %v1344 = vlaneseq
        %v1345 = vshrl.u32 %v1344, 7
        %v1346 = vsub.s32 %v1343, %v1345
        %v1347 = vrot.slane %v1324, %v1346
        %v1349 = vunpack.c.l.s4 1966171168
        %v1350 = vunpack.c.0.s8 %v1349
        %v1351 = vlaneseq
        %v1352 = vshrl.u32 %v1351, 7
        %v1353 = vsub.s32 %v1350, %v1352
        %v1354 = vrot.slane %v1326, %v1353
        %v1355 = vcombine.high %v1333, %v1333
        %v1356 = vcombine.high %v1340, %v1340
        %v1357 = vcombine.high %v1347, %v1347
        %v1358 = vcombine.high %v1354, %v1354
        %v1359 = vcombine.low %v1279, %v1280
        %v1360 = vcombine.high %v1279, %v1280
        %v1361 = vcombine.low %v1281, %v1282
        %v1362 = vcombine.high %v1281, %v1282
        %v1364 = vunpack.c.l.s4 1966171168
        %v1365 = vunpack.c.0.s8 %v1364
        %v1366 = vlaneseq
        %v1367 = vshrl.u32 %v1366, 7
        %v1368 = vsub.s32 %v1365, %v1367
        %v1369 = vrot.slane %v1359, %v1368
        %v1371 = vunpack.c.l.s4 1966171168
        %v1372 = vunpack.c.0.s8 %v1371
        %v1373 = vlaneseq
        %v1374 = vshrl.u32 %v1373, 7
        %v1375 = vsub.s32 %v1372, %v1374
        %v1376 = vrot.slane %v1360, %v1375
        %v1378 = vunpack.c.l.s4 1966171168
        %v1379 = vunpack.c.0.s8 %v1378
        %v1380 = vlaneseq
        %v1381 = vshrl.u32 %v1380, 7
        %v1382 = vsub.s32 %v1379, %v1381
        %v1383 = vrot.slane %v1361, %v1382
        %v1385 = vunpack.c.l.s4 1966171168
        %v1386 = vunpack.c.0.s8 %v1385
        %v1387 = vlaneseq
        %v1388 = vshrl.u32 %v1387, 7
        %v1389 = vsub.s32 %v1386, %v1388
        %v1390 = vrot.slane %v1362, %v1389
        %v1391 = vcombine.low %v1369, %v1383
        %v1392 = vcombine.high %v1369, %v1383
        %v1393 = vcombine.low %v1376, %v1390
        %v1394 = vcombine.high %v1376, %v1390
        %v1396 = vunpack.c.l.s4 1966171168
        %v1397 = vunpack.c.0.s8 %v1396
        %v1398 = vlaneseq
        %v1399 = vshrl.u32 %v1398, 7
        %v1400 = vsub.s32 %v1397, %v1399
        %v1401 = vrot.slane %v1391, %v1400
        %v1403 = vunpack.c.l.s4 1966171168
        %v1404 = vunpack.c.0.s8 %v1403
        %v1405 = vlaneseq
        %v1406 = vshrl.u32 %v1405, 7
        %v1407 = vsub.s32 %v1404, %v1406
        %v1408 = vrot.slane %v1393, %v1407
        %v1410 = vunpack.c.l.s4 1966171168
        %v1411 = vunpack.c.0.s8 %v1410
        %v1412 = vlaneseq
        %v1413 = vshrl.u32 %v1412, 7
        %v1414 = vsub.s32 %v1411, %v1413
        %v1415 = vrot.slane %v1392, %v1414
        %v1417 = vunpack.c.l.s4 1966171168
        %v1418 = vunpack.c.0.s8 %v1417
        %v1419 = vlaneseq
        %v1420 = vshrl.u32 %v1419, 7
        %v1421 = vsub.s32 %v1418, %v1420
        %v1422 = vrot.slane %v1394, %v1421
        %v1423 = vcombine.high %v1401, %v1401
        %v1424 = vcombine.high %v1408, %v1408
        %v1425 = vcombine.high %v1415, %v1415
        %v1426 = vcombine.high %v1422, %v1422
        %v1427 = vlaneseq
        %v1428 = vshrl.u32 %v1427, 7
        %v1429 = vsub.s32 0, %v1428
        %v1430 = vrot.slane %v1333, %v1429
        %v1431 = vlaneseq
        %v1432 = vshrl.u32 %v1431, 7
        %v1433 = vsub.s32 1, %v1432
        %v1434 = vrot.slane %v1333, %v1433
        %v1435 = vlaneseq
        %v1436 = vshrl.u32 %v1435, 7
        %v1437 = vsub.s32 2, %v1436
        %v1438 = vrot.slane %v1333, %v1437
        %v1439 = vlaneseq
        %v1440 = vshrl.u32 %v1439, 7
        %v1441 = vsub.s32 3, %v1440
        %v1442 = vrot.slane %v1333, %v1441
        %v1443 = vlaneseq
        %v1444 = vshrl.u32 %v1443, 7
        %v1445 = vsub.s32 0, %v1444
        %v1446 = vrot.slane %v1347, %v1445
        %v1447 = vlaneseq
        %v1448 = vshrl.u32 %v1447, 7
        %v1449 = vsub.s32 1, %v1448
        %v1450 = vrot.slane %v1347, %v1449
        %v1451 = vlaneseq
        %v1452 = vshrl.u32 %v1451, 7
        %v1453 = vsub.s32 2, %v1452
        %v1454 = vrot.slane %v1347, %v1453
        %v1455 = vlaneseq
        %v1456 = vshrl.u32 %v1455, 7
        %v1457 = vsub.s32 3, %v1456
        %v1458 = vrot.slane %v1347, %v1457
        %v1459 = vlaneseq
        %v1460 = vshrl.u32 %v1459, 7
        %v1461 = vsub.s32 0, %v1460
        %v1462 = vrot.slane %v1355, %v1461
        %v1463 = vlaneseq
        %v1464 = vshrl.u32 %v1463, 7
        %v1465 = vsub.s32 1, %v1464
        %v1466 = vrot.slane %v1355, %v1465
        %v1467 = vlaneseq
        %v1468 = vshrl.u32 %v1467, 7
        %v1469 = vsub.s32 2, %v1468
        %v1470 = vrot.slane %v1355, %v1469
        %v1471 = vlaneseq
        %v1472 = vshrl.u32 %v1471, 7
        %v1473 = vsub.s32 3, %v1472
        %v1474 = vrot.slane %v1355, %v1473
        %v1475 = vlaneseq
        %v1476 = vshrl.u32 %v1475, 7
        %v1477 = vsub.s32 0, %v1476
        %v1478 = vrot.slane %v1357, %v1477
        %v1479 = vlaneseq
        %v1480 = vshrl.u32 %v1479, 7
        %v1481 = vsub.s32 1, %v1480
        %v1482 = vrot.slane %v1357, %v1481
        %v1483 = vlaneseq
        %v1484 = vshrl.u32 %v1483, 7
        %v1485 = vsub.s32 2, %v1484
        %v1486 = vrot.slane %v1357, %v1485
        %v1487 = vlaneseq
        %v1488 = vshrl.u32 %v1487, 7
        %v1489 = vsub.s32 3, %v1488
        %v1490 = vrot.slane %v1357, %v1489
        %v1491 = vlaneseq
        %v1492 = vshrl.u32 %v1491, 7
        %v1493 = vsub.s32 0, %v1492
        %v1494 = vrot.slane %v1340, %v1493
        %v1495 = vlaneseq
        %v1496 = vshrl.u32 %v1495, 7
        %v1497 = vsub.s32 1, %v1496
        %v1498 = vrot.slane %v1340, %v1497
        %v1499 = vlaneseq
        %v1500 = vshrl.u32 %v1499, 7
        %v1501 = vsub.s32 2, %v1500
        %v1502 = vrot.slane %v1340, %v1501
        %v1503 = vlaneseq
        %v1504 = vshrl.u32 %v1503, 7
        %v1505 = vsub.s32 3, %v1504
        %v1506 = vrot.slane %v1340, %v1505
        %v1507 = vlaneseq
        %v1508 = vshrl.u32 %v1507, 7
        %v1509 = vsub.s32 0, %v1508
        %v1510 = vrot.slane %v1354, %v1509
        %v1511 = vlaneseq
        %v1512 = vshrl.u32 %v1511, 7
        %v1513 = vsub.s32 1, %v1512
        %v1514 = vrot.slane %v1354, %v1513
        %v1515 = vlaneseq
        %v1516 = vshrl.u32 %v1515, 7
        %v1517 = vsub.s32 2, %v1516
        %v1518 = vrot.slane %v1354, %v1517
        %v1519 = vlaneseq
        %v1520 = vshrl.u32 %v1519, 7
        %v1521 = vsub.s32 3, %v1520
        %v1522 = vrot.slane %v1354, %v1521
        %v1523 = vlaneseq
        %v1524 = vshrl.u32 %v1523, 7
        %v1525 = vsub.s32 0, %v1524
        %v1526 = vrot.slane %v1356, %v1525
        %v1527 = vlaneseq
        %v1528 = vshrl.u32 %v1527, 7
        %v1529 = vsub.s32 1, %v1528
        %v1530 = vrot.slane %v1356, %v1529
        %v1531 = vlaneseq
        %v1532 = vshrl.u32 %v1531, 7
        %v1533 = vsub.s32 2, %v1532
        %v1534 = vrot.slane %v1356, %v1533
        %v1535 = vlaneseq
        %v1536 = vshrl.u32 %v1535, 7
        %v1537 = vsub.s32 3, %v1536
        %v1538 = vrot.slane %v1356, %v1537
        %v1539 = vlaneseq
        %v1540 = vshrl.u32 %v1539, 7
        %v1541 = vsub.s32 0, %v1540
        %v1542 = vrot.slane %v1358, %v1541
        %v1543 = vlaneseq
        %v1544 = vshrl.u32 %v1543, 7
        %v1545 = vsub.s32 1, %v1544
        %v1546 = vrot.slane %v1358, %v1545
        %v1547 = vlaneseq
        %v1548 = vshrl.u32 %v1547, 7
        %v1549 = vsub.s32 2, %v1548
        %v1550 = vrot.slane %v1358, %v1549
        %v1551 = vlaneseq
        %v1552 = vshrl.u32 %v1551, 7
        %v1553 = vsub.s32 3, %v1552
        %v1554 = vrot.slane %v1358, %v1553
        %v1555 = vlaneseq
        %v1556 = vshrl.u32 %v1555, 7
        %v1557 = vsub.s32 0, %v1556
        %v1558 = vrot.slane %v1401, %v1557
        %v1559 = vlaneseq
        %v1560 = vshrl.u32 %v1559, 7
        %v1561 = vsub.s32 1, %v1560
        %v1562 = vrot.slane %v1401, %v1561
        %v1563 = vlaneseq
        %v1564 = vshrl.u32 %v1563, 7
        %v1565 = vsub.s32 2, %v1564
        %v1566 = vrot.slane %v1401, %v1565
        %v1567 = vlaneseq
        %v1568 = vshrl.u32 %v1567, 7
        %v1569 = vsub.s32 3, %v1568
        %v1570 = vrot.slane %v1401, %v1569
        %v1571 = vlaneseq
        %v1572 = vshrl.u32 %v1571, 7
        %v1573 = vsub.s32 0, %v1572
        %v1574 = vrot.slane %v1415, %v1573
        %v1575 = vlaneseq
        %v1576 = vshrl.u32 %v1575, 7
        %v1577 = vsub.s32 1, %v1576
        %v1578 = vrot.slane %v1415, %v1577
        %v1579 = vlaneseq
        %v1580 = vshrl.u32 %v1579, 7
        %v1581 = vsub.s32 2, %v1580
        %v1582 = vrot.slane %v1415, %v1581
        %v1583 = vlaneseq
        %v1584 = vshrl.u32 %v1583, 7
        %v1585 = vsub.s32 3, %v1584
        %v1586 = vrot.slane %v1415, %v1585
        %v1587 = vlaneseq
        %v1588 = vshrl.u32 %v1587, 7
        %v1589 = vsub.s32 0, %v1588
        %v1590 = vrot.slane %v1423, %v1589
        %v1591 = vlaneseq
        %v1592 = vshrl.u32 %v1591, 7
        %v1593 = vsub.s32 1, %v1592
        %v1594 = vrot.slane %v1423, %v1593
        %v1595 = vlaneseq
        %v1596 = vshrl.u32 %v1595, 7
        %v1597 = vsub.s32 2, %v1596
        %v1598 = vrot.slane %v1423, %v1597
        %v1599 = vlaneseq
        %v1600 = vshrl.u32 %v1599, 7
        %v1601 = vsub.s32 3, %v1600
        %v1602 = vrot.slane %v1423, %v1601
        %v1603 = vlaneseq
        %v1604 = vshrl.u32 %v1603, 7
        %v1605 = vsub.s32 0, %v1604
        %v1606 = vrot.slane %v1425, %v1605
        %v1607 = vlaneseq
        %v1608 = vshrl.u32 %v1607, 7
        %v1609 = vsub.s32 1, %v1608
        %v1610 = vrot.slane %v1425, %v1609
        %v1611 = vlaneseq
        %v1612 = vshrl.u32 %v1611, 7
        %v1613 = vsub.s32 2, %v1612
        %v1614 = vrot.slane %v1425, %v1613
        %v1615 = vlaneseq
        %v1616 = vshrl.u32 %v1615, 7
        %v1617 = vsub.s32 3, %v1616
        %v1618 = vrot.slane %v1425, %v1617
        %v1619 = vlaneseq
        %v1620 = vshrl.u32 %v1619, 7
        %v1621 = vsub.s32 0, %v1620
        %v1622 = vrot.slane %v1408, %v1621
        %v1623 = vlaneseq
        %v1624 = vshrl.u32 %v1623, 7
        %v1625 = vsub.s32 1, %v1624
        %v1626 = vrot.slane %v1408, %v1625
        %v1627 = vlaneseq
        %v1628 = vshrl.u32 %v1627, 7
        %v1629 = vsub.s32 2, %v1628
        %v1630 = vrot.slane %v1408, %v1629
        %v1631 = vlaneseq
        %v1632 = vshrl.u32 %v1631, 7
        %v1633 = vsub.s32 3, %v1632
        %v1634 = vrot.slane %v1408, %v1633
        %v1635 = vlaneseq
        %v1636 = vshrl.u32 %v1635, 7
        %v1637 = vsub.s32 0, %v1636
        %v1638 = vrot.slane %v1422, %v1637
        %v1639 = vlaneseq
        %v1640 = vshrl.u32 %v1639, 7
        %v1641 = vsub.s32 1, %v1640
        %v1642 = vrot.slane %v1422, %v1641
        %v1643 = vlaneseq
        %v1644 = vshrl.u32 %v1643, 7
        %v1645 = vsub.s32 2, %v1644
        %v1646 = vrot.slane %v1422, %v1645
        %v1647 = vlaneseq
        %v1648 = vshrl.u32 %v1647, 7
        %v1649 = vsub.s32 3, %v1648
        %v1650 = vrot.slane %v1422, %v1649
        %v1651 = vlaneseq
        %v1652 = vshrl.u32 %v1651, 7
        %v1653 = vsub.s32 0, %v1652
        %v1654 = vrot.slane %v1424, %v1653
        %v1655 = vlaneseq
        %v1656 = vshrl.u32 %v1655, 7
        %v1657 = vsub.s32 1, %v1656
        %v1658 = vrot.slane %v1424, %v1657
        %v1659 = vlaneseq
        %v1660 = vshrl.u32 %v1659, 7
        %v1661 = vsub.s32 2, %v1660
        %v1662 = vrot.slane %v1424, %v1661
        %v1663 = vlaneseq
        %v1664 = vshrl.u32 %v1663, 7
        %v1665 = vsub.s32 3, %v1664
        %v1666 = vrot.slane %v1424, %v1665
        %v1667 = vlaneseq
        %v1668 = vshrl.u32 %v1667, 7
        %v1669 = vsub.s32 0, %v1668
        %v1670 = vrot.slane %v1426, %v1669
        %v1671 = vlaneseq
        %v1672 = vshrl.u32 %v1671, 7
        %v1673 = vsub.s32 1, %v1672
        %v1674 = vrot.slane %v1426, %v1673
        %v1675 = vlaneseq
        %v1676 = vshrl.u32 %v1675, 7
        %v1677 = vsub.s32 2, %v1676
        %v1678 = vrot.slane %v1426, %v1677
        %v1679 = vlaneseq
        %v1680 = vshrl.u32 %v1679, 7
        %v1681 = vsub.s32 3, %v1680
        %v1682 = vrot.slane %v1426, %v1681
        %v1747 = vsub.f32 %v1267, %v1430
        %v1748 = vsub.f32 %v1268, %v1434
        %v1749 = vsub.f32 %v1269, %v1438
        %v1750 = vsub.f32 %v1270, %v1442
        %v1751 = vsub.f32 %v1267, %v1446
        %v1752 = vsub.f32 %v1268, %v1450
        %v1753 = vsub.f32 %v1269, %v1454
        %v1754 = vsub.f32 %v1270, %v1458
        %v1755 = vsub.f32 %v1267, %v1462
        %v1756 = vsub.f32 %v1268, %v1466
        %v1757 = vsub.f32 %v1269, %v1470
        %v1758 = vsub.f32 %v1270, %v1474
        %v1759 = vsub.f32 %v1267, %v1478
        %v1760 = vsub.f32 %v1268, %v1482
        %v1761 = vsub.f32 %v1269, %v1486
        %v1762 = vsub.f32 %v1270, %v1490
        %v1763 = vsub.f32 %v1267, %v1494
        %v1764 = vsub.f32 %v1268, %v1498
        %v1765 = vsub.f32 %v1269, %v1502
        %v1766 = vsub.f32 %v1270, %v1506
        %v1767 = vsub.f32 %v1267, %v1510
        %v1768 = vsub.f32 %v1268, %v1514
        %v1769 = vsub.f32 %v1269, %v1518
        %v1770 = vsub.f32 %v1270, %v1522
        %v1771 = vsub.f32 %v1267, %v1526
        %v1772 = vsub.f32 %v1268, %v1530
        %v1773 = vsub.f32 %v1269, %v1534
        %v1774 = vsub.f32 %v1270, %v1538
        %v1775 = vsub.f32 %v1267, %v1542
        %v1776 = vsub.f32 %v1268, %v1546
        %v1777 = vsub.f32 %v1269, %v1550
        %v1778 = vsub.f32 %v1270, %v1554
        %v1779 = vsub.f32 %v1271, %v1558
        %v1780 = vsub.f32 %v1272, %v1562
        %v1781 = vsub.f32 %v1273, %v1566
        %v1782 = vsub.f32 %v1274, %v1570
        %v1783 = vsub.f32 %v1271, %v1574
        %v1784 = vsub.f32 %v1272, %v1578
        %v1785 = vsub.f32 %v1273, %v1582
        %v1786 = vsub.f32 %v1274, %v1586
        %v1787 = vsub.f32 %v1271, %v1590
        %v1788 = vsub.f32 %v1272, %v1594
        %v1789 = vsub.f32 %v1273, %v1598
        %v1790 = vsub.f32 %v1274, %v1602
        %v1791 = vsub.f32 %v1271, %v1606
        %v1792 = vsub.f32 %v1272, %v1610
        %v1793 = vsub.f32 %v1273, %v1614
        %v1794 = vsub.f32 %v1274, %v1618
        %v1795 = vsub.f32 %v1271, %v1622
        %v1796 = vsub.f32 %v1272, %v1626
        %v1797 = vsub.f32 %v1273, %v1630
        %v1798 = vsub.f32 %v1274, %v1634
        %v1799 = vsub.f32 %v1271, %v1638
        %v1800 = vsub.f32 %v1272, %v1642
        %v1801 = vsub.f32 %v1273, %v1646
        %v1802 = vsub.f32 %v1274, %v1650
        %v1803 = vsub.f32 %v1271, %v1654
        %v1804 = vsub.f32 %v1272, %v1658
        %v1805 = vsub.f32 %v1273, %v1662
        %v1806 = vsub.f32 %v1274, %v1666
        %v1807 = vsub.f32 %v1271, %v1670
        %v1808 = vsub.f32 %v1272, %v1674
        %v1809 = vsub.f32 %v1273, %v1678
        %v1810 = vsub.f32 %v1274, %v1682
        %v1811 = vmax.f32 %v1747, 0.0
        %v1812 = vmax.f32 %v1748, 0.0
        %v1813 = vmax.f32 %v1749, 0.0
        %v1814 = vmax.f32 %v1750, 0.0
        %v1815 = vmax.f32 %v1751, 0.0
        %v1816 = vmax.f32 %v1752, 0.0
        %v1817 = vmax.f32 %v1753, 0.0
        %v1818 = vmax.f32 %v1754, 0.0
        %v1819 = vmax.f32 %v1755, 0.0
        %v1820 = vmax.f32 %v1756, 0.0
        %v1821 = vmax.f32 %v1757, 0.0
        %v1822 = vmax.f32 %v1758, 0.0
        %v1823 = vmax.f32 %v1759, 0.0
        %v1824 = vmax.f32 %v1760, 0.0
        %v1825 = vmax.f32 %v1761, 0.0
        %v1826 = vmax.f32 %v1762, 0.0
        %v1827 = vmax.f32 %v1763, 0.0
        %v1828 = vmax.f32 %v1764, 0.0
        %v1829 = vmax.f32 %v1765, 0.0
        %v1830 = vmax.f32 %v1766, 0.0
        %v1831 = vmax.f32 %v1767, 0.0
        %v1832 = vmax.f32 %v1768, 0.0
        %v1833 = vmax.f32 %v1769, 0.0
        %v1834 = vmax.f32 %v1770, 0.0
        %v1835 = vmax.f32 %v1771, 0.0
        %v1836 = vmax.f32 %v1772, 0.0
        %v1837 = vmax.f32 %v1773, 0.0
        %v1838 = vmax.f32 %v1774, 0.0
        %v1839 = vmax.f32 %v1775, 0.0
        %v1840 = vmax.f32 %v1776, 0.0
        %v1841 = vmax.f32 %v1777, 0.0
        %v1842 = vmax.f32 %v1778, 0.0
        %v1843 = vmax.f32 %v1779, 0.0
        %v1844 = vmax.f32 %v1780, 0.0
        %v1845 = vmax.f32 %v1781, 0.0
        %v1846 = vmax.f32 %v1782, 0.0
        %v1847 = vmax.f32 %v1783, 0.0
        %v1848 = vmax.f32 %v1784, 0.0
        %v1849 = vmax.f32 %v1785, 0.0
        %v1850 = vmax.f32 %v1786, 0.0
        %v1851 = vmax.f32 %v1787, 0.0
        %v1852 = vmax.f32 %v1788, 0.0
        %v1853 = vmax.f32 %v1789, 0.0
        %v1854 = vmax.f32 %v1790, 0.0
        %v1855 = vmax.f32 %v1791, 0.0
        %v1856 = vmax.f32 %v1792, 0.0
        %v1857 = vmax.f32 %v1793, 0.0
        %v1858 = vmax.f32 %v1794, 0.0
        %v1859 = vmax.f32 %v1795, 0.0
        %v1860 = vmax.f32 %v1796, 0.0
        %v1861 = vmax.f32 %v1797, 0.0
        %v1862 = vmax.f32 %v1798, 0.0
        %v1863 = vmax.f32 %v1799, 0.0
        %v1864 = vmax.f32 %v1800, 0.0
        %v1865 = vmax.f32 %v1801, 0.0
        %v1866 = vmax.f32 %v1802, 0.0
        %v1867 = vmax.f32 %v1803, 0.0
        %v1868 = vmax.f32 %v1804, 0.0
        %v1869 = vmax.f32 %v1805, 0.0
        %v1870 = vmax.f32 %v1806, 0.0
        %v1871 = vmax.f32 %v1807, 0.0
        %v1872 = vmax.f32 %v1808, 0.0
        %v1873 = vmax.f32 %v1809, 0.0
        %v1874 = vmax.f32 %v1810, 0.0
        %v1875 = vpack.c.bf16 %v1811, %v1811
        %v1876 = vpack.c.bf16 %v1812, %v1812
        %v1877 = vpack.c.bf16 %v1813, %v1813
        %v1878 = vpack.c.bf16 %v1814, %v1814
        %v1879 = vpack.c.bf16 %v1815, %v1815
        %v1880 = vpack.c.bf16 %v1816, %v1816
        %v1881 = vpack.c.bf16 %v1817, %v1817
        %v1882 = vpack.c.bf16 %v1818, %v1818
        %v1883 = vpack.c.bf16 %v1819, %v1819
        %v1884 = vpack.c.bf16 %v1820, %v1820
        %v1885 = vpack.c.bf16 %v1821, %v1821
        %v1886 = vpack.c.bf16 %v1822, %v1822
        %v1887 = vpack.c.bf16 %v1823, %v1823
        %v1888 = vpack.c.bf16 %v1824, %v1824
        %v1889 = vpack.c.bf16 %v1825, %v1825
        %v1890 = vpack.c.bf16 %v1826, %v1826
        %v1891 = vpack.c.bf16 %v1827, %v1827
        %v1892 = vpack.c.bf16 %v1828, %v1828
        %v1893 = vpack.c.bf16 %v1829, %v1829
        %v1894 = vpack.c.bf16 %v1830, %v1830
        %v1895 = vpack.c.bf16 %v1831, %v1831
        %v1896 = vpack.c.bf16 %v1832, %v1832
        %v1897 = vpack.c.bf16 %v1833, %v1833
        %v1898 = vpack.c.bf16 %v1834, %v1834
        %v1899 = vpack.c.bf16 %v1835, %v1835
        %v1900 = vpack.c.bf16 %v1836, %v1836
        %v1901 = vpack.c.bf16 %v1837, %v1837
        %v1902 = vpack.c.bf16 %v1838, %v1838
        %v1903 = vpack.c.bf16 %v1839, %v1839
        %v1904 = vpack.c.bf16 %v1840, %v1840
        %v1905 = vpack.c.bf16 %v1841, %v1841
        %v1906 = vpack.c.bf16 %v1842, %v1842
        %v1907 = vpack.c.bf16 %v1843, %v1843
        %v1908 = vpack.c.bf16 %v1844, %v1844
        %v1909 = vpack.c.bf16 %v1845, %v1845
        %v1910 = vpack.c.bf16 %v1846, %v1846
        %v1911 = vpack.c.bf16 %v1847, %v1847
        %v1912 = vpack.c.bf16 %v1848, %v1848
        %v1913 = vpack.c.bf16 %v1849, %v1849
        %v1914 = vpack.c.bf16 %v1850, %v1850
        %v1915 = vpack.c.bf16 %v1851, %v1851
        %v1916 = vpack.c.bf16 %v1852, %v1852
        %v1917 = vpack.c.bf16 %v1853, %v1853
        %v1918 = vpack.c.bf16 %v1854, %v1854
        %v1919 = vpack.c.bf16 %v1855, %v1855
        %v1920 = vpack.c.bf16 %v1856, %v1856
        %v1921 = vpack.c.bf16 %v1857, %v1857
        %v1922 = vpack.c.bf16 %v1858, %v1858
        %v1923 = vpack.c.bf16 %v1859, %v1859
        %v1924 = vpack.c.bf16 %v1860, %v1860
        %v1925 = vpack.c.bf16 %v1861, %v1861
        %v1926 = vpack.c.bf16 %v1862, %v1862
        %v1927 = vpack.c.bf16 %v1863, %v1863
        %v1928 = vpack.c.bf16 %v1864, %v1864
        %v1929 = vpack.c.bf16 %v1865, %v1865
        %v1930 = vpack.c.bf16 %v1866, %v1866
        %v1931 = vpack.c.bf16 %v1867, %v1867
        %v1932 = vpack.c.bf16 %v1868, %v1868
        %v1933 = vpack.c.bf16 %v1869, %v1869
        %v1934 = vpack.c.bf16 %v1870, %v1870
        %v1935 = vpack.c.bf16 %v1871, %v1871
        %v1936 = vpack.c.bf16 %v1872, %v1872
        %v1937 = vpack.c.bf16 %v1873, %v1873
        %v1938 = vpack.c.bf16 %v1874, %v1874
        %v2003 = vunpack.c.l.b16 %v1875
        %v2004 = vunpack.c.l.b16 %v1876
        %v2005 = vunpack.c.l.b16 %v1877
        %v2006 = vunpack.c.l.b16 %v1878
        %v2007 = vunpack.c.l.b16 %v1879
        %v2008 = vunpack.c.l.b16 %v1880
        %v2009 = vunpack.c.l.b16 %v1881
        %v2010 = vunpack.c.l.b16 %v1882
        %v2011 = vunpack.c.l.b16 %v1883
        %v2012 = vunpack.c.l.b16 %v1884
        %v2013 = vunpack.c.l.b16 %v1885
        %v2014 = vunpack.c.l.b16 %v1886
        %v2015 = vunpack.c.l.b16 %v1887
        %v2016 = vunpack.c.l.b16 %v1888
        %v2017 = vunpack.c.l.b16 %v1889
        %v2018 = vunpack.c.l.b16 %v1890
        %v2019 = vunpack.c.l.b16 %v1891
        %v2020 = vunpack.c.l.b16 %v1892
        %v2021 = vunpack.c.l.b16 %v1893
        %v2022 = vunpack.c.l.b16 %v1894
        %v2023 = vunpack.c.l.b16 %v1895
        %v2024 = vunpack.c.l.b16 %v1896
        %v2025 = vunpack.c.l.b16 %v1897
        %v2026 = vunpack.c.l.b16 %v1898
        %v2027 = vunpack.c.l.b16 %v1899
        %v2028 = vunpack.c.l.b16 %v1900
        %v2029 = vunpack.c.l.b16 %v1901
        %v2030 = vunpack.c.l.b16 %v1902
        %v2031 = vunpack.c.l.b16 %v1903
        %v2032 = vunpack.c.l.b16 %v1904
        %v2033 = vunpack.c.l.b16 %v1905
        %v2034 = vunpack.c.l.b16 %v1906
        %v2035 = vunpack.c.l.b16 %v1907
        %v2036 = vunpack.c.l.b16 %v1908
        %v2037 = vunpack.c.l.b16 %v1909
        %v2038 = vunpack.c.l.b16 %v1910
        %v2039 = vunpack.c.l.b16 %v1911
        %v2040 = vunpack.c.l.b16 %v1912
        %v2041 = vunpack.c.l.b16 %v1913
        %v2042 = vunpack.c.l.b16 %v1914
        %v2043 = vunpack.c.l.b16 %v1915
        %v2044 = vunpack.c.l.b16 %v1916
        %v2045 = vunpack.c.l.b16 %v1917
        %v2046 = vunpack.c.l.b16 %v1918
        %v2047 = vunpack.c.l.b16 %v1919
        %v2048 = vunpack.c.l.b16 %v1920
        %v2049 = vunpack.c.l.b16 %v1921
        %v2050 = vunpack.c.l.b16 %v1922
        %v2051 = vunpack.c.l.b16 %v1923
        %v2052 = vunpack.c.l.b16 %v1924
        %v2053 = vunpack.c.l.b16 %v1925
        %v2054 = vunpack.c.l.b16 %v1926
        %v2055 = vunpack.c.l.b16 %v1927
        %v2056 = vunpack.c.l.b16 %v1928
        %v2057 = vunpack.c.l.b16 %v1929
        %v2058 = vunpack.c.l.b16 %v1930
        %v2059 = vunpack.c.l.b16 %v1931
        %v2060 = vunpack.c.l.b16 %v1932
        %v2061 = vunpack.c.l.b16 %v1933
        %v2062 = vunpack.c.l.b16 %v1934
        %v2063 = vunpack.c.l.b16 %v1935
        %v2064 = vunpack.c.l.b16 %v1936
        %v2065 = vunpack.c.l.b16 %v1937
        %v2066 = vunpack.c.l.b16 %v1938
        %v2067 = vld [vmem:[#allocation7] sm:$0xf]
        %v2068 = vld [vmem:[#allocation7 + $0x4] sm:$0xf]
        %v2069 = vld [vmem:[#allocation7 + $0x8] sm:$0xf]
        %v2070 = vld [vmem:[#allocation7 + $0xc] sm:$0xf]
        %v2071 = vld [vmem:[#allocation7 + $0x10] sm:$0xf]
        %v2072 = vld [vmem:[#allocation7 + $0x14] sm:$0xf]
        %v2073 = vld [vmem:[#allocation7 + $0x18] sm:$0xf]
        %v2074 = vld [vmem:[#allocation7 + $0x1c] sm:$0xf]
        %v2075 = vld [vmem:[#allocation7 + $0x20] sm:$0xf]
        %v2076 = vld [vmem:[#allocation7 + $0x24] sm:$0xf]
        %v2077 = vld [vmem:[#allocation7 + $0x28] sm:$0xf]
        %v2078 = vld [vmem:[#allocation7 + $0x2c] sm:$0xf]
        %v2079 = vld [vmem:[#allocation7 + $0x30] sm:$0xf]
        %v2080 = vld [vmem:[#allocation7 + $0x34] sm:$0xf]
        %v2081 = vld [vmem:[#allocation7 + $0x38] sm:$0xf]
        %v2082 = vld [vmem:[#allocation7 + $0x3c] sm:$0xf]
        %v2083 = vld [vmem:[#allocation7 + $0x40] sm:$0xf]
        %v2084 = vld [vmem:[#allocation7 + $0x44] sm:$0xf]
        %v2085 = vld [vmem:[#allocation7 + $0x48] sm:$0xf]
        %v2086 = vld [vmem:[#allocation7 + $0x4c] sm:$0xf]
        %v2087 = vld [vmem:[#allocation7 + $0x50] sm:$0xf]
        %v2088 = vld [vmem:[#allocation7 + $0x54] sm:$0xf]
        %v2089 = vld [vmem:[#allocation7 + $0x58] sm:$0xf]
        %v2090 = vld [vmem:[#allocation7 + $0x5c] sm:$0xf]
        %v2091 = vld [vmem:[#allocation7 + $0x60] sm:$0xf]
        %v2092 = vld [vmem:[#allocation7 + $0x64] sm:$0xf]
        %v2093 = vld [vmem:[#allocation7 + $0x68] sm:$0xf]
        %v2094 = vld [vmem:[#allocation7 + $0x6c] sm:$0xf]
        %v2095 = vld [vmem:[#allocation7 + $0x70] sm:$0xf]
        %v2096 = vld [vmem:[#allocation7 + $0x74] sm:$0xf]
        %v2097 = vld [vmem:[#allocation7 + $0x78] sm:$0xf]
        %v2098 = vld [vmem:[#allocation7 + $0x7c] sm:$0xf]
        %v2099 = vld [vmem:[#allocation7 + $0x80] sm:$0xf]
        %v2100 = vld [vmem:[#allocation7 + $0x84] sm:$0xf]
        %v2101 = vld [vmem:[#allocation7 + $0x88] sm:$0xf]
        %v2102 = vld [vmem:[#allocation7 + $0x8c] sm:$0xf]
        %v2103 = vld [vmem:[#allocation7 + $0x90] sm:$0xf]
        %v2104 = vld [vmem:[#allocation7 + $0x94] sm:$0xf]
        %v2105 = vld [vmem:[#allocation7 + $0x98] sm:$0xf]
        %v2106 = vld [vmem:[#allocation7 + $0x9c] sm:$0xf]
        %v2107 = vld [vmem:[#allocation7 + $0xa0] sm:$0xf]
        %v2108 = vld [vmem:[#allocation7 + $0xa4] sm:$0xf]
        %v2109 = vld [vmem:[#allocation7 + $0xa8] sm:$0xf]
        %v2110 = vld [vmem:[#allocation7 + $0xac] sm:$0xf]
        %v2111 = vld [vmem:[#allocation7 + $0xb0] sm:$0xf]
        %v2112 = vld [vmem:[#allocation7 + $0xb4] sm:$0xf]
        %v2113 = vld [vmem:[#allocation7 + $0xb8] sm:$0xf]
        %v2114 = vld [vmem:[#allocation7 + $0xbc] sm:$0xf]
        %v2115 = vld [vmem:[#allocation7 + $0xc0] sm:$0xf]
        %v2116 = vld [vmem:[#allocation7 + $0xc4] sm:$0xf]
        %v2117 = vld [vmem:[#allocation7 + $0xc8] sm:$0xf]
        %v2118 = vld [vmem:[#allocation7 + $0xcc] sm:$0xf]
        %v2119 = vld [vmem:[#allocation7 + $0xd0] sm:$0xf]
        %v2120 = vld [vmem:[#allocation7 + $0xd4] sm:$0xf]
        %v2121 = vld [vmem:[#allocation7 + $0xd8] sm:$0xf]
        %v2122 = vld [vmem:[#allocation7 + $0xdc] sm:$0xf]
        %v2123 = vld [vmem:[#allocation7 + $0xe0] sm:$0xf]
        %v2124 = vld [vmem:[#allocation7 + $0xe4] sm:$0xf]
        %v2125 = vld [vmem:[#allocation7 + $0xe8] sm:$0xf]
        %v2126 = vld [vmem:[#allocation7 + $0xec] sm:$0xf]
        %v2127 = vld [vmem:[#allocation7 + $0xf0] sm:$0xf]
        %v2128 = vld [vmem:[#allocation7 + $0xf4] sm:$0xf]
        %v2129 = vld [vmem:[#allocation7 + $0xf8] sm:$0xf]
        %v2130 = vld [vmem:[#allocation7 + $0xfc] sm:$0xf]
        %v2131 = vpack.c.b16 %v2007, %v2003
        %v2132 = vpack.c.b16 %v2008, %v2004
        %v2133 = vpack.c.b16 %v2009, %v2005
        %v2134 = vpack.c.b16 %v2010, %v2006
        %v2135 = vpack.c.b16 %v2015, %v2011
        %v2136 = vpack.c.b16 %v2016, %v2012
        %v2137 = vpack.c.b16 %v2017, %v2013
        %v2138 = vpack.c.b16 %v2018, %v2014
        %v2139 = vpack.c.b16 %v2023, %v2019
        %v2140 = vpack.c.b16 %v2024, %v2020
        %v2141 = vpack.c.b16 %v2025, %v2021
        %v2142 = vpack.c.b16 %v2026, %v2022
        %v2143 = vpack.c.b16 %v2031, %v2027
        %v2144 = vpack.c.b16 %v2032, %v2028
        %v2145 = vpack.c.b16 %v2033, %v2029
        %v2146 = vpack.c.b16 %v2034, %v2030
        %v2147 = vpack.c.b16 %v2039, %v2035
        %v2148 = vpack.c.b16 %v2040, %v2036
        %v2149 = vpack.c.b16 %v2041, %v2037
        %v2150 = vpack.c.b16 %v2042, %v2038
        %v2151 = vpack.c.b16 %v2047, %v2043
        %v2152 = vpack.c.b16 %v2048, %v2044
        %v2153 = vpack.c.b16 %v2049, %v2045
        %v2154 = vpack.c.b16 %v2050, %v2046
        %v2155 = vpack.c.b16 %v2055, %v2051
        %v2156 = vpack.c.b16 %v2056, %v2052
        %v2157 = vpack.c.b16 %v2057, %v2053
        %v2158 = vpack.c.b16 %v2058, %v2054
        %v2159 = vpack.c.b16 %v2063, %v2059
        %v2160 = vpack.c.b16 %v2064, %v2060
        %v2161 = vpack.c.b16 %v2065, %v2061
        %v2162 = vpack.c.b16 %v2066, %v2062
        %v2259 = vunpack.c.l.b16 %v2067
        %v2260 = vunpack.c.l.b16 %v2068
        %v2261 = vunpack.c.l.b16 %v2069
        %v2262 = vunpack.c.l.b16 %v2070
        %v2263 = vunpack.c.l.b16 %v2071
        %v2264 = vunpack.c.l.b16 %v2072
        %v2265 = vunpack.c.l.b16 %v2073
        %v2266 = vunpack.c.l.b16 %v2074
        %v2267 = vunpack.c.l.b16 %v2075
        %v2268 = vunpack.c.l.b16 %v2076
        %v2269 = vunpack.c.l.b16 %v2077
        %v2270 = vunpack.c.l.b16 %v2078
        %v2271 = vunpack.c.l.b16 %v2079
        %v2272 = vunpack.c.l.b16 %v2080
        %v2273 = vunpack.c.l.b16 %v2081
        %v2274 = vunpack.c.l.b16 %v2082
        %v2275 = vunpack.c.l.b16 %v2083
        %v2276 = vunpack.c.l.b16 %v2084
        %v2277 = vunpack.c.l.b16 %v2085
        %v2278 = vunpack.c.l.b16 %v2086
        %v2279 = vunpack.c.l.b16 %v2087
        %v2280 = vunpack.c.l.b16 %v2088
        %v2281 = vunpack.c.l.b16 %v2089
        %v2282 = vunpack.c.l.b16 %v2090
        %v2283 = vunpack.c.l.b16 %v2091
        %v2284 = vunpack.c.l.b16 %v2092
        %v2285 = vunpack.c.l.b16 %v2093
        %v2286 = vunpack.c.l.b16 %v2094
        %v2287 = vunpack.c.l.b16 %v2095
        %v2288 = vunpack.c.l.b16 %v2096
        %v2289 = vunpack.c.l.b16 %v2097
        %v2290 = vunpack.c.l.b16 %v2098
        %v2291 = vunpack.c.l.b16 %v2099
        %v2292 = vunpack.c.l.b16 %v2100
        %v2293 = vunpack.c.l.b16 %v2101
        %v2294 = vunpack.c.l.b16 %v2102
        %v2295 = vunpack.c.l.b16 %v2103
        %v2296 = vunpack.c.l.b16 %v2104
        %v2297 = vunpack.c.l.b16 %v2105
        %v2298 = vunpack.c.l.b16 %v2106
        %v2299 = vunpack.c.l.b16 %v2107
        %v2300 = vunpack.c.l.b16 %v2108
        %v2301 = vunpack.c.l.b16 %v2109
        %v2302 = vunpack.c.l.b16 %v2110
        %v2303 = vunpack.c.l.b16 %v2111
        %v2304 = vunpack.c.l.b16 %v2112
        %v2305 = vunpack.c.l.b16 %v2113
        %v2306 = vunpack.c.l.b16 %v2114
        %v2307 = vunpack.c.l.b16 %v2115
        %v2308 = vunpack.c.l.b16 %v2116
        %v2309 = vunpack.c.l.b16 %v2117
        %v2310 = vunpack.c.l.b16 %v2118
        %v2311 = vunpack.c.l.b16 %v2119
        %v2312 = vunpack.c.l.b16 %v2120
        %v2313 = vunpack.c.l.b16 %v2121
        %v2314 = vunpack.c.l.b16 %v2122
        %v2315 = vunpack.c.l.b16 %v2123
        %v2316 = vunpack.c.l.b16 %v2124
        %v2317 = vunpack.c.l.b16 %v2125
        %v2318 = vunpack.c.l.b16 %v2126
        %v2319 = vunpack.c.l.b16 %v2127
        %v2320 = vunpack.c.l.b16 %v2128
        %v2321 = vunpack.c.l.b16 %v2129
        %v2322 = vunpack.c.l.b16 %v2130
        %v2323 = vpack.c.b16 %v2260, %v2259
        %v2324 = vpack.c.b16 %v2262, %v2261
        %v2325 = vpack.c.b16 %v2264, %v2263
        %v2326 = vpack.c.b16 %v2266, %v2265
        %v2327 = vpack.c.b16 %v2268, %v2267
        %v2328 = vpack.c.b16 %v2270, %v2269
        %v2329 = vpack.c.b16 %v2272, %v2271
        %v2330 = vpack.c.b16 %v2274, %v2273
        %v2331 = vpack.c.b16 %v2276, %v2275
        %v2332 = vpack.c.b16 %v2278, %v2277
        %v2333 = vpack.c.b16 %v2280, %v2279
        %v2334 = vpack.c.b16 %v2282, %v2281
        %v2335 = vpack.c.b16 %v2284, %v2283
        %v2336 = vpack.c.b16 %v2286, %v2285
        %v2337 = vpack.c.b16 %v2288, %v2287
        %v2338 = vpack.c.b16 %v2290, %v2289
        %v2339 = vpack.c.b16 %v2292, %v2291
        %v2340 = vpack.c.b16 %v2294, %v2293
        %v2341 = vpack.c.b16 %v2296, %v2295
        %v2342 = vpack.c.b16 %v2298, %v2297
        %v2343 = vpack.c.b16 %v2300, %v2299
        %v2344 = vpack.c.b16 %v2302, %v2301
        %v2345 = vpack.c.b16 %v2304, %v2303
        %v2346 = vpack.c.b16 %v2306, %v2305
        %v2347 = vpack.c.b16 %v2308, %v2307
        %v2348 = vpack.c.b16 %v2310, %v2309
        %v2349 = vpack.c.b16 %v2312, %v2311
        %v2350 = vpack.c.b16 %v2314, %v2313
        %v2351 = vpack.c.b16 %v2316, %v2315
        %v2352 = vpack.c.b16 %v2318, %v2317
        %v2353 = vpack.c.b16 %v2320, %v2319
        %v2354 = vpack.c.b16 %v2322, %v2321
        %2387 = vmatprep.subr.bf16.mxu0 0
        %2388 = vmatpush1.bf16.msra.mxu0 %v2323
        %2389 = vmatprep.subr.bf16.mxu0 0
        %2390 = vmatpush1.bf16.msra.mxu0 %v2324
        %2391 = vmatprep.subr.bf16.mxu0 0
        %2392 = vmatpush1.bf16.msra.mxu0 %v2325
        %2393 = vmatprep.subr.bf16.mxu0 0
        %2394 = vmatpush1.bf16.msra.mxu0 %v2326
        %2395 = vmatprep.subr.bf16.mxu0 0
        %2396 = vmatpush1.bf16.msra.mxu0 %v2327
        %2397 = vmatprep.subr.bf16.mxu0 0
        %2398 = vmatpush1.bf16.msra.mxu0 %v2328
        %2399 = vmatprep.subr.bf16.mxu0 0
        %2400 = vmatpush1.bf16.msra.mxu0 %v2329
        %2401 = vmatprep.subr.bf16.mxu0 0
        %2402 = vmatpush1.bf16.msra.mxu0 %v2330
        %2403 = vmatprep.subr.bf16.mxu0 0
        %2404 = vmatpush1.bf16.msra.mxu0 %v2331
        %2405 = vmatprep.subr.bf16.mxu0 0
        %2406 = vmatpush1.bf16.msra.mxu0 %v2332
        %2407 = vmatprep.subr.bf16.mxu0 0
        %2408 = vmatpush1.bf16.msra.mxu0 %v2333
        %2409 = vmatprep.subr.bf16.mxu0 0
        %2410 = vmatpush1.bf16.msra.mxu0 %v2334
        %2411 = vmatprep.subr.bf16.mxu0 0
        %2412 = vmatpush1.bf16.msra.mxu0 %v2335
        %2413 = vmatprep.subr.bf16.mxu0 0
        %2414 = vmatpush1.bf16.msra.mxu0 %v2336
        %2415 = vmatprep.subr.bf16.mxu0 0
        %2416 = vmatpush1.bf16.msra.mxu0 %v2337
        %2417 = vmatprep.subr.bf16.mxu0 0
        %2418 = vmatpush1.bf16.msra.mxu0 %v2338
        %2419 = vmatprep.mubr.bf16.mxu0 %v2132
        %2420 = vmatmul.mubr.bf16.gmra.mrb[0].mxu0 %v2131
        %v2421 = vpop.f32.mrb[0].mxu0
        %v2422 = vadd.f32 0.0, %v2421
        %v2423 = vpop.f32.mrb[0].mxu0
        %v2424 = vpop.f32.mrb[0].mxu0
        %v2425 = vadd.f32 0.0, %v2424
        %v2426 = vpop.f32.mrb[0].mxu0
        %2427 = vmatprep.mubr.bf16.mxu0 %v2136
        %2428 = vmatmul.mubr.bf16.gmra.mrb[0].mxu0 %v2135
        %v2429 = vpop.f32.mrb[0].mxu0
        %v2430 = vadd.f32 0.0, %v2429
        %v2431 = vpop.f32.mrb[0].mxu0
        %v2432 = vpop.f32.mrb[0].mxu0
        %v2433 = vadd.f32 0.0, %v2432
        %v2434 = vpop.f32.mrb[0].mxu0
        %2435 = vmatprep.mubr.bf16.mxu0 %v2140
        %2436 = vmatmul.mubr.bf16.gmra.mrb[0].mxu0 %v2139
        %v2437 = vpop.f32.mrb[0].mxu0
        %v2438 = vadd.f32 0.0, %v2437
        %v2439 = vpop.f32.mrb[0].mxu0
        %v2440 = vpop.f32.mrb[0].mxu0
        %v2441 = vadd.f32 0.0, %v2440
        %v2442 = vpop.f32.mrb[0].mxu0
        %2443 = vmatprep.mubr.bf16.mxu0 %v2144
        %2444 = vmatmul.mubr.bf16.gmra.mrb[0].mxu0 %v2143
        %v2445 = vpop.f32.mrb[0].mxu0
        %v2446 = vadd.f32 0.0, %v2445
        %v2447 = vpop.f32.mrb[0].mxu0
        %v2448 = vpop.f32.mrb[0].mxu0
        %v2449 = vadd.f32 0.0, %v2448
        %v2450 = vpop.f32.mrb[0].mxu0
        %2451 = vmatprep.mubr.bf16.mxu0 %v2148
        %2452 = vmatmul.mubr.bf16.gmra.mrb[0].mxu0 %v2147
        %v2453 = vpop.f32.mrb[0].mxu0
        %v2454 = vadd.f32 0.0, %v2453
        %v2455 = vpop.f32.mrb[0].mxu0
        %v2456 = vpop.f32.mrb[0].mxu0
        %v2457 = vadd.f32 0.0, %v2456
        %v2458 = vpop.f32.mrb[0].mxu0
        %2459 = vmatprep.mubr.bf16.mxu0 %v2152
        %2460 = vmatmul.mubr.bf16.gmra.mrb[0].mxu0 %v2151
        %v2461 = vpop.f32.mrb[0].mxu0
        %v2462 = vadd.f32 0.0, %v2461
        %v2463 = vpop.f32.mrb[0].mxu0
        %v2464 = vpop.f32.mrb[0].mxu0
        %v2465 = vadd.f32 0.0, %v2464
        %v2466 = vpop.f32.mrb[0].mxu0
        %2467 = vmatprep.mubr.bf16.mxu0 %v2156
        %2468 = vmatmul.mubr.bf16.gmra.mrb[0].mxu0 %v2155
        %v2469 = vpop.f32.mrb[0].mxu0
        %v2470 = vadd.f32 0.0, %v2469
        %v2471 = vpop.f32.mrb[0].mxu0
        %v2472 = vpop.f32.mrb[0].mxu0
        %v2473 = vadd.f32 0.0, %v2472
        %v2474 = vpop.f32.mrb[0].mxu0
        %2475 = vmatprep.mubr.bf16.mxu0 %v2160
        %2476 = vmatmul.mubr.bf16.gmra.mrb[0].mxu0 %v2159
        %v2477 = vpop.f32.mrb[0].mxu0
        %v2478 = vadd.f32 0.0, %v2477
        %v2479 = vpop.f32.mrb[0].mxu0
        %v2480 = vpop.f32.mrb[0].mxu0
        %v2481 = vadd.f32 0.0, %v2480
        %v2482 = vpop.f32.mrb[0].mxu0
        %2483 = vdwg.mxu0
        %2484 = vmatprep.subr.bf16.mxu0 0
        %2485 = vmatpush1.bf16.msra.mxu0 %v2339
        %2486 = vmatprep.subr.bf16.mxu0 0
        %2487 = vmatpush1.bf16.msra.mxu0 %v2340
        %2488 = vmatprep.subr.bf16.mxu0 0
        %2489 = vmatpush1.bf16.msra.mxu0 %v2341
        %2490 = vmatprep.subr.bf16.mxu0 0
        %2491 = vmatpush1.bf16.msra.mxu0 %v2342
        %2492 = vmatprep.subr.bf16.mxu0 0
        %2493 = vmatpush1.bf16.msra.mxu0 %v2343
        %2494 = vmatprep.subr.bf16.mxu0 0
        %2495 = vmatpush1.bf16.msra.mxu0 %v2344
        %2496 = vmatprep.subr.bf16.mxu0 0
        %2497 = vmatpush1.bf16.msra.mxu0 %v2345
        %2498 = vmatprep.subr.bf16.mxu0 0
        %2499 = vmatpush1.bf16.msra.mxu0 %v2346
        %2500 = vmatprep.subr.bf16.mxu0 0
        %2501 = vmatpush1.bf16.msra.mxu0 %v2347
        %2502 = vmatprep.subr.bf16.mxu0 0
        %2503 = vmatpush1.bf16.msra.mxu0 %v2348
        %2504 = vmatprep.subr.bf16.mxu0 0
        %2505 = vmatpush1.bf16.msra.mxu0 %v2349
        %2506 = vmatprep.subr.bf16.mxu0 0
        %2507 = vmatpush1.bf16.msra.mxu0 %v2350
        %2508 = vmatprep.subr.bf16.mxu0 0
        %2509 = vmatpush1.bf16.msra.mxu0 %v2351
        %2510 = vmatprep.subr.bf16.mxu0 0
        %2511 = vmatpush1.bf16.msra.mxu0 %v2352
        %2512 = vmatprep.subr.bf16.mxu0 0
        %2513 = vmatpush1.bf16.msra.mxu0 %v2353
        %2514 = vmatprep.subr.bf16.mxu0 0
        %2515 = vmatpush1.bf16.msra.mxu0 %v2354
        %2516 = vmatprep.mubr.bf16.mxu0 %v2134
        %2517 = vmatmul.mubr.bf16.gmra.mrb[0].mxu0 %v2133
        %v2518 = vpop.f32.mrb[0].mxu0
        %v2519 = vadd.f32 %v2422, %v2518
        %v2520 = vpop.f32.mrb[0].mxu0
        %v2521 = vpop.f32.mrb[0].mxu0
        %v2522 = vadd.f32 %v2425, %v2521
        %v2523 = vpop.f32.mrb[0].mxu0
        %2524 = vmatprep.mubr.bf16.mxu0 %v2138
        %2525 = vmatmul.mubr.bf16.gmra.mrb[0].mxu0 %v2137
        %v2526 = vpop.f32.mrb[0].mxu0
        %v2527 = vadd.f32 %v2430, %v2526
        %v2528 = vpop.f32.mrb[0].mxu0
        %v2529 = vpop.f32.mrb[0].mxu0
        %v2530 = vadd.f32 %v2433, %v2529
        %v2531 = vpop.f32.mrb[0].mxu0
        %2532 = vmatprep.mubr.bf16.mxu0 %v2142
        %2533 = vmatmul.mubr.bf16.gmra.mrb[0].mxu0 %v2141
        %v2534 = vpop.f32.mrb[0].mxu0
        %v2535 = vadd.f32 %v2438, %v2534
        %v2536 = vpop.f32.mrb[0].mxu0
        %v2537 = vpop.f32.mrb[0].mxu0
        %v2538 = vadd.f32 %v2441, %v2537
        %v2539 = vpop.f32.mrb[0].mxu0
        %2540 = vmatprep.mubr.bf16.mxu0 %v2146
        %2541 = vmatmul.mubr.bf16.gmra.mrb[0].mxu0 %v2145
        %v2542 = vpop.f32.mrb[0].mxu0
        %v2543 = vadd.f32 %v2446, %v2542
        %v2544 = vpop.f32.mrb[0].mxu0
        %v2545 = vpop.f32.mrb[0].mxu0
        %v2546 = vadd.f32 %v2449, %v2545
        %v2547 = vpop.f32.mrb[0].mxu0
        %2548 = vmatprep.mubr.bf16.mxu0 %v2150
        %2549 = vmatmul.mubr.bf16.gmra.mrb[0].mxu0 %v2149
        %v2550 = vpop.f32.mrb[0].mxu0
        %v2551 = vadd.f32 %v2454, %v2550
        %v2552 = vpop.f32.mrb[0].mxu0
        %v2553 = vpop.f32.mrb[0].mxu0
        %v2554 = vadd.f32 %v2457, %v2553
        %v2555 = vpop.f32.mrb[0].mxu0
        %2556 = vmatprep.mubr.bf16.mxu0 %v2154
        %2557 = vmatmul.mubr.bf16.gmra.mrb[0].mxu0 %v2153
        %v2558 = vpop.f32.mrb[0].mxu0
        %v2559 = vadd.f32 %v2462, %v2558
        %v2560 = vpop.f32.mrb[0].mxu0
        %v2561 = vpop.f32.mrb[0].mxu0
        %v2562 = vadd.f32 %v2465, %v2561
        %v2563 = vpop.f32.mrb[0].mxu0
        %2564 = vmatprep.mubr.bf16.mxu0 %v2158
        %2565 = vmatmul.mubr.bf16.gmra.mrb[0].mxu0 %v2157
        %v2566 = vpop.f32.mrb[0].mxu0
        %v2567 = vadd.f32 %v2470, %v2566
        %v2568 = vpop.f32.mrb[0].mxu0
        %v2569 = vpop.f32.mrb[0].mxu0
        %v2570 = vadd.f32 %v2473, %v2569
        %v2571 = vpop.f32.mrb[0].mxu0
        %2572 = vmatprep.mubr.bf16.mxu0 %v2162
        %2573 = vmatmul.mubr.bf16.gmra.mrb[0].mxu0 %v2161
        %v2574 = vpop.f32.mrb[0].mxu0
        %v2575 = vadd.f32 %v2478, %v2574
        %v2576 = vpop.f32.mrb[0].mxu0
        %v2577 = vpop.f32.mrb[0].mxu0
        %v2578 = vadd.f32 %v2481, %v2577
        %v2579 = vpop.f32.mrb[0].mxu0
        %2580 = vdwg.mxu0
        %vm2581 = vcmp.gt.s32.totalorder %v698, 0
        %vm2582 = vcmp.gt.s32.totalorder %v698, 1
        %vm2583 = vcmp.gt.s32.totalorder %v698, 2
        %vm2584 = vcmp.gt.s32.totalorder %v698, 3
        %vm2585 = vcmp.gt.s32.totalorder %v698, 4
        %vm2586 = vcmp.gt.s32.totalorder %v698, 5
        %vm2587 = vcmp.gt.s32.totalorder %v698, 6
        %vm2588 = vcmp.gt.s32.totalorder %v698, 7
        %vm2589 = vcmp.gt.s32.totalorder %v702, 0
        %vm2590 = vcmp.gt.s32.totalorder %v702, 1
        %vm2591 = vcmp.gt.s32.totalorder %v702, 2
        %vm2592 = vcmp.gt.s32.totalorder %v702, 3
        %vm2593 = vcmp.gt.s32.totalorder %v702, 4
        %vm2594 = vcmp.gt.s32.totalorder %v702, 5
        %vm2595 = vcmp.gt.s32.totalorder %v702, 6
        %vm2596 = vcmp.gt.s32.totalorder %v702, 7
        %vm2597 = vmand %vm2581, %vm703
        %vm2598 = vmand %vm2582, %vm703
        %vm2599 = vmand %vm2583, %vm703
        %vm2600 = vmand %vm2584, %vm703
        %vm2601 = vmand %vm2585, %vm703
        %vm2602 = vmand %vm2586, %vm703
        %vm2603 = vmand %vm2587, %vm703
        %vm2604 = vmand %vm2588, %vm703
        %vm2605 = vmand %vm2589, %vm704
        %vm2606 = vmand %vm2590, %vm704
        %vm2607 = vmand %vm2591, %vm704
        %vm2608 = vmand %vm2592, %vm704
        %vm2609 = vmand %vm2593, %vm704
        %vm2610 = vmand %vm2594, %vm704
        %vm2611 = vmand %vm2595, %vm704
        %vm2612 = vmand %vm2596, %vm704
        %v2613 = vsel %vm2597, 1, 0
        %v2614 = vsel %vm2598, 1, 0
        %v2615 = vsel %vm2599, 1, 0
        %v2616 = vsel %vm2600, 1, 0
        %v2617 = vsel %vm2601, 1, 0
        %v2618 = vsel %vm2602, 1, 0
        %v2619 = vsel %vm2603, 1, 0
        %v2620 = vsel %vm2604, 1, 0
        %v2621 = vsel %vm2605, 1, 0
        %v2622 = vsel %vm2606, 1, 0
        %v2623 = vsel %vm2607, 1, 0
        %v2624 = vsel %vm2608, 1, 0
        %v2625 = vsel %vm2609, 1, 0
        %v2626 = vsel %vm2610, 1, 0
        %v2627 = vsel %vm2611, 1, 0
        %v2628 = vsel %vm2612, 1, 0
        %v2629 = vcvt.s32.f32 %v2613
        %v2630 = vcvt.s32.f32 %v2614
        %v2631 = vcvt.s32.f32 %v2615
        %v2632 = vcvt.s32.f32 %v2616
        %v2633 = vcvt.s32.f32 %v2617
        %v2634 = vcvt.s32.f32 %v2618
        %v2635 = vcvt.s32.f32 %v2619
        %v2636 = vcvt.s32.f32 %v2620
        %v2637 = vcvt.s32.f32 %v2621
        %v2638 = vcvt.s32.f32 %v2622
        %v2639 = vcvt.s32.f32 %v2623
        %v2640 = vcvt.s32.f32 %v2624
        %v2641 = vcvt.s32.f32 %v2625
        %v2642 = vcvt.s32.f32 %v2626
        %v2643 = vcvt.s32.f32 %v2627
        %v2644 = vcvt.s32.f32 %v2628
        %v2645 = vmul.f32 %v2519, %v2629
        %v2646 = vmul.f32 %v2522, %v2630
        %v2647 = vmul.f32 %v2527, %v2631
        %v2648 = vmul.f32 %v2530, %v2632
        %v2649 = vmul.f32 %v2535, %v2633
        %v2650 = vmul.f32 %v2538, %v2634
        %v2651 = vmul.f32 %v2543, %v2635
        %v2652 = vmul.f32 %v2546, %v2636
        %v2653 = vmul.f32 %v2551, %v2637
        %v2654 = vmul.f32 %v2554, %v2638
        %v2655 = vmul.f32 %v2559, %v2639
        %v2656 = vmul.f32 %v2562, %v2640
        %v2657 = vmul.f32 %v2567, %v2641
        %v2658 = vmul.f32 %v2570, %v2642
        %v2659 = vmul.f32 %v2575, %v2643
        %v2660 = vmul.f32 %v2578, %v2644
        %v2661 = vrot.slane %v2645, 4
        %v2662 = vadd.f32 %v2645, %v2661
        %v2663 = vrot.slane %v2662, 2
        %v2664 = vadd.f32 %v2662, %v2663
        %v2665 = vrot.slane %v2664, 1
        %v2666 = vadd.f32 %v2664, %v2665
        %v2667 = vrot.slane %v2646, 4
        %v2668 = vadd.f32 %v2646, %v2667
        %v2669 = vrot.slane %v2668, 2
        %v2670 = vadd.f32 %v2668, %v2669
        %v2671 = vrot.slane %v2670, 1
        %v2672 = vadd.f32 %v2670, %v2671
        %v2673 = vrot.slane %v2647, 4
        %v2674 = vadd.f32 %v2647, %v2673
        %v2675 = vrot.slane %v2674, 2
        %v2676 = vadd.f32 %v2674, %v2675
        %v2677 = vrot.slane %v2676, 1
        %v2678 = vadd.f32 %v2676, %v2677
        %v2679 = vrot.slane %v2648, 4
        %v2680 = vadd.f32 %v2648, %v2679
        %v2681 = vrot.slane %v2680, 2
        %v2682 = vadd.f32 %v2680, %v2681
        %v2683 = vrot.slane %v2682, 1
        %v2684 = vadd.f32 %v2682, %v2683
        %v2685 = vrot.slane %v2649, 4
        %v2686 = vadd.f32 %v2649, %v2685
        %v2687 = vrot.slane %v2686, 2
        %v2688 = vadd.f32 %v2686, %v2687
        %v2689 = vrot.slane %v2688, 1
        %v2690 = vadd.f32 %v2688, %v2689
        %v2691 = vrot.slane %v2650, 4
        %v2692 = vadd.f32 %v2650, %v2691
        %v2693 = vrot.slane %v2692, 2
        %v2694 = vadd.f32 %v2692, %v2693
        %v2695 = vrot.slane %v2694, 1
        %v2696 = vadd.f32 %v2694, %v2695
        %v2697 = vrot.slane %v2651, 4
        %v2698 = vadd.f32 %v2651, %v2697
        %v2699 = vrot.slane %v2698, 2
        %v2700 = vadd.f32 %v2698, %v2699
        %v2701 = vrot.slane %v2700, 1
        %v2702 = vadd.f32 %v2700, %v2701
        %v2703 = vrot.slane %v2652, 4
        %v2704 = vadd.f32 %v2652, %v2703
        %v2705 = vrot.slane %v2704, 2
        %v2706 = vadd.f32 %v2704, %v2705
        %v2707 = vrot.slane %v2706, 1
        %v2708 = vadd.f32 %v2706, %v2707
        %v2709 = vrot.slane %v2653, 4
        %v2710 = vadd.f32 %v2653, %v2709
        %v2711 = vrot.slane %v2710, 2
        %v2712 = vadd.f32 %v2710, %v2711
        %v2713 = vrot.slane %v2712, 1
        %v2714 = vadd.f32 %v2712, %v2713
        %v2715 = vrot.slane %v2654, 4
        %v2716 = vadd.f32 %v2654, %v2715
        %v2717 = vrot.slane %v2716, 2
        %v2718 = vadd.f32 %v2716, %v2717
        %v2719 = vrot.slane %v2718, 1
        %v2720 = vadd.f32 %v2718, %v2719
        %v2721 = vrot.slane %v2655, 4
        %v2722 = vadd.f32 %v2655, %v2721
        %v2723 = vrot.slane %v2722, 2
        %v2724 = vadd.f32 %v2722, %v2723
        %v2725 = vrot.slane %v2724, 1
        %v2726 = vadd.f32 %v2724, %v2725
        %v2727 = vrot.slane %v2656, 4
        %v2728 = vadd.f32 %v2656, %v2727
        %v2729 = vrot.slane %v2728, 2
        %v2730 = vadd.f32 %v2728, %v2729
        %v2731 = vrot.slane %v2730, 1
        %v2732 = vadd.f32 %v2730, %v2731
        %v2733 = vrot.slane %v2657, 4
        %v2734 = vadd.f32 %v2657, %v2733
        %v2735 = vrot.slane %v2734, 2
        %v2736 = vadd.f32 %v2734, %v2735
        %v2737 = vrot.slane %v2736, 1
        %v2738 = vadd.f32 %v2736, %v2737
        %v2739 = vrot.slane %v2658, 4
        %v2740 = vadd.f32 %v2658, %v2739
        %v2741 = vrot.slane %v2740, 2
        %v2742 = vadd.f32 %v2740, %v2741
        %v2743 = vrot.slane %v2742, 1
        %v2744 = vadd.f32 %v2742, %v2743
        %v2745 = vrot.slane %v2659, 4
        %v2746 = vadd.f32 %v2659, %v2745
        %v2747 = vrot.slane %v2746, 2
        %v2748 = vadd.f32 %v2746, %v2747
        %v2749 = vrot.slane %v2748, 1
        %v2750 = vadd.f32 %v2748, %v2749
        %v2751 = vrot.slane %v2660, 4
        %v2752 = vadd.f32 %v2660, %v2751
        %v2753 = vrot.slane %v2752, 2
        %v2754 = vadd.f32 %v2752, %v2753
        %v2755 = vrot.slane %v2754, 1
        %v2756 = vadd.f32 %v2754, %v2755
        %v2757 = vadd.f32 %v2666, %v2672
        %v2758 = vadd.f32 %v2757, %v2678
        %v2759 = vadd.f32 %v2758, %v2684
        %v2760 = vadd.f32 %v2759, %v2690
        %v2761 = vadd.f32 %v2760, %v2696
        %v2762 = vadd.f32 %v2761, %v2702
        %v2763 = vadd.f32 %v2762, %v2708
        %v2764 = vadd.f32 %v2714, %v2720
        %v2765 = vadd.f32 %v2764, %v2726
        %v2766 = vadd.f32 %v2765, %v2732
        %v2767 = vadd.f32 %v2766, %v2738
        %v2768 = vadd.f32 %v2767, %v2744
        %v2769 = vadd.f32 %v2768, %v2750
        %v2770 = vadd.f32 %v2769, %v2756
        %v2771 = vmul.f32 %v2763, %v422
        %v2772 = vmul.f32 %v2770, %v423
        %v2773 = vmul.f32 %v2645, %v2645
        %v2774 = vmul.f32 %v2646, %v2646
        %v2775 = vmul.f32 %v2647, %v2647
        %v2776 = vmul.f32 %v2648, %v2648
        %v2777 = vmul.f32 %v2649, %v2649
        %v2778 = vmul.f32 %v2650, %v2650
        %v2779 = vmul.f32 %v2651, %v2651
        %v2780 = vmul.f32 %v2652, %v2652
        %v2781 = vmul.f32 %v2653, %v2653
        %v2782 = vmul.f32 %v2654, %v2654
        %v2783 = vmul.f32 %v2655, %v2655
        %v2784 = vmul.f32 %v2656, %v2656
        %v2785 = vmul.f32 %v2657, %v2657
        %v2786 = vmul.f32 %v2658, %v2658
        %v2787 = vmul.f32 %v2659, %v2659
        %v2788 = vmul.f32 %v2660, %v2660
        %v2789 = vrot.slane %v2773, 4
        %v2790 = vadd.f32 %v2773, %v2789
        %v2791 = vrot.slane %v2790, 2
        %v2792 = vadd.f32 %v2790, %v2791
        %v2793 = vrot.slane %v2792, 1
        %v2794 = vadd.f32 %v2792, %v2793
        %v2795 = vrot.slane %v2774, 4
        %v2796 = vadd.f32 %v2774, %v2795
        %v2797 = vrot.slane %v2796, 2
        %v2798 = vadd.f32 %v2796, %v2797
        %v2799 = vrot.slane %v2798, 1
        %v2800 = vadd.f32 %v2798, %v2799
        %v2801 = vrot.slane %v2775, 4
        %v2802 = vadd.f32 %v2775, %v2801
        %v2803 = vrot.slane %v2802, 2
        %v2804 = vadd.f32 %v2802, %v2803
        %v2805 = vrot.slane %v2804, 1
        %v2806 = vadd.f32 %v2804, %v2805
        %v2807 = vrot.slane %v2776, 4
        %v2808 = vadd.f32 %v2776, %v2807
        %v2809 = vrot.slane %v2808, 2
        %v2810 = vadd.f32 %v2808, %v2809
        %v2811 = vrot.slane %v2810, 1
        %v2812 = vadd.f32 %v2810, %v2811
        %v2813 = vrot.slane %v2777, 4
        %v2814 = vadd.f32 %v2777, %v2813
        %v2815 = vrot.slane %v2814, 2
        %v2816 = vadd.f32 %v2814, %v2815
        %v2817 = vrot.slane %v2816, 1
        %v2818 = vadd.f32 %v2816, %v2817
        %v2819 = vrot.slane %v2778, 4
        %v2820 = vadd.f32 %v2778, %v2819
        %v2821 = vrot.slane %v2820, 2
        %v2822 = vadd.f32 %v2820, %v2821
        %v2823 = vrot.slane %v2822, 1
        %v2824 = vadd.f32 %v2822, %v2823
        %v2825 = vrot.slane %v2779, 4
        %v2826 = vadd.f32 %v2779, %v2825
        %v2827 = vrot.slane %v2826, 2
        %v2828 = vadd.f32 %v2826, %v2827
        %v2829 = vrot.slane %v2828, 1
        %v2830 = vadd.f32 %v2828, %v2829
        %v2831 = vrot.slane %v2780, 4
        %v2832 = vadd.f32 %v2780, %v2831
        %v2833 = vrot.slane %v2832, 2
        %v2834 = vadd.f32 %v2832, %v2833
        %v2835 = vrot.slane %v2834, 1
        %v2836 = vadd.f32 %v2834, %v2835
        %v2837 = vrot.slane %v2781, 4
        %v2838 = vadd.f32 %v2781, %v2837
        %v2839 = vrot.slane %v2838, 2
        %v2840 = vadd.f32 %v2838, %v2839
        %v2841 = vrot.slane %v2840, 1
        %v2842 = vadd.f32 %v2840, %v2841
        %v2843 = vrot.slane %v2782, 4
        %v2844 = vadd.f32 %v2782, %v2843
        %v2845 = vrot.slane %v2844, 2
        %v2846 = vadd.f32 %v2844, %v2845
        %v2847 = vrot.slane %v2846, 1
        %v2848 = vadd.f32 %v2846, %v2847
        %v2849 = vrot.slane %v2783, 4
        %v2850 = vadd.f32 %v2783, %v2849
        %v2851 = vrot.slane %v2850, 2
        %v2852 = vadd.f32 %v2850, %v2851
        %v2853 = vrot.slane %v2852, 1
        %v2854 = vadd.f32 %v2852, %v2853
        %v2855 = vrot.slane %v2784, 4
        %v2856 = vadd.f32 %v2784, %v2855
        %v2857 = vrot.slane %v2856, 2
        %v2858 = vadd.f32 %v2856, %v2857
        %v2859 = vrot.slane %v2858, 1
        %v2860 = vadd.f32 %v2858, %v2859
        %v2861 = vrot.slane %v2785, 4
        %v2862 = vadd.f32 %v2785, %v2861
        %v2863 = vrot.slane %v2862, 2
        %v2864 = vadd.f32 %v2862, %v2863
        %v2865 = vrot.slane %v2864, 1
        %v2866 = vadd.f32 %v2864, %v2865
        %v2867 = vrot.slane %v2786, 4
        %v2868 = vadd.f32 %v2786, %v2867
        %v2869 = vrot.slane %v2868, 2
        %v2870 = vadd.f32 %v2868, %v2869
        %v2871 = vrot.slane %v2870, 1
        %v2872 = vadd.f32 %v2870, %v2871
        %v2873 = vrot.slane %v2787, 4
        %v2874 = vadd.f32 %v2787, %v2873
        %v2875 = vrot.slane %v2874, 2
        %v2876 = vadd.f32 %v2874, %v2875
        %v2877 = vrot.slane %v2876, 1
        %v2878 = vadd.f32 %v2876, %v2877
        %v2879 = vrot.slane %v2788, 4
        %v2880 = vadd.f32 %v2788, %v2879
        %v2881 = vrot.slane %v2880, 2
        %v2882 = vadd.f32 %v2880, %v2881
        %v2883 = vrot.slane %v2882, 1
        %v2884 = vadd.f32 %v2882, %v2883
        %v2885 = vadd.f32 %v2794, %v2800
        %v2886 = vadd.f32 %v2885, %v2806
        %v2887 = vadd.f32 %v2886, %v2812
        %v2888 = vadd.f32 %v2887, %v2818
        %v2889 = vadd.f32 %v2888, %v2824
        %v2890 = vadd.f32 %v2889, %v2830
        %v2891 = vadd.f32 %v2890, %v2836
        %v2892 = vadd.f32 %v2842, %v2848
        %v2893 = vadd.f32 %v2892, %v2854
        %v2894 = vadd.f32 %v2893, %v2860
        %v2895 = vadd.f32 %v2894, %v2866
        %v2896 = vadd.f32 %v2895, %v2872
        %v2897 = vadd.f32 %v2896, %v2878
        %v2898 = vadd.f32 %v2897, %v2884
        %v2899 = vmul.f32 %v2891, %v422
        %v2900 = vmul.f32 %v2898, %v423
        %v2901 = vmul.f32 %v2771, %v2771
        %v2902 = vmul.f32 %v2772, %v2772
        %v2903 = vsub.f32 %v2899, %v2901
        %v2904 = vsub.f32 %v2900, %v2902
        %v2905 = vmax.f32 %v2903, 0.0
        %v2906 = vmax.f32 %v2904, 0.0
        %v2907 = vld [vmem:[%s8] sm:$0x1]
        %v2908 = vadd.f32 %v2905, 1e-05
        %v2909 = vadd.f32 %v2906, 1e-05
        %v2910 = vrsqrt.pop %v2908
        %v2911 = vrsqrt.pop %v2909
        %v2912 = vmul.f32 %v2907, %v2910
        %v2913 = vmul.f32 %v2907, %v2911
        %v2914 = vld [vmem:[%s9] sm:$0x1]
        %v2915 = vmul.f32 %v2771, %v2912
        %v2916 = vmul.f32 %v2772, %v2913
        %v2917 = vsub.f32 %v2914, %v2915
        %v2918 = vsub.f32 %v2914, %v2916
        %v2921 = vlaneseq
        %v2922 = vshrl.u32 %v2921, 7
        %v2923 = vsub.s32 0, %v2922
        %v2924 = vrot.slane %v2912, %v2923
        %v2925 = vlaneseq
        %v2926 = vshrl.u32 %v2925, 7
        %v2927 = vsub.s32 0, %v2926
        %v2928 = vrot.slane %v2913, %v2927
        %v2931 = vmul.f32 %v2519, %v2924
        %v2932 = vmul.f32 %v2522, %v2924
        %v2933 = vmul.f32 %v2527, %v2924
        %v2934 = vmul.f32 %v2530, %v2924
        %v2935 = vmul.f32 %v2535, %v2924
        %v2936 = vmul.f32 %v2538, %v2924
        %v2937 = vmul.f32 %v2543, %v2924
        %v2938 = vmul.f32 %v2546, %v2924
        %v2939 = vmul.f32 %v2551, %v2928
        %v2940 = vmul.f32 %v2554, %v2928
        %v2941 = vmul.f32 %v2559, %v2928
        %v2942 = vmul.f32 %v2562, %v2928
        %v2943 = vmul.f32 %v2567, %v2928
        %v2944 = vmul.f32 %v2570, %v2928
        %v2945 = vmul.f32 %v2575, %v2928
        %v2946 = vmul.f32 %v2578, %v2928
        %v2949 = vlaneseq
        %v2950 = vshrl.u32 %v2949, 7
        %v2951 = vsub.s32 0, %v2950
        %v2952 = vrot.slane %v2917, %v2951
        %v2953 = vlaneseq
        %v2954 = vshrl.u32 %v2953, 7
        %v2955 = vsub.s32 0, %v2954
        %v2956 = vrot.slane %v2918, %v2955
        %v2959 = vadd.f32 %v2931, %v2952
        %v2960 = vadd.f32 %v2932, %v2952
        %v2961 = vadd.f32 %v2933, %v2952
        %v2962 = vadd.f32 %v2934, %v2952
        %v2963 = vadd.f32 %v2935, %v2952
        %v2964 = vadd.f32 %v2936, %v2952
        %v2965 = vadd.f32 %v2937, %v2952
        %v2966 = vadd.f32 %v2938, %v2952
        %v2967 = vadd.f32 %v2939, %v2956
        %v2968 = vadd.f32 %v2940, %v2956
        %v2969 = vadd.f32 %v2941, %v2956
        %v2970 = vadd.f32 %v2942, %v2956
        %v2971 = vadd.f32 %v2943, %v2956
        %v2972 = vadd.f32 %v2944, %v2956
        %v2973 = vadd.f32 %v2945, %v2956
        %v2974 = vadd.f32 %v2946, %v2956
        %v2975 = vmul.f32 %v2959, %v2629
        %v2976 = vmul.f32 %v2960, %v2630
        %v2977 = vmul.f32 %v2961, %v2631
        %v2978 = vmul.f32 %v2962, %v2632
        %v2979 = vmul.f32 %v2963, %v2633
        %v2980 = vmul.f32 %v2964, %v2634
        %v2981 = vmul.f32 %v2965, %v2635
        %v2982 = vmul.f32 %v2966, %v2636
        %v2983 = vmul.f32 %v2967, %v2637
        %v2984 = vmul.f32 %v2968, %v2638
        %v2985 = vmul.f32 %v2969, %v2639
        %v2986 = vmul.f32 %v2970, %v2640
        %v2987 = vmul.f32 %v2971, %v2641
        %v2988 = vmul.f32 %v2972, %v2642
        %v2989 = vmul.f32 %v2973, %v2643
        %v2990 = vmul.f32 %v2974, %v2644
        %v2991 = vmax.f32 %v2975, 0.0
        %v2992 = vmax.f32 %v2976, 0.0
        %v2993 = vmax.f32 %v2977, 0.0
        %v2994 = vmax.f32 %v2978, 0.0
        %v2995 = vmax.f32 %v2979, 0.0
        %v2996 = vmax.f32 %v2980, 0.0
        %v2997 = vmax.f32 %v2981, 0.0
        %v2998 = vmax.f32 %v2982, 0.0
        %v2999 = vmax.f32 %v2983, 0.0
        %v3000 = vmax.f32 %v2984, 0.0
        %v3001 = vmax.f32 %v2985, 0.0
        %v3002 = vmax.f32 %v2986, 0.0
        %v3003 = vmax.f32 %v2987, 0.0
        %v3004 = vmax.f32 %v2988, 0.0
        %v3005 = vmax.f32 %v2989, 0.0
        %v3006 = vmax.f32 %v2990, 0.0
        %v3007 = vrot.slane %v2991, 4
        %v3008 = vmax.f32 %v2991, %v3007
        %v3009 = vrot.slane %v3008, 2
        %v3010 = vmax.f32 %v3008, %v3009
        %v3011 = vrot.slane %v3010, 1
        %v3012 = vmax.f32 %v3010, %v3011
        %v3013 = vrot.slane %v2992, 4
        %v3014 = vmax.f32 %v2992, %v3013
        %v3015 = vrot.slane %v3014, 2
        %v3016 = vmax.f32 %v3014, %v3015
        %v3017 = vrot.slane %v3016, 1
        %v3018 = vmax.f32 %v3016, %v3017
        %v3019 = vrot.slane %v2993, 4
        %v3020 = vmax.f32 %v2993, %v3019
        %v3021 = vrot.slane %v3020, 2
        %v3022 = vmax.f32 %v3020, %v3021
        %v3023 = vrot.slane %v3022, 1
        %v3024 = vmax.f32 %v3022, %v3023
        %v3025 = vrot.slane %v2994, 4
        %v3026 = vmax.f32 %v2994, %v3025
        %v3027 = vrot.slane %v3026, 2
        %v3028 = vmax.f32 %v3026, %v3027
        %v3029 = vrot.slane %v3028, 1
        %v3030 = vmax.f32 %v3028, %v3029
        %v3031 = vrot.slane %v2995, 4
        %v3032 = vmax.f32 %v2995, %v3031
        %v3033 = vrot.slane %v3032, 2
        %v3034 = vmax.f32 %v3032, %v3033
        %v3035 = vrot.slane %v3034, 1
        %v3036 = vmax.f32 %v3034, %v3035
        %v3037 = vrot.slane %v2996, 4
        %v3038 = vmax.f32 %v2996, %v3037
        %v3039 = vrot.slane %v3038, 2
        %v3040 = vmax.f32 %v3038, %v3039
        %v3041 = vrot.slane %v3040, 1
        %v3042 = vmax.f32 %v3040, %v3041
        %v3043 = vrot.slane %v2997, 4
        %v3044 = vmax.f32 %v2997, %v3043
        %v3045 = vrot.slane %v3044, 2
        %v3046 = vmax.f32 %v3044, %v3045
        %v3047 = vrot.slane %v3046, 1
        %v3048 = vmax.f32 %v3046, %v3047
        %v3049 = vrot.slane %v2998, 4
        %v3050 = vmax.f32 %v2998, %v3049
        %v3051 = vrot.slane %v3050, 2
        %v3052 = vmax.f32 %v3050, %v3051
        %v3053 = vrot.slane %v3052, 1
        %v3054 = vmax.f32 %v3052, %v3053
        %v3055 = vrot.slane %v2999, 4
        %v3056 = vmax.f32 %v2999, %v3055
        %v3057 = vrot.slane %v3056, 2
        %v3058 = vmax.f32 %v3056, %v3057
        %v3059 = vrot.slane %v3058, 1
        %v3060 = vmax.f32 %v3058, %v3059
        %v3061 = vrot.slane %v3000, 4
        %v3062 = vmax.f32 %v3000, %v3061
        %v3063 = vrot.slane %v3062, 2
        %v3064 = vmax.f32 %v3062, %v3063
        %v3065 = vrot.slane %v3064, 1
        %v3066 = vmax.f32 %v3064, %v3065
        %v3067 = vrot.slane %v3001, 4
        %v3068 = vmax.f32 %v3001, %v3067
        %v3069 = vrot.slane %v3068, 2
        %v3070 = vmax.f32 %v3068, %v3069
        %v3071 = vrot.slane %v3070, 1
        %v3072 = vmax.f32 %v3070, %v3071
        %v3073 = vrot.slane %v3002, 4
        %v3074 = vmax.f32 %v3002, %v3073
        %v3075 = vrot.slane %v3074, 2
        %v3076 = vmax.f32 %v3074, %v3075
        %v3077 = vrot.slane %v3076, 1
        %v3078 = vmax.f32 %v3076, %v3077
        %v3079 = vrot.slane %v3003, 4
        %v3080 = vmax.f32 %v3003, %v3079
        %v3081 = vrot.slane %v3080, 2
        %v3082 = vmax.f32 %v3080, %v3081
        %v3083 = vrot.slane %v3082, 1
        %v3084 = vmax.f32 %v3082, %v3083
        %v3085 = vrot.slane %v3004, 4
        %v3086 = vmax.f32 %v3004, %v3085
        %v3087 = vrot.slane %v3086, 2
        %v3088 = vmax.f32 %v3086, %v3087
        %v3089 = vrot.slane %v3088, 1
        %v3090 = vmax.f32 %v3088, %v3089
        %v3091 = vrot.slane %v3005, 4
        %v3092 = vmax.f32 %v3005, %v3091
        %v3093 = vrot.slane %v3092, 2
        %v3094 = vmax.f32 %v3092, %v3093
        %v3095 = vrot.slane %v3094, 1
        %v3096 = vmax.f32 %v3094, %v3095
        %v3097 = vrot.slane %v3006, 4
        %v3098 = vmax.f32 %v3006, %v3097
        %v3099 = vrot.slane %v3098, 2
        %v3100 = vmax.f32 %v3098, %v3099
        %v3101 = vrot.slane %v3100, 1
        %v3102 = vmax.f32 %v3100, %v3101
        %vm3119 = vcmask 1041409
        %v3120 = vsel %vm3119, %v3018, %v3012
        %vm3121 = vcmask 1042434
        %v3122 = vsel %vm3121, %v3024, %v3120
        %vm3123 = vcmask 1043459
        %v3124 = vsel %vm3123, %v3030, %v3122
        %vm3125 = vcmask 1044484
        %v3126 = vsel %vm3125, %v3036, %v3124
        %vm3127 = vcmask 1045509
        %v3128 = vsel %vm3127, %v3042, %v3126
        %vm3129 = vcmask 1046534
        %v3130 = vsel %vm3129, %v3048, %v3128
        %vm3131 = vcmask 1047559
        %v3132 = vsel %vm3131, %v3054, %v3130
        %v3133 = vsel %vm3119, %v3066, %v3060
        %v3134 = vsel %vm3121, %v3072, %v3133
        %v3135 = vsel %vm3123, %v3078, %v3134
        %v3136 = vsel %vm3125, %v3084, %v3135
        %v3137 = vsel %vm3127, %v3090, %v3136
        %v3138 = vsel %vm3129, %v3096, %v3137
        %v3139 = vsel %vm3131, %v3102, %v3138
        %3142 = vst [vmem:[%s379] sm:$0xff] %v3132
        %3143 = vst [vmem:[%s379 + $0x8] sm:$0xff] %v3139
        %s3144 = sand.u32 %s239, 1
        %s3145 = scalar_lea.sflag [#allocation6], %s3144
        %s3146 = sand.u32 %s239, 1
        %s3147 = smul.addr %s3146, 16
        %s3148 = scalar_lea.vmem [#allocation9], %s3147
        // Predicated region
        $region65: #{tpu_custom_call.1} parent=55 // pred_check
          %p3149 = pneg %p249
        $region66: #{tpu_custom_call.1} parent=55 // pred_check_branch
          %3151 = sbr.rel (%p3149) target = $region68
        $region67: #{tpu_custom_call.1} parent=55 // pred_region
          %s3152 = smul.u32 2, %s32
          %s3154 = ssub.s32 256, 256
          %3155 = vsyncadd %s3145, %s3154
          %s3156 = smul.addr %s3152, 128
          %s3157 = scalar_lea.hbm %s10, %s3156
          %s3158 = sshll.u32 %s3148, 4
          %s3159 = int_to_ptr.vmem [resolvable:$true] %s3158
          %3164 = dma.vmem_to_hbm [thread:$0]  %s3159, 256, %s3157, %s3145, 128, 128, 8
        $region68: #{tpu_custom_call.1} parent=55 // pred_fallthru
          _
      $region56: #{tpu_custom_call.1} parent=5 // pred_fallthru
        _
      %p3165 = scmp.le.s32.totalorder 2, %s27
      // Predicated region
      $region69: #{tpu_custom_call.1} parent=5 // pred_check
        %p3166 = pneg %p3165
      $region70: #{tpu_custom_call.1} parent=5 // pred_check_branch
        %3168 = sbr.rel (%p3166) target = $region72
      $region71: #{tpu_custom_call.1} parent=5 // pred_region
        %s3169 = ssub.s32 %s27, 2
        // Predicated region
        $region73: #{tpu_custom_call.1} parent=71 // pred_check
          %p3170 = pneg %p255
        $region74: #{tpu_custom_call.1} parent=71 // pred_check_branch
          %3172 = sbr.rel (%p3170) target = $region76
        $region75: #{tpu_custom_call.1} parent=71 // pred_region
          %s3173 = sand.u32 %s240, 1
          %s3174 = scalar_lea.sflag [#allocation6], %s3173
          %s3175 = sand.u32 %s240, 1
          %s3176 = smul.addr %s3175, 16
          %s3177 = scalar_lea.vmem [#allocation9], %s3176
          %3178 = dma.done %s3174, 256
        $region76: #{tpu_custom_call.1} parent=71 // pred_fallthru
          _
      $region72: #{tpu_custom_call.1} parent=5 // pred_fallthru
        _
    $region6: #{tpu_custom_call.1} parent=1 // loop_footer
      %s31 = sadd.s32 1, %s27
    $region7: #{tpu_custom_call.1} parent=1 // loop_footer_branch
      %26 = sbr.rel target = $region3
    $region8: #{tpu_custom_call.1} parent=1 // loop_exit
      _
    %3179 = vsyncpa [#allocation5], 1
    %s3180 = scalar_lea.sflag [#allocation5], 1
    %3181 = vsyncpa %s3180, 1
    %3182 = vsyncpa [#allocation8], 1
    %3183 = vsyncpa [#allocation6], 1
    %s3184 = scalar_lea.sflag [#allocation6], 1
    %3185 = vsyncpa %s3184, 1

// kernel: tpu_custom_call.1
$region0: #{tpu_custom_call.1}
  #allocation0 [shape = 'u32[]', space=smem, size = 0x4, offset = 0x4, fixed_abs, tag = 'smem constant byte address 0x4 - core index']
  #allocation1 [shape = 'u32[144,128]{1,0:T(1,128)}', space=vmem, size = 0x12000, scoped, tag = 'internal scratch']
  #allocation2 [shape = 's32[1]{0}', space=sflag, size = 0x4, scoped, tag = 'scoped memory for tpu_custom_call.1']
  #allocation3 [shape = 'u8[512]{0}', space=smem, size = 0x200, scoped, tag = 'prefetched SMEM operand 0']
  %s0 = inlined_call_operand.vmem [shape: s32[4], index: 0, kind: input, shape index: {}]
  %s1 = inlined_call_operand.vmem [shape: f32[4,8,2], index: 1, kind: input, shape index: {}]
  %s2 = inlined_call_operand.vmem [shape: bf16[4,8,32], index: 2, kind: input, shape index: {}]
  %s3 = inlined_call_operand.vmem [shape: f32[2,512], index: 3, kind: input, shape index: {}]
  %s4 = inlined_call_operand.hbm [shape: bf16[32,512], index: 4, kind: input, shape index: {}]
  %s5 = inlined_call_operand.vmem [shape: f32[1,512], index: 5, kind: input, shape index: {}]
  %s6 = inlined_call_operand.vmem [shape: f32[1,512], index: 6, kind: input, shape index: {}]
  %s7 = inlined_call_operand.hbm [shape: bf16[512,128], index: 7, kind: input, shape index: {}]
  %s8 = inlined_call_operand.vmem [shape: f32[1,128], index: 8, kind: input, shape index: {}]
  %s9 = inlined_call_operand.vmem [shape: f32[1,128], index: 9, kind: input, shape index: {}]
  %s10 = inlined_call_operand.hbm [shape: f32[4,8,128], index: 10, kind: output, shape index: {}]
  %s11 = sld [smem:[#allocation0]]
  $region77: #{tpu_custom_call.1} parent=0
    _
  %s13 = ssub.s32 1, %s11
  %s14 = scalar_select 0, %s13, %s11
  %s15 = sshll.u32 %s0, 4
  %s16 = int_to_ptr.vmem [resolvable:$true] %s15
  %18 = dma.vmem_to_smem %s16, 16, [#allocation3], [#allocation2]
  %19 = dma.done [#allocation2], 16
  %20 = sfence
  $region1: #{tpu_custom_call.1} parent=0
    #allocation4 [shape = 'u8[32768]{0}', space=vmem, size = 0x8000, scoped, tag = 'input window, operand 4, single buffered']
    #allocation5 [shape = 's32[2]{0}', space=sflag, size = 0x8, scoped, tag = 'scoped memory for tpu_custom_call.1']
    #allocation6 [shape = 's32[2]{0}', space=sflag, size = 0x8, scoped, tag = 'scoped memory for tpu_custom_call.1']
    #allocation7 [shape = 'u8[131072]{0}', space=vmem, size = 0x20000, scoped, tag = 'input window, operand 7, single buffered']
    #allocation8 [shape = 's32[1]{0}', space=sflag, size = 0x4, scoped, tag = 'scoped memory for tpu_custom_call.1']
    #allocation9 [shape = 'u8[16384]{0}', space=vmem, size = 0x4000, scoped, tag = 'output window, operand 0']
    %21 = vsyncpa [#allocation5], 0
    %22 = vsyncpa [#allocation8], 0
    %23 = vsyncpa [#allocation6], 0
    %s24 = scalar_lea.sflag [#allocation6], 1
    %25 = vsyncpa %s24, 0
    loop: start=0, step=1, limit=4
    $region2: #{tpu_custom_call.1} parent=1 // loop_pre_header
      _
    $region3: #{tpu_custom_call.1} parent=1 // loop_header
      %s27 = sphi 0, %s31
      %p28 = scmp.ge.s32.totalorder %s27, 4
      %s37 = sphi 0, %s39
      %s40 = sphi 0, %s37
      %s41 = sphi 0, %s40
      %s57 = sphi 0, %s41
      %s63 = sphi 0, %s65
      %s66 = sphi 0, %s63
      %s67 = sphi 0, %s66
      %s83 = sphi 0, %s67
      %s87 = sphi 0, %s87
      %s89 = sphi 0, %s87
      %s90 = sphi 0, %s89
      %s104 = sphi 0, %s90
      %s108 = sphi 0, %s108
      %s110 = sphi 0, %s108
      %s111 = sphi 0, %s110
      %s125 = sphi 0, %s111
      %s129 = sphi 0, %s129
      %s131 = sphi 0, %s129
      %s132 = sphi 0, %s131
      %s146 = sphi 0, %s132
      %s150 = sphi 0, %s150
      %s152 = sphi 0, %s150
      %s153 = sphi 0, %s152
      %s167 = sphi 0, %s153
      %s171 = sphi 0, %s171
      %s173 = sphi 0, %s171
      %s174 = sphi 0, %s173
      %s188 = sphi 0, %s174
      %s192 = sphi 0, %s192
      %s194 = sphi 0, %s192
      %s195 = sphi 0, %s194
      %s209 = sphi 0, %s195
      %s213 = sphi 0, %s213
      %s215 = sphi 0, %s213
      %s216 = sphi 0, %s215
      %s230 = sphi 0, %s216
      %s236 = sphi 0, %s238
      %s239 = sphi 0, %s236
      %s240 = sphi 0, %s239
      %s256 = sphi 0, %s240
    $region4: #{tpu_custom_call.1} parent=1 // loop_header_branch
      %30 = sbr.rel (%p28) target = $region8
    $region5: #{tpu_custom_call.1} parent=1 // loop_body
      %s32 = ssub.s32 %s27, 1
      %s33 = ssub.s32 %s27, 2
      %s34 = sadd.s32 %s27, 1
      %s35 = ssub.s32 %s27, %s34
      %p36 = scmp.eq.s32.totalorder %s35, 0
      %s38 = sadd.s32 %s37, 1
      %s39 = scalar_select %p36, %s37, %s38
      %p42 = pneg %p36
      %p43 = scmp.eq.s32.totalorder %s27, 1
      %p44 = por %p42, %p43
      %p45 = scmp.ne.s32.totalorder %s37, %s40
      %p46 = scmp.eq.s32.totalorder %s27, 0
      %p47 = por %p45, %p46
      %p48 = scmp.ne.s32.totalorder %s37, %s40
      %p49 = scmp.eq.s32.totalorder %s32, 1
      %p50 = por %p48, %p49
      %p51 = scmp.ne.s32.totalorder %s40, %s41
      %p52 = scmp.eq.s32.totalorder %s32, 0
      %p53 = por %p51, %p52
      %p54 = scmp.ne.s32.totalorder %s40, %s41
      %p55 = scmp.eq.s32.totalorder %s33, 1
      %p56 = por %p54, %p55
      %p58 = scmp.ne.s32.totalorder %s41, %s57
      %p59 = scmp.eq.s32.totalorder %s33, 0
      %p60 = por %p58, %p59
      %s61 = ssub.s32 %s27, %s34
      %p62 = scmp.eq.s32.totalorder %s61, 0
      %s64 = sadd.s32 %s63, 1
      %s65 = scalar_select %p62, %s63, %s64
      %p68 = pneg %p62
      %p69 = scmp.eq.s32.totalorder %s27, 1
      %p70 = por %p68, %p69
      %p71 = scmp.ne.s32.totalorder %s63, %s66
      %p72 = scmp.eq.s32.totalorder %s27, 0
      %p73 = por %p71, %p72
      %p74 = scmp.ne.s32.totalorder %s63, %s66
      %p75 = scmp.eq.s32.totalorder %s32, 1
      %p76 = por %p74, %p75
      %p77 = scmp.ne.s32.totalorder %s66, %s67
      %p78 = scmp.eq.s32.totalorder %s32, 0
      %p79 = por %p77, %p78
      %p80 = scmp.ne.s32.totalorder %s66, %s67
      %p81 = scmp.eq.s32.totalorder %s33, 1
      %p82 = por %p80, %p81
      %p84 = scmp.ne.s32.totalorder %s67, %s83
      %p85 = scmp.eq.s32.totalorder %s33, 0
      %p86 = por %p84, %p85
      %s88 = sadd.s32 %s87, 1
      %p91 = scmp.eq.s32.totalorder %s27, 1
      %p92 = scmp.ne.s32.totalorder %s87, %s89
      %p93 = scmp.eq.s32.totalorder %s27, 0
      %p94 = por %p92, %p93
      %p95 = scmp.ne.s32.totalorder %s87, %s89
      %p96 = scmp.eq.s32.totalorder %s32, 1
      %p97 = por %p95, %p96
      %p98 = scmp.ne.s32.totalorder %s89, %s90
      %p99 = scmp.eq.s32.totalorder %s32, 0
      %p100 = por %p98, %p99
      %p101 = scmp.ne.s32.totalorder %s89, %s90
      %p102 = scmp.eq.s32.totalorder %s33, 1
      %p103 = por %p101, %p102
      %p105 = scmp.ne.s32.totalorder %s90, %s104
      %p106 = scmp.eq.s32.totalorder %s33, 0
      %p107 = por %p105, %p106
      %s109 = sadd.s32 %s108, 1
      %p112 = scmp.eq.s32.totalorder %s27, 1
      %p113 = scmp.ne.s32.totalorder %s108, %s110
      %p114 = scmp.eq.s32.totalorder %s27, 0
      %p115 = por %p113, %p114
      %p116 = scmp.ne.s32.totalorder %s108, %s110
      %p117 = scmp.eq.s32.totalorder %s32, 1
      %p118 = por %p116, %p117
      %p119 = scmp.ne.s32.totalorder %s110, %s111
      %p120 = scmp.eq.s32.totalorder %s32, 0
      %p121 = por %p119, %p120
      %p122 = scmp.ne.s32.totalorder %s110, %s111
      %p123 = scmp.eq.s32.totalorder %s33, 1
      %p124 = por %p122, %p123
      %p126 = scmp.ne.s32.totalorder %s111, %s125
      %p127 = scmp.eq.s32.totalorder %s33, 0
      %p128 = por %p126, %p127
      %s130 = sadd.s32 %s129, 1
      %p133 = scmp.eq.s32.totalorder %s27, 1
      %p134 = scmp.ne.s32.totalorder %s129, %s131
      %p135 = scmp.eq.s32.totalorder %s27, 0
      %p136 = por %p134, %p135
      %p137 = scmp.ne.s32.totalorder %s129, %s131
      %p138 = scmp.eq.s32.totalorder %s32, 1
      %p139 = por %p137, %p138
      %p140 = scmp.ne.s32.totalorder %s131, %s132
      %p141 = scmp.eq.s32.totalorder %s32, 0
      %p142 = por %p140, %p141
      %p143 = scmp.ne.s32.totalorder %s131, %s132
      %p144 = scmp.eq.s32.totalorder %s33, 1
      %p145 = por %p143, %p144
      %p147 = scmp.ne.s32.totalorder %s132, %s146
      %p148 = scmp.eq.s32.totalorder %s33, 0
      %p149 = por %p147, %p148
      %s151 = sadd.s32 %s150, 1
      %p154 = scmp.eq.s32.totalorder %s27, 1
      %p155 = scmp.ne.s32.totalorder %s150, %s152
      %p156 = scmp.eq.s32.totalorder %s27, 0
      %p157 = por %p155, %p156
      %p158 = scmp.ne.s32.totalorder %s150, %s152
      %p159 = scmp.eq.s32.totalorder %s32, 1
      %p160 = por %p158, %p159
      %p161 = scmp.ne.s32.totalorder %s152, %s153
      %p162 = scmp.eq.s32.totalorder %s32, 0
      %p163 = por %p161, %p162
      %p164 = scmp.ne.s32.totalorder %s152, %s153
      %p165 = scmp.eq.s32.totalorder %s33, 1
      %p166 = por %p164, %p165
      %p168 = scmp.ne.s32.totalorder %s153, %s167
      %p169 = scmp.eq.s32.totalorder %s33, 0
      %p170 = por %p168, %p169
      %s172 = sadd.s32 %s171, 1
      %p175 = scmp.eq.s32.totalorder %s27, 1
      %p176 = scmp.ne.s32.totalorder %s171, %s173
      %p177 = scmp.eq.s32.totalorder %s27, 0
      %p178 = por %p176, %p177
      %p179 = scmp.ne.s32.totalorder %s171, %s173
      %p180 = scmp.eq.s32.totalorder %s32, 1
      %p181 = por %p179, %p180
      %p182 = scmp.ne.s32.totalorder %s173, %s174
      %p183 = scmp.eq.s32.totalorder %s32, 0
      %p184 = por %p182, %p183
      %p185 = scmp.ne.s32.totalorder %s173, %s174
      %p186 = scmp.eq.s32.totalorder %s33, 1
      %p187 = por %p185, %p186
      %p189 = scmp.ne.s32.totalorder %s174, %s188
      %p190 = scmp.eq.s32.totalorder %s33, 0
      %p191 = por %p189, %p190
      %s193 = sadd.s32 %s192, 1
      %p196 = scmp.eq.s32.totalorder %s27, 1
      %p197 = scmp.ne.s32.totalorder %s192, %s194
      %p198 = scmp.eq.s32.totalorder %s27, 0
      %p199 = por %p197, %p198
      %p200 = scmp.ne.s32.totalorder %s192, %s194
      %p201 = scmp.eq.s32.totalorder %s32, 1
      %p202 = por %p200, %p201
      %p203 = scmp.ne.s32.totalorder %s194, %s195
      %p204 = scmp.eq.s32.totalorder %s32, 0
      %p205 = por %p203, %p204
      %p206 = scmp.ne.s32.totalorder %s194, %s195
      %p207 = scmp.eq.s32.totalorder %s33, 1
      %p208 = por %p206, %p207
      %p210 = scmp.ne.s32.totalorder %s195, %s209
      %p211 = scmp.eq.s32.totalorder %s33, 0
      %p212 = por %p210, %p211
      %s214 = sadd.s32 %s213, 1
      %p217 = scmp.eq.s32.totalorder %s27, 1
      %p218 = scmp.ne.s32.totalorder %s213, %s215
      %p219 = scmp.eq.s32.totalorder %s27, 0
      %p220 = por %p218, %p219
      %p221 = scmp.ne.s32.totalorder %s213, %s215
      %p222 = scmp.eq.s32.totalorder %s32, 1
      %p223 = por %p221, %p222
      %p224 = scmp.ne.s32.totalorder %s215, %s216
      %p225 = scmp.eq.s32.totalorder %s32, 0
      %p226 = por %p224, %p225
      %p227 = scmp.ne.s32.totalorder %s215, %s216
      %p228 = scmp.eq.s32.totalorder %s33, 1
      %p229 = por %p227, %p228
      %p231 = scmp.ne.s32.totalorder %s216, %s230
      %p232 = scmp.eq.s32.totalorder %s33, 0
      %p233 = por %p231, %p232
      %s234 = ssub.s32 %s27, %s34
      %p235 = scmp.eq.s32.totalorder %s234, 0
      %s237 = sadd.s32 %s236, 1
      %s238 = scalar_select %p235, %s236, %s237
      %p241 = pneg %p235
      %p242 = scmp.eq.s32.totalorder %s27, 1
      %p243 = por %p241, %p242
      %p244 = scmp.ne.s32.totalorder %s236, %s239
      %p245 = scmp.eq.s32.totalorder %s27, 0
      %p246 = por %p244, %p245
      %p247 = scmp.ne.s32.totalorder %s236, %s239
      %p248 = scmp.eq.s32.totalorder %s32, 1
      %p249 = por %p247, %p248
      %p250 = scmp.ne.s32.totalorder %s239, %s240
      %p251 = scmp.eq.s32.totalorder %s32, 0
      %p252 = por %p250, %p251
      %p253 = scmp.ne.s32.totalorder %s239, %s240
      %p254 = scmp.eq.s32.totalorder %s33, 1
      %p255 = por %p253, %p254
      %p257 = scmp.ne.s32.totalorder %s240, %s256
      %p258 = scmp.eq.s32.totalorder %s33, 0
      %p259 = por %p257, %p258
      %p260 = scmp.le.s32.totalorder 1, %s27
      %p261 = scmp.lt.s32.totalorder %s27, 3
      %p262 = pnand %p260, %p261
      %p263 = pneg %p262
      // Predicated region
      $region9: #{tpu_custom_call.1} parent=5 // pred_check
        _
      $region10: #{tpu_custom_call.1} parent=5 // pred_check_branch
        %265 = sbr.rel (%p262) target = $region12
      $region11: #{tpu_custom_call.1} parent=5 // pred_region
        %s266 = ssub.s32 %s27, 1
        // Predicated region
        $region13: #{tpu_custom_call.1} parent=11 // pred_check
          %p267 = pneg %p100
        $region14: #{tpu_custom_call.1} parent=11 // pred_check_branch
          %269 = sbr.rel (%p267) target = $region16
        $region15: #{tpu_custom_call.1} parent=11 // pred_region
          _
        $region16: #{tpu_custom_call.1} parent=11 // pred_fallthru
          _
        // Predicated region
        $region17: #{tpu_custom_call.1} parent=11 // pred_check
          %p270 = pneg %p121
        $region18: #{tpu_custom_call.1} parent=11 // pred_check_branch
          %272 = sbr.rel (%p270) target = $region20
        $region19: #{tpu_custom_call.1} parent=11 // pred_region
          %s274 = ssub.s32 1024, 1024
          %275 = vsyncadd [#allocation5], %s274
          %s276 = sshll.u32 [#allocation4], 4
          %s277 = int_to_ptr.vmem [resolvable:$true] %s276
          %282 = dma.hbm_to_vmem [thread:$0]  %s4, 1024, %s277, [#allocation5], 256, 256, 16
        $region20: #{tpu_custom_call.1} parent=11 // pred_fallthru
          _
        // Predicated region
        $region21: #{tpu_custom_call.1} parent=11 // pred_check
          %p283 = pneg %p142
        $region22: #{tpu_custom_call.1} parent=11 // pred_check_branch
          %285 = sbr.rel (%p283) target = $region24
        $region23: #{tpu_custom_call.1} parent=11 // pred_region
          _
        $region24: #{tpu_custom_call.1} parent=11 // pred_fallthru
          _
        // Predicated region
        $region25: #{tpu_custom_call.1} parent=11 // pred_check
          %p286 = pneg %p163
        $region26: #{tpu_custom_call.1} parent=11 // pred_check_branch
          %288 = sbr.rel (%p286) target = $region28
        $region27: #{tpu_custom_call.1} parent=11 // pred_region
          _
        $region28: #{tpu_custom_call.1} parent=11 // pred_fallthru
          _
        // Predicated region
        $region29: #{tpu_custom_call.1} parent=11 // pred_check
          %p289 = pneg %p184
        $region30: #{tpu_custom_call.1} parent=11 // pred_check_branch
          %291 = sbr.rel (%p289) target = $region32
        $region31: #{tpu_custom_call.1} parent=11 // pred_region
          %s293 = ssub.s32 4096, 4096
          %294 = vsyncadd [#allocation8], %s293
          %s295 = sshll.u32 [#allocation7], 4
          %s296 = int_to_ptr.vmem [resolvable:$true] %s295
          %301 = dma.hbm_to_vmem [thread:$0]  %s7, 4096, %s296, [#allocation8], 64, 64, 4
        $region32: #{tpu_custom_call.1} parent=11 // pred_fallthru
          _
        // Predicated region
        $region33: #{tpu_custom_call.1} parent=11 // pred_check
          %p302 = pneg %p205
        $region34: #{tpu_custom_call.1} parent=11 // pred_check_branch
          %304 = sbr.rel (%p302) target = $region36
        $region35: #{tpu_custom_call.1} parent=11 // pred_region
          _
        $region36: #{tpu_custom_call.1} parent=11 // pred_fallthru
          _
        // Predicated region
        $region37: #{tpu_custom_call.1} parent=11 // pred_check
          %p305 = pneg %p226
        $region38: #{tpu_custom_call.1} parent=11 // pred_check_branch
          %307 = sbr.rel (%p305) target = $region40
        $region39: #{tpu_custom_call.1} parent=11 // pred_region
          _
        $region40: #{tpu_custom_call.1} parent=11 // pred_fallthru
          _
      $region12: #{tpu_custom_call.1} parent=5 // pred_fallthru
        _
      %p308 = scmp.lt.s32.totalorder %s27, 2
      // Predicated region
      $region41: #{tpu_custom_call.1} parent=5 // pred_check
        %p309 = pneg %p308
      $region42: #{tpu_custom_call.1} parent=5 // pred_check_branch
        %311 = sbr.rel (%p309) target = $region44
      $region43: #{tpu_custom_call.1} parent=5 // pred_region
        // Predicated region
        $region45: #{tpu_custom_call.1} parent=43 // pred_check
          %p312 = pneg %p47
        $region46: #{tpu_custom_call.1} parent=43 // pred_check_branch
          %314 = sbr.rel (%p312) target = $region48
        $region47: #{tpu_custom_call.1} parent=43 // pred_region
          %s315 = smul.u32 2, %s27
          %p316 = scmp.lt.s32.totalorder %s315, 3
          %s317 = scalar_select %p316, %s315, 3
          %s318 = smul.addr %s317, 8
          %s319 = scalar_lea.vmem %s1, %s318
          %s320 = smul.u32 2, %s27
        $region48: #{tpu_custom_call.1} parent=43 // pred_fallthru
          _
        // Predicated region
        $region49: #{tpu_custom_call.1} parent=43 // pred_check
          %p321 = pneg %p73
        $region50: #{tpu_custom_call.1} parent=43 // pred_check_branch
          %323 = sbr.rel (%p321) target = $region52
        $region51: #{tpu_custom_call.1} parent=43 // pred_region
          %s324 = smul.u32 2, %s27
          %p325 = scmp.lt.s32.totalorder %s324, 3
          %s326 = scalar_select %p325, %s324, 3
          %s327 = smul.addr %s326, 4
          %s328 = scalar_lea.vmem %s2, %s327
          %s329 = smul.u32 2, %s27
        $region52: #{tpu_custom_call.1} parent=43 // pred_fallthru
          _
      $region44: #{tpu_custom_call.1} parent=5 // pred_fallthru
        _
      %p330 = scmp.le.s32.totalorder 1, %s27
      %p331 = scmp.lt.s32.totalorder %s27, 3
      %p332 = pnand %p330, %p331
      %p333 = pneg %p332
      // Predicated region
      $region53: #{tpu_custom_call.1} parent=5 // pred_check
        _
      $region54: #{tpu_custom_call.1} parent=5 // pred_check_branch
        %335 = sbr.rel (%p332) target = $region56
      $region55: #{tpu_custom_call.1} parent=5 // pred_region
        %s336 = ssub.s32 %s27, 1
        // Predicated region
        $region57: #{tpu_custom_call.1} parent=55 // pred_check
          %p337 = pneg %p121
        $region58: #{tpu_custom_call.1} parent=55 // pred_check_branch
          %339 = sbr.rel (%p337) target = $region60
        $region59: #{tpu_custom_call.1} parent=55 // pred_region
          %340 = dma.done [#allocation5], 1024
        $region60: #{tpu_custom_call.1} parent=55 // pred_fallthru
          _
        // Predicated region
        $region61: #{tpu_custom_call.1} parent=55 // pred_check
          %p341 = pneg %p184
        $region62: #{tpu_custom_call.1} parent=55 // pred_check_branch
          %343 = sbr.rel (%p341) target = $region64
        $region63: #{tpu_custom_call.1} parent=55 // pred_region
          %344 = dma.done [#allocation8], 4096
        $region64: #{tpu_custom_call.1} parent=55 // pred_fallthru
          _
        %s345 = smul.u32 2, %s32
        %p346 = scmp.lt.s32.totalorder %s345, 3
        %s347 = scalar_select %p346, %s345, 3
        %s348 = smul.addr %s347, 8
        %s349 = scalar_lea.vmem %s1, %s348
        %p350 = pneg %p53
        %p351 = pneg %p50
        %s352 = smul.u32 2, %s32
        %p353 = scmp.lt.s32.totalorder %s352, 3
        %s354 = scalar_select %p353, %s352, 3
        %s355 = smul.addr %s354, 4
        %s356 = scalar_lea.vmem %s2, %s355
        %p357 = pneg %p79
        %p358 = pneg %p76
        %p359 = pneg %p100
        %p360 = pneg %p97
        %p361 = pneg %p121
        %p362 = pneg %p118
        %p363 = pneg %p142
        %p364 = pneg %p139
        %p365 = pneg %p163
        %p366 = pneg %p160
        %p367 = pneg %p184
        %p368 = pneg %p181
        %p369 = pneg %p205
        %p370 = pneg %p202
        %p371 = pneg %p226
        %p372 = pneg %p223
        %p373 = pneg %p252
        %p374 = pneg %p249
        %s375 = sand.u32 %s239, 1
        %s376 = scalar_lea.sflag [#allocation6], %s375
        %s377 = sand.u32 %s239, 1
        %s378 = smul.addr %s377, 16
        %s379 = scalar_lea.vmem [#allocation9], %s378
        %s380 = smul.u32 2, %s32
        %p381 = scmp.lt.s32.totalorder %s380, 3
        %s382 = scalar_select %p381, %s380, 3
        %s383 = smul.addr %s382, 8
        %s384 = scalar_lea.vmem %s1, %s383
        %s385 = smul.u32 2, %s32
        %s386 = smul.u32 2, %s32
        %p387 = scmp.lt.s32.totalorder %s386, 3
        %s388 = scalar_select %p387, %s386, 3
        %s389 = smul.addr %s388, 4
        %s390 = scalar_lea.vmem %s2, %s389
        %s391 = smul.u32 2, %s32
        %s392 = smul.u32 2, %s32
        %s394 = smul.u32 %s32, 2
        %v395 = vlaneseq
        %v396 = vshrl.u32 %v395, 7
        %vm397 = vcmp.eq.s32.totalorder %v396, 0
        %s398 = sld [smem:[#allocation3 + %s394]]
        %v399 = vstv %s398
        %v400 = vsel %vm397, %v399, 0
        %vm401 = vcmp.eq.s32.totalorder %v396, 1
        %s402 = sadd.s32 %s394, 1
        %s403 = sld [smem:[#allocation3 + %s402]]
        %v404 = vstv %s403
        %v405 = vsel %vm401, %v404, %v400
        %v406 = vcvt.s32.f32 %v405
        %v408 = vlaneseq
        %v409 = vshrl.u32 %v408, 7
        %v410 = vsub.s32 0, %v409
        %v411 = vrot.slane %v406, %v410
        %v412 = vlaneseq
        %v413 = vshrl.u32 %v412, 7
        %v414 = vsub.s32 1, %v413
        %v415 = vrot.slane %v406, %v414
        %v418 = vrcp.pop %v411
        %v419 = vmul.f32 1.0, %v418
        %v420 = vrcp.pop %v415
        %v421 = vmul.f32 1.0, %v420
        %v422 = vmul.f32 %v419, %v419
        %v423 = vmul.f32 %v421, %v421
        %v424 = vld [vmem:[%s384] sm:$0xff]
        %v425 = vld [vmem:[%s384 + $0x8] sm:$0xff]
        %v426 = vld [vmem:[%s3] sm:$0xff]
        %428 = vset.pattern.permute.xlu0 0
        %429 = vperm.xlu0 %428, %v424
        %v430 = vpop.permute.xlu0 %429
        %433 = vset.pattern.permute.xlu0 0
        %434 = vperm.xlu0 %433, %v425
        %v435 = vpop.permute.xlu0 %434
        %v438 = vlaneseq
        %v439 = vshrl.u32 %v438, 7
        %v440 = vsub.s32 0, %v439
        %v441 = vrot.slane %v426, %v440
        %v442 = vlaneseq
        %v443 = vshrl.u32 %v442, 7
        %v444 = vsub.s32 2, %v443
        %v445 = vrot.slane %v426, %v444
        %v446 = vlaneseq
        %v447 = vshrl.u32 %v446, 7
        %v448 = vsub.s32 4, %v447
        %v449 = vrot.slane %v426, %v448
        %v450 = vlaneseq
        %v451 = vshrl.u32 %v450, 7
        %v452 = vsub.s32 6, %v451
        %v453 = vrot.slane %v426, %v452
        %v458 = vlaneseq
        %v459 = vshrl.u32 %v458, 7
        %v460 = vsub.s32 0, %v459
        %v461 = vrot.slane %v441, %v460
        %v462 = vlaneseq
        %v463 = vshrl.u32 %v462, 7
        %v464 = vsub.s32 0, %v463
        %v465 = vrot.slane %v445, %v464
        %v466 = vlaneseq
        %v467 = vshrl.u32 %v466, 7
        %v468 = vsub.s32 0, %v467
        %v469 = vrot.slane %v449, %v468
        %v470 = vlaneseq
        %v471 = vshrl.u32 %v470, 7
        %v472 = vsub.s32 0, %v471
        %v473 = vrot.slane %v453, %v472
        %v474 = vmul.f32 %v430, %v461
        %v475 = vmul.f32 %v430, %v465
        %v476 = vmul.f32 %v430, %v469
        %v477 = vmul.f32 %v430, %v473
        %v478 = vmul.f32 %v435, %v461
        %v479 = vmul.f32 %v435, %v465
        %v480 = vmul.f32 %v435, %v469
        %v481 = vmul.f32 %v435, %v473
        %482 = vset.pattern.permute.xlu0 1
        %483 = vperm.xlu0 %482, %v424
        %v484 = vpop.permute.xlu0 %483
        %486 = vset.pattern.permute.xlu0 1
        %487 = vperm.xlu0 %486, %v425
        %v488 = vpop.permute.xlu0 %487
        %v490 = vlaneseq
        %v491 = vshrl.u32 %v490, 7
        %v492 = vsub.s32 1, %v491
        %v493 = vrot.slane %v426, %v492
        %v494 = vlaneseq
        %v495 = vshrl.u32 %v494, 7
        %v496 = vsub.s32 3, %v495
        %v497 = vrot.slane %v426, %v496
        %v498 = vlaneseq
        %v499 = vshrl.u32 %v498, 7
        %v500 = vsub.s32 5, %v499
        %v501 = vrot.slane %v426, %v500
        %v502 = vlaneseq
        %v503 = vshrl.u32 %v502, 7
        %v504 = vsub.s32 7, %v503
        %v505 = vrot.slane %v426, %v504
        %v510 = vlaneseq
        %v511 = vshrl.u32 %v510, 7
        %v512 = vsub.s32 1, %v511
        %v513 = vrot.slane %v493, %v512
        %v514 = vlaneseq
        %v515 = vshrl.u32 %v514, 7
        %v516 = vsub.s32 1, %v515
        %v517 = vrot.slane %v497, %v516
        %v518 = vlaneseq
        %v519 = vshrl.u32 %v518, 7
        %v520 = vsub.s32 1, %v519
        %v521 = vrot.slane %v501, %v520
        %v522 = vlaneseq
        %v523 = vshrl.u32 %v522, 7
        %v524 = vsub.s32 1, %v523
        %v525 = vrot.slane %v505, %v524
        %v526 = vmul.f32 %v484, %v513
        %v527 = vmul.f32 %v484, %v517
        %v528 = vmul.f32 %v484, %v521
        %v529 = vmul.f32 %v484, %v525
        %v530 = vmul.f32 %v488, %v513
        %v531 = vmul.f32 %v488, %v517
        %v532 = vmul.f32 %v488, %v521
        %v533 = vmul.f32 %v488, %v525
        %v534 = vadd.f32 %v474, %v526
        %v535 = vadd.f32 %v475, %v527
        %v536 = vadd.f32 %v476, %v528
        %v537 = vadd.f32 %v477, %v529
        %v538 = vadd.f32 %v478, %v530
        %v539 = vadd.f32 %v479, %v531
        %v540 = vadd.f32 %v480, %v532
        %v541 = vadd.f32 %v481, %v533
        %v542 = vld [vmem:[%s390] sm:$0xf]
        %v543 = vld [vmem:[%s390 + $0x4] sm:$0xf]
        %v544 = vld [vmem:[#allocation4] sm:$0xff]
        %v545 = vld [vmem:[#allocation4 + $0x8] sm:$0xff]
        %v546 = vld [vmem:[#allocation4 + $0x10] sm:$0xff]
        %v547 = vld [vmem:[#allocation4 + $0x18] sm:$0xff]
        %v548 = vld [vmem:[#allocation4 + $0x20] sm:$0xff]
        %v549 = vld [vmem:[#allocation4 + $0x28] sm:$0xff]
        %v550 = vld [vmem:[#allocation4 + $0x30] sm:$0xff]
        %v551 = vld [vmem:[#allocation4 + $0x38] sm:$0xff]
        %v554 = vunpack.c.l.b16 %v542
        %v555 = vunpack.c.l.b16 %v543
        %v556 = vpack.c.b16 %v555, %v554
        %v565 = vunpack.c.l.b16 %v544
        %v566 = vunpack.c.h.b16 %v544
        %v567 = vunpack.c.l.b16 %v545
        %v568 = vunpack.c.h.b16 %v545
        %v569 = vunpack.c.l.b16 %v546
        %v570 = vunpack.c.h.b16 %v546
        %v571 = vunpack.c.l.b16 %v547
        %v572 = vunpack.c.h.b16 %v547
        %v573 = vunpack.c.l.b16 %v548
        %v574 = vunpack.c.h.b16 %v548
        %v575 = vunpack.c.l.b16 %v549
        %v576 = vunpack.c.h.b16 %v549
        %v577 = vunpack.c.l.b16 %v550
        %v578 = vunpack.c.h.b16 %v550
        %v579 = vunpack.c.l.b16 %v551
        %v580 = vunpack.c.h.b16 %v551
        %v581 = vpack.c.b16 %v569, %v565
        %v582 = vpack.c.b16 %v570, %v566
        %v583 = vpack.c.b16 %v571, %v567
        %v584 = vpack.c.b16 %v572, %v568
        %v585 = vpack.c.b16 %v577, %v573
        %v586 = vpack.c.b16 %v578, %v574
        %v587 = vpack.c.b16 %v579, %v575
        %v588 = vpack.c.b16 %v580, %v576
        %vm597 = vcmask 261120
        %v599 = vsel %vm597, %v556, 0
        %601 = vmatprep.subr.bf16.mxu0 %v582
        %602 = vmatpush1.bf16.msra.mxu0 %v581
        %603 = vmatprep.subr.bf16.mxu0 %v586
        %604 = vmatpush1.bf16.msra.mxu0 %v585
        %605 = vmatprep.subr.bf16.mxu0 0
        %606 = vmatpush1.bf16.msra.mxu0 0
        %607 = vmatprep.subr.bf16.mxu0 0
        %608 = vmatpush1.bf16.msra.mxu0 0
        %609 = vmatprep.subr.bf16.mxu0 0
        %610 = vmatpush1.bf16.msra.mxu0 0
        %611 = vmatprep.subr.bf16.mxu0 0
        %612 = vmatpush1.bf16.msra.mxu0 0
        %613 = vmatprep.subr.bf16.mxu0 0
        %614 = vmatpush1.bf16.msra.mxu0 0
        %615 = vmatprep.subr.bf16.mxu0 0
        %616 = vmatpush1.bf16.msra.mxu0 0
        %617 = vmatprep.subr.bf16.mxu0 0
        %618 = vmatpush1.bf16.msra.mxu0 0
        %619 = vmatprep.subr.bf16.mxu0 0
        %620 = vmatpush1.bf16.msra.mxu0 0
        %621 = vmatprep.subr.bf16.mxu0 0
        %622 = vmatpush1.bf16.msra.mxu0 0
        %623 = vmatprep.subr.bf16.mxu0 0
        %624 = vmatpush1.bf16.msra.mxu0 0
        %625 = vmatprep.subr.bf16.mxu0 0
        %626 = vmatpush1.bf16.msra.mxu0 0
        %627 = vmatprep.subr.bf16.mxu0 0
        %628 = vmatpush1.bf16.msra.mxu0 0
        %629 = vmatprep.subr.bf16.mxu0 0
        %630 = vmatpush1.bf16.msra.mxu0 0
        %631 = vmatprep.subr.bf16.mxu0 0
        %632 = vmatpush1.bf16.msra.mxu0 0
        %633 = vmatprep.mubr.bf16.mxu0 0
        %634 = vmatmul.mubr.bf16.gmra.mrb[0].mxu0 %v599
        %v635 = vpop.f32.mrb[0].mxu0
        %v636 = vadd.f32 0.0, %v635
        %v637 = vpop.f32.mrb[0].mxu0
        %v638 = vadd.f32 0.0, %v637
        %v639 = vpop.f32.mrb[0].mxu0
        %v640 = vadd.f32 0.0, %v639
        %v641 = vpop.f32.mrb[0].mxu0
        %v642 = vadd.f32 0.0, %v641
        %643 = vdwg.mxu0
        %644 = vmatprep.subr.bf16.mxu0 %v584
        %645 = vmatpush1.bf16.msra.mxu0 %v583
        %646 = vmatprep.subr.bf16.mxu0 %v588
        %647 = vmatpush1.bf16.msra.mxu0 %v587
        %648 = vmatprep.subr.bf16.mxu0 0
        %649 = vmatpush1.bf16.msra.mxu0 0
        %650 = vmatprep.subr.bf16.mxu0 0
        %651 = vmatpush1.bf16.msra.mxu0 0
        %652 = vmatprep.subr.bf16.mxu0 0
        %653 = vmatpush1.bf16.msra.mxu0 0
        %654 = vmatprep.subr.bf16.mxu0 0
        %655 = vmatpush1.bf16.msra.mxu0 0
        %656 = vmatprep.subr.bf16.mxu0 0
        %657 = vmatpush1.bf16.msra.mxu0 0
        %658 = vmatprep.subr.bf16.mxu0 0
        %659 = vmatpush1.bf16.msra.mxu0 0
        %660 = vmatprep.subr.bf16.mxu0 0
        %661 = vmatpush1.bf16.msra.mxu0 0
        %662 = vmatprep.subr.bf16.mxu0 0
        %663 = vmatpush1.bf16.msra.mxu0 0
        %664 = vmatprep.subr.bf16.mxu0 0
        %665 = vmatpush1.bf16.msra.mxu0 0
        %666 = vmatprep.subr.bf16.mxu0 0
        %667 = vmatpush1.bf16.msra.mxu0 0
        %668 = vmatprep.subr.bf16.mxu0 0
        %669 = vmatpush1.bf16.msra.mxu0 0
        %670 = vmatprep.subr.bf16.mxu0 0
        %671 = vmatpush1.bf16.msra.mxu0 0
        %672 = vmatprep.subr.bf16.mxu0 0
        %673 = vmatpush1.bf16.msra.mxu0 0
        %674 = vmatprep.subr.bf16.mxu0 0
        %675 = vmatpush1.bf16.msra.mxu0 0
        %676 = vmatprep.mubr.bf16.mxu0 0
        %677 = vmatmul.mubr.bf16.gmra.mrb[0].mxu0 %v599
        %v678 = vpop.f32.mrb[0].mxu0
        %v679 = vadd.f32 0.0, %v678
        %v680 = vpop.f32.mrb[0].mxu0
        %v681 = vadd.f32 0.0, %v680
        %v682 = vpop.f32.mrb[0].mxu0
        %v683 = vadd.f32 0.0, %v682
        %v684 = vpop.f32.mrb[0].mxu0
        %v685 = vadd.f32 0.0, %v684
        %686 = vdwg.mxu0
        %v687 = vadd.f32 %v534, %v636
        %v688 = vadd.f32 %v535, %v638
        %v689 = vadd.f32 %v536, %v679
        %v690 = vadd.f32 %v537, %v681
        %v691 = vadd.f32 %v538, %v640
        %v692 = vadd.f32 %v539, %v642
        %v693 = vadd.f32 %v540, %v683
        %v694 = vadd.f32 %v541, %v685
        %v695 = vlaneseq
        %v696 = vshrl.u32 %v695, 7
        %v697 = vsub.s32 0, %v696
        %v698 = vrot.slane %v405, %v697
        %v699 = vlaneseq
        %v700 = vshrl.u32 %v699, 7
        %v701 = vsub.s32 1, %v700
        %v702 = vrot.slane %v405, %v701
        %vm703 = vcmp.lt.s32.totalorder %v396, %v698
        %vm704 = vcmp.lt.s32.totalorder %v396, %v702
        %v705 = vsel %vm703, 1, 0
        %v706 = vsel %vm704, 1, 0
        %vm707 = vcmp.eq.s32.totalorder %v705, 1
        %vm708 = vcmp.eq.s32.totalorder %v706, 1
        %v709 = vsel %vm707, %v687, 0.0
        %v710 = vsel %vm707, %v688, 0.0
        %v711 = vsel %vm707, %v689, 0.0
        %v712 = vsel %vm707, %v690, 0.0
        %v713 = vsel %vm708, %v691, 0.0
        %v714 = vsel %vm708, %v692, 0.0
        %v715 = vsel %vm708, %v693, 0.0
        %v716 = vsel %vm708, %v694, 0.0
        %v717 = vsel %vm707, %v534, 0.0
        %v718 = vsel %vm707, %v535, 0.0
        %v719 = vsel %vm707, %v536, 0.0
        %v720 = vsel %vm707, %v537, 0.0
        %v721 = vsel %vm708, %v538, 0.0
        %v722 = vsel %vm708, %v539, 0.0
        %v723 = vsel %vm708, %v540, 0.0
        %v724 = vsel %vm708, %v541, 0.0
        %v725 = vrot.slane %v709, 4
        %v726 = vadd.f32 %v709, %v725
        %v727 = vrot.slane %v726, 2
        %v728 = vadd.f32 %v726, %v727
        %v729 = vrot.slane %v728, 1
        %v730 = vadd.f32 %v728, %v729
        %v731 = vrot.slane %v710, 4
        %v732 = vadd.f32 %v710, %v731
        %v733 = vrot.slane %v732, 2
        %v734 = vadd.f32 %v732, %v733
        %v735 = vrot.slane %v734, 1
        %v736 = vadd.f32 %v734, %v735
        %v737 = vrot.slane %v711, 4
        %v738 = vadd.f32 %v711, %v737
        %v739 = vrot.slane %v738, 2
        %v740 = vadd.f32 %v738, %v739
        %v741 = vrot.slane %v740, 1
        %v742 = vadd.f32 %v740, %v741
        %v743 = vrot.slane %v712, 4
        %v744 = vadd.f32 %v712, %v743
        %v745 = vrot.slane %v744, 2
        %v746 = vadd.f32 %v744, %v745
        %v747 = vrot.slane %v746, 1
        %v748 = vadd.f32 %v746, %v747
        %v749 = vrot.slane %v713, 4
        %v750 = vadd.f32 %v713, %v749
        %v751 = vrot.slane %v750, 2
        %v752 = vadd.f32 %v750, %v751
        %v753 = vrot.slane %v752, 1
        %v754 = vadd.f32 %v752, %v753
        %v755 = vrot.slane %v714, 4
        %v756 = vadd.f32 %v714, %v755
        %v757 = vrot.slane %v756, 2
        %v758 = vadd.f32 %v756, %v757
        %v759 = vrot.slane %v758, 1
        %v760 = vadd.f32 %v758, %v759
        %v761 = vrot.slane %v715, 4
        %v762 = vadd.f32 %v715, %v761
        %v763 = vrot.slane %v762, 2
        %v764 = vadd.f32 %v762, %v763
        %v765 = vrot.slane %v764, 1
        %v766 = vadd.f32 %v764, %v765
        %v767 = vrot.slane %v716, 4
        %v768 = vadd.f32 %v716, %v767
        %v769 = vrot.slane %v768, 2
        %v770 = vadd.f32 %v768, %v769
        %v771 = vrot.slane %v770, 1
        %v772 = vadd.f32 %v770, %v771
        %v773 = vrot.slane %v717, 4
        %v774 = vadd.f32 %v717, %v773
        %v775 = vrot.slane %v774, 2
        %v776 = vadd.f32 %v774, %v775
        %v777 = vrot.slane %v776, 1
        %v778 = vadd.f32 %v776, %v777
        %v779 = vrot.slane %v718, 4
        %v780 = vadd.f32 %v718, %v779
        %v781 = vrot.slane %v780, 2
        %v782 = vadd.f32 %v780, %v781
        %v783 = vrot.slane %v782, 1
        %v784 = vadd.f32 %v782, %v783
        %v785 = vrot.slane %v719, 4
        %v786 = vadd.f32 %v719, %v785
        %v787 = vrot.slane %v786, 2
        %v788 = vadd.f32 %v786, %v787
        %v789 = vrot.slane %v788, 1
        %v790 = vadd.f32 %v788, %v789
        %v791 = vrot.slane %v720, 4
        %v792 = vadd.f32 %v720, %v791
        %v793 = vrot.slane %v792, 2
        %v794 = vadd.f32 %v792, %v793
        %v795 = vrot.slane %v794, 1
        %v796 = vadd.f32 %v794, %v795
        %v797 = vrot.slane %v721, 4
        %v798 = vadd.f32 %v721, %v797
        %v799 = vrot.slane %v798, 2
        %v800 = vadd.f32 %v798, %v799
        %v801 = vrot.slane %v800, 1
        %v802 = vadd.f32 %v800, %v801
        %v803 = vrot.slane %v722, 4
        %v804 = vadd.f32 %v722, %v803
        %v805 = vrot.slane %v804, 2
        %v806 = vadd.f32 %v804, %v805
        %v807 = vrot.slane %v806, 1
        %v808 = vadd.f32 %v806, %v807
        %v809 = vrot.slane %v723, 4
        %v810 = vadd.f32 %v723, %v809
        %v811 = vrot.slane %v810, 2
        %v812 = vadd.f32 %v810, %v811
        %v813 = vrot.slane %v812, 1
        %v814 = vadd.f32 %v812, %v813
        %v815 = vrot.slane %v724, 4
        %v816 = vadd.f32 %v724, %v815
        %v817 = vrot.slane %v816, 2
        %v818 = vadd.f32 %v816, %v817
        %v819 = vrot.slane %v818, 1
        %v820 = vadd.f32 %v818, %v819
        %v821 = vmul.f32 %v709, %v709
        %v822 = vmul.f32 %v710, %v710
        %v823 = vmul.f32 %v711, %v711
        %v824 = vmul.f32 %v712, %v712
        %v825 = vmul.f32 %v713, %v713
        %v826 = vmul.f32 %v714, %v714
        %v827 = vmul.f32 %v715, %v715
        %v828 = vmul.f32 %v716, %v716
        %v829 = vrot.slane %v821, 4
        %v830 = vadd.f32 %v821, %v829
        %v831 = vrot.slane %v830, 2
        %v832 = vadd.f32 %v830, %v831
        %v833 = vrot.slane %v832, 1
        %v834 = vadd.f32 %v832, %v833
        %v835 = vrot.slane %v822, 4
        %v836 = vadd.f32 %v822, %v835
        %v837 = vrot.slane %v836, 2
        %v838 = vadd.f32 %v836, %v837
        %v839 = vrot.slane %v838, 1
        %v840 = vadd.f32 %v838, %v839
        %v841 = vrot.slane %v823, 4
        %v842 = vadd.f32 %v823, %v841
        %v843 = vrot.slane %v842, 2
        %v844 = vadd.f32 %v842, %v843
        %v845 = vrot.slane %v844, 1
        %v846 = vadd.f32 %v844, %v845
        %v847 = vrot.slane %v824, 4
        %v848 = vadd.f32 %v824, %v847
        %v849 = vrot.slane %v848, 2
        %v850 = vadd.f32 %v848, %v849
        %v851 = vrot.slane %v850, 1
        %v852 = vadd.f32 %v850, %v851
        %v853 = vrot.slane %v825, 4
        %v854 = vadd.f32 %v825, %v853
        %v855 = vrot.slane %v854, 2
        %v856 = vadd.f32 %v854, %v855
        %v857 = vrot.slane %v856, 1
        %v858 = vadd.f32 %v856, %v857
        %v859 = vrot.slane %v826, 4
        %v860 = vadd.f32 %v826, %v859
        %v861 = vrot.slane %v860, 2
        %v862 = vadd.f32 %v860, %v861
        %v863 = vrot.slane %v862, 1
        %v864 = vadd.f32 %v862, %v863
        %v865 = vrot.slane %v827, 4
        %v866 = vadd.f32 %v827, %v865
        %v867 = vrot.slane %v866, 2
        %v868 = vadd.f32 %v866, %v867
        %v869 = vrot.slane %v868, 1
        %v870 = vadd.f32 %v868, %v869
        %v871 = vrot.slane %v828, 4
        %v872 = vadd.f32 %v828, %v871
        %v873 = vrot.slane %v872, 2
        %v874 = vadd.f32 %v872, %v873
        %v875 = vrot.slane %v874, 1
        %v876 = vadd.f32 %v874, %v875
        %v877 = vmul.f32 %v717, %v717
        %v878 = vmul.f32 %v718, %v718
        %v879 = vmul.f32 %v719, %v719
        %v880 = vmul.f32 %v720, %v720
        %v881 = vmul.f32 %v721, %v721
        %v882 = vmul.f32 %v722, %v722
        %v883 = vmul.f32 %v723, %v723
        %v884 = vmul.f32 %v724, %v724
        %v885 = vrot.slane %v877, 4
        %v886 = vadd.f32 %v877, %v885
        %v887 = vrot.slane %v886, 2
        %v888 = vadd.f32 %v886, %v887
        %v889 = vrot.slane %v888, 1
        %v890 = vadd.f32 %v888, %v889
        %v891 = vrot.slane %v878, 4
        %v892 = vadd.f32 %v878, %v891
        %v893 = vrot.slane %v892, 2
        %v894 = vadd.f32 %v892, %v893
        %v895 = vrot.slane %v894, 1
        %v896 = vadd.f32 %v894, %v895
        %v897 = vrot.slane %v879, 4
        %v898 = vadd.f32 %v879, %v897
        %v899 = vrot.slane %v898, 2
        %v900 = vadd.f32 %v898, %v899
        %v901 = vrot.slane %v900, 1
        %v902 = vadd.f32 %v900, %v901
        %v903 = vrot.slane %v880, 4
        %v904 = vadd.f32 %v880, %v903
        %v905 = vrot.slane %v904, 2
        %v906 = vadd.f32 %v904, %v905
        %v907 = vrot.slane %v906, 1
        %v908 = vadd.f32 %v906, %v907
        %v909 = vrot.slane %v881, 4
        %v910 = vadd.f32 %v881, %v909
        %v911 = vrot.slane %v910, 2
        %v912 = vadd.f32 %v910, %v911
        %v913 = vrot.slane %v912, 1
        %v914 = vadd.f32 %v912, %v913
        %v915 = vrot.slane %v882, 4
        %v916 = vadd.f32 %v882, %v915
        %v917 = vrot.slane %v916, 2
        %v918 = vadd.f32 %v916, %v917
        %v919 = vrot.slane %v918, 1
        %v920 = vadd.f32 %v918, %v919
        %v921 = vrot.slane %v883, 4
        %v922 = vadd.f32 %v883, %v921
        %v923 = vrot.slane %v922, 2
        %v924 = vadd.f32 %v922, %v923
        %v925 = vrot.slane %v924, 1
        %v926 = vadd.f32 %v924, %v925
        %v927 = vrot.slane %v884, 4
        %v928 = vadd.f32 %v884, %v927
        %v929 = vrot.slane %v928, 2
        %v930 = vadd.f32 %v928, %v929
        %v931 = vrot.slane %v930, 1
        %v932 = vadd.f32 %v930, %v931
        %v933 = vsub.f32 %v730, %v778
        %v934 = vsub.f32 %v736, %v784
        %v935 = vsub.f32 %v742, %v790
        %v936 = vsub.f32 %v748, %v796
        %v937 = vsub.f32 %v754, %v802
        %v938 = vsub.f32 %v760, %v808
        %v939 = vsub.f32 %v766, %v814
        %v940 = vsub.f32 %v772, %v820
        %v941 = vmul.f32 %v933, %v419
        %v942 = vmul.f32 %v934, %v419
        %v943 = vmul.f32 %v935, %v419
        %v944 = vmul.f32 %v936, %v419
        %v945 = vmul.f32 %v937, %v421
        %v946 = vmul.f32 %v938, %v421
        %v947 = vmul.f32 %v939, %v421
        %v948 = vmul.f32 %v940, %v421
        %v949 = vmul.f32 %v411, %v834
        %v950 = vmul.f32 %v411, %v840
        %v951 = vmul.f32 %v411, %v846
        %v952 = vmul.f32 %v411, %v852
        %v953 = vmul.f32 %v415, %v858
        %v954 = vmul.f32 %v415, %v864
        %v955 = vmul.f32 %v415, %v870
        %v956 = vmul.f32 %v415, %v876
        %v957 = vmul.f32 %v730, 2.0
        %v958 = vmul.f32 %v736, 2.0
        %v959 = vmul.f32 %v742, 2.0
        %v960 = vmul.f32 %v748, 2.0
        %v961 = vmul.f32 %v754, 2.0
        %v962 = vmul.f32 %v760, 2.0
        %v963 = vmul.f32 %v766, 2.0
        %v964 = vmul.f32 %v772, 2.0
        %v965 = vmul.f32 %v957, %v778
        %v966 = vmul.f32 %v958, %v784
        %v967 = vmul.f32 %v959, %v790
        %v968 = vmul.f32 %v960, %v796
        %v969 = vmul.f32 %v961, %v802
        %v970 = vmul.f32 %v962, %v808
        %v971 = vmul.f32 %v963, %v814
        %v972 = vmul.f32 %v964, %v820
        %v973 = vsub.f32 %v949, %v965
        %v974 = vsub.f32 %v950, %v966
        %v975 = vsub.f32 %v951, %v967
        %v976 = vsub.f32 %v952, %v968
        %v977 = vsub.f32 %v953, %v969
        %v978 = vsub.f32 %v954, %v970
        %v979 = vsub.f32 %v955, %v971
        %v980 = vsub.f32 %v956, %v972
        %v981 = vmul.f32 %v411, %v890
        %v982 = vmul.f32 %v411, %v896
        %v983 = vmul.f32 %v411, %v902
        %v984 = vmul.f32 %v411, %v908
        %v985 = vmul.f32 %v415, %v914
        %v986 = vmul.f32 %v415, %v920
        %v987 = vmul.f32 %v415, %v926
        %v988 = vmul.f32 %v415, %v932
        %v989 = vadd.f32 %v973, %v981
        %v990 = vadd.f32 %v974, %v982
        %v991 = vadd.f32 %v975, %v983
        %v992 = vadd.f32 %v976, %v984
        %v993 = vadd.f32 %v977, %v985
        %v994 = vadd.f32 %v978, %v986
        %v995 = vadd.f32 %v979, %v987
        %v996 = vadd.f32 %v980, %v988
        %v997 = vmul.f32 %v989, %v422
        %v998 = vmul.f32 %v990, %v422
        %v999 = vmul.f32 %v991, %v422
        %v1000 = vmul.f32 %v992, %v422
        %v1001 = vmul.f32 %v993, %v423
        %v1002 = vmul.f32 %v994, %v423
        %v1003 = vmul.f32 %v995, %v423
        %v1004 = vmul.f32 %v996, %v423
        %v1005 = vmul.f32 %v941, %v941
        %v1006 = vmul.f32 %v942, %v942
        %v1007 = vmul.f32 %v943, %v943
        %v1008 = vmul.f32 %v944, %v944
        %v1009 = vmul.f32 %v945, %v945
        %v1010 = vmul.f32 %v946, %v946
        %v1011 = vmul.f32 %v947, %v947
        %v1012 = vmul.f32 %v948, %v948
        %v1013 = vsub.f32 %v997, %v1005
        %v1014 = vsub.f32 %v998, %v1006
        %v1015 = vsub.f32 %v999, %v1007
        %v1016 = vsub.f32 %v1000, %v1008
        %v1017 = vsub.f32 %v1001, %v1009
        %v1018 = vsub.f32 %v1002, %v1010
        %v1019 = vsub.f32 %v1003, %v1011
        %v1020 = vsub.f32 %v1004, %v1012
        %v1021 = vmax.f32 %v1013, 0.0
        %v1022 = vmax.f32 %v1014, 0.0
        %v1023 = vmax.f32 %v1015, 0.0
        %v1024 = vmax.f32 %v1016, 0.0
        %v1025 = vmax.f32 %v1017, 0.0
        %v1026 = vmax.f32 %v1018, 0.0
        %v1027 = vmax.f32 %v1019, 0.0
        %v1028 = vmax.f32 %v1020, 0.0
        %v1029 = vld [vmem:[%s5] sm:$0xf]
        %v1030 = vadd.f32 %v1021, 1e-05
        %v1031 = vadd.f32 %v1022, 1e-05
        %v1032 = vadd.f32 %v1023, 1e-05
        %v1033 = vadd.f32 %v1024, 1e-05
        %v1034 = vadd.f32 %v1025, 1e-05
        %v1035 = vadd.f32 %v1026, 1e-05
        %v1036 = vadd.f32 %v1027, 1e-05
        %v1037 = vadd.f32 %v1028, 1e-05
        %v1038 = vrsqrt.pop %v1030
        %v1039 = vrsqrt.pop %v1031
        %v1040 = vrsqrt.pop %v1032
        %v1041 = vrsqrt.pop %v1033
        %v1042 = vrsqrt.pop %v1034
        %v1043 = vrsqrt.pop %v1035
        %v1044 = vrsqrt.pop %v1036
        %v1045 = vrsqrt.pop %v1037
        %v1054 = vcombine.low %v1038, %v1039
        %v1055 = vcombine.low %v1040, %v1041
        %v1057 = vunpack.c.l.s4 1966171168
        %v1058 = vunpack.c.0.s8 %v1057
        %v1059 = vlaneseq
        %v1060 = vshrl.u32 %v1059, 7
        %v1061 = vsub.s32 %v1058, %v1060
        %v1062 = vrot.slane %v1054, %v1061
        %v1064 = vunpack.c.l.s4 1966171168
        %v1065 = vunpack.c.0.s8 %v1064
        %v1066 = vlaneseq
        %v1067 = vshrl.u32 %v1066, 7
        %v1068 = vsub.s32 %v1065, %v1067
        %v1069 = vrot.slane %v1055, %v1068
        %v1070 = vcombine.low %v1062, %v1069
        %v1072 = vunpack.c.l.s4 1966171168
        %v1073 = vunpack.c.0.s8 %v1072
        %v1074 = vlaneseq
        %v1075 = vshrl.u32 %v1074, 7
        %v1076 = vsub.s32 %v1073, %v1075
        %v1077 = vrot.slane %v1070, %v1076
        %v1078 = vcombine.low %v1042, %v1043
        %v1079 = vcombine.low %v1044, %v1045
        %v1081 = vunpack.c.l.s4 1966171168
        %v1082 = vunpack.c.0.s8 %v1081
        %v1083 = vlaneseq
        %v1084 = vshrl.u32 %v1083, 7
        %v1085 = vsub.s32 %v1082, %v1084
        %v1086 = vrot.slane %v1078, %v1085
        %v1088 = vunpack.c.l.s4 1966171168
        %v1089 = vunpack.c.0.s8 %v1088
        %v1090 = vlaneseq
        %v1091 = vshrl.u32 %v1090, 7
        %v1092 = vsub.s32 %v1089, %v1091
        %v1093 = vrot.slane %v1079, %v1092
        %v1094 = vcombine.low %v1086, %v1093
        %v1096 = vunpack.c.l.s4 1966171168
        %v1097 = vunpack.c.0.s8 %v1096
        %v1098 = vlaneseq
        %v1099 = vshrl.u32 %v1098, 7
        %v1100 = vsub.s32 %v1097, %v1099
        %v1101 = vrot.slane %v1094, %v1100
        %v1104 = vmul.f32 %v1029, %v1077
        %v1105 = vmul.f32 %v1029, %v1101
        %v1106 = vld [vmem:[%s6] sm:$0xf]
        %v1109 = vlaneseq
        %v1110 = vshrl.u32 %v1109, 7
        %v1111 = vsub.s32 0, %v1110
        %v1112 = vrot.slane %v1104, %v1111
        %v1113 = vlaneseq
        %v1114 = vshrl.u32 %v1113, 7
        %v1115 = vsub.s32 1, %v1114
        %v1116 = vrot.slane %v1104, %v1115
        %v1117 = vlaneseq
        %v1118 = vshrl.u32 %v1117, 7
        %v1119 = vsub.s32 2, %v1118
        %v1120 = vrot.slane %v1104, %v1119
        %v1121 = vlaneseq
        %v1122 = vshrl.u32 %v1121, 7
        %v1123 = vsub.s32 3, %v1122
        %v1124 = vrot.slane %v1104, %v1123
        %v1125 = vlaneseq
        %v1126 = vshrl.u32 %v1125, 7
        %v1127 = vsub.s32 0, %v1126
        %v1128 = vrot.slane %v1105, %v1127
        %v1129 = vlaneseq
        %v1130 = vshrl.u32 %v1129, 7
        %v1131 = vsub.s32 1, %v1130
        %v1132 = vrot.slane %v1105, %v1131
        %v1133 = vlaneseq
        %v1134 = vshrl.u32 %v1133, 7
        %v1135 = vsub.s32 2, %v1134
        %v1136 = vrot.slane %v1105, %v1135
        %v1137 = vlaneseq
        %v1138 = vshrl.u32 %v1137, 7
        %v1139 = vsub.s32 3, %v1138
        %v1140 = vrot.slane %v1105, %v1139
        %v1149 = vmul.f32 %v941, %v1112
        %v1150 = vmul.f32 %v942, %v1116
        %v1151 = vmul.f32 %v943, %v1120
        %v1152 = vmul.f32 %v944, %v1124
        %v1153 = vmul.f32 %v945, %v1128
        %v1154 = vmul.f32 %v946, %v1132
        %v1155 = vmul.f32 %v947, %v1136
        %v1156 = vmul.f32 %v948, %v1140
        %v1165 = vcombine.low %v1149, %v1150
        %v1166 = vcombine.low %v1151, %v1152
        %v1168 = vunpack.c.l.s4 1966171168
        %v1169 = vunpack.c.0.s8 %v1168
        %v1170 = vlaneseq
        %v1171 = vshrl.u32 %v1170, 7
        %v1172 = vsub.s32 %v1169, %v1171
        %v1173 = vrot.slane %v1165, %v1172
        %v1175 = vunpack.c.l.s4 1966171168
        %v1176 = vunpack.c.0.s8 %v1175
        %v1177 = vlaneseq
        %v1178 = vshrl.u32 %v1177, 7
        %v1179 = vsub.s32 %v1176, %v1178
        %v1180 = vrot.slane %v1166, %v1179
        %v1181 = vcombine.low %v1173, %v1180
        %v1183 = vunpack.c.l.s4 1966171168
        %v1184 = vunpack.c.0.s8 %v1183
        %v1185 = vlaneseq
        %v1186 = vshrl.u32 %v1185, 7
        %v1187 = vsub.s32 %v1184, %v1186
        %v1188 = vrot.slane %v1181, %v1187
        %v1189 = vcombine.low %v1153, %v1154
        %v1190 = vcombine.low %v1155, %v1156
        %v1192 = vunpack.c.l.s4 1966171168
        %v1193 = vunpack.c.0.s8 %v1192
        %v1194 = vlaneseq
        %v1195 = vshrl.u32 %v1194, 7
        %v1196 = vsub.s32 %v1193, %v1195
        %v1197 = vrot.slane %v1189, %v1196
        %v1199 = vunpack.c.l.s4 1966171168
        %v1200 = vunpack.c.0.s8 %v1199
        %v1201 = vlaneseq
        %v1202 = vshrl.u32 %v1201, 7
        %v1203 = vsub.s32 %v1200, %v1202
        %v1204 = vrot.slane %v1190, %v1203
        %v1205 = vcombine.low %v1197, %v1204
        %v1207 = vunpack.c.l.s4 1966171168
        %v1208 = vunpack.c.0.s8 %v1207
        %v1209 = vlaneseq
        %v1210 = vshrl.u32 %v1209, 7
        %v1211 = vsub.s32 %v1208, %v1210
        %v1212 = vrot.slane %v1205, %v1211
        %v1215 = vsub.f32 %v1106, %v1188
        %v1216 = vsub.f32 %v1106, %v1212
        %v1217 = vmul.f32 %v687, %v1112
        %v1218 = vmul.f32 %v688, %v1116
        %v1219 = vmul.f32 %v689, %v1120
        %v1220 = vmul.f32 %v690, %v1124
        %v1221 = vmul.f32 %v691, %v1128
        %v1222 = vmul.f32 %v692, %v1132
        %v1223 = vmul.f32 %v693, %v1136
        %v1224 = vmul.f32 %v694, %v1140
        %v1227 = vlaneseq
        %v1228 = vshrl.u32 %v1227, 7
        %v1229 = vsub.s32 0, %v1228
        %v1230 = vrot.slane %v1215, %v1229
        %v1231 = vlaneseq
        %v1232 = vshrl.u32 %v1231, 7
        %v1233 = vsub.s32 1, %v1232
        %v1234 = vrot.slane %v1215, %v1233
        %v1235 = vlaneseq
        %v1236 = vshrl.u32 %v1235, 7
        %v1237 = vsub.s32 2, %v1236
        %v1238 = vrot.slane %v1215, %v1237
        %v1239 = vlaneseq
        %v1240 = vshrl.u32 %v1239, 7
        %v1241 = vsub.s32 3, %v1240
        %v1242 = vrot.slane %v1215, %v1241
        %v1243 = vlaneseq
        %v1244 = vshrl.u32 %v1243, 7
        %v1245 = vsub.s32 0, %v1244
        %v1246 = vrot.slane %v1216, %v1245
        %v1247 = vlaneseq
        %v1248 = vshrl.u32 %v1247, 7
        %v1249 = vsub.s32 1, %v1248
        %v1250 = vrot.slane %v1216, %v1249
        %v1251 = vlaneseq
        %v1252 = vshrl.u32 %v1251, 7
        %v1253 = vsub.s32 2, %v1252
        %v1254 = vrot.slane %v1216, %v1253
        %v1255 = vlaneseq
        %v1256 = vshrl.u32 %v1255, 7
        %v1257 = vsub.s32 3, %v1256
        %v1258 = vrot.slane %v1216, %v1257
        %v1267 = vadd.f32 %v1217, %v1230
        %v1268 = vadd.f32 %v1218, %v1234
        %v1269 = vadd.f32 %v1219, %v1238
        %v1270 = vadd.f32 %v1220, %v1242
        %v1271 = vadd.f32 %v1221, %v1246
        %v1272 = vadd.f32 %v1222, %v1250
        %v1273 = vadd.f32 %v1223, %v1254
        %v1274 = vadd.f32 %v1224, %v1258
        %v1275 = vmul.f32 %v534, %v1112
        %v1276 = vmul.f32 %v535, %v1116
        %v1277 = vmul.f32 %v536, %v1120
        %v1278 = vmul.f32 %v537, %v1124
        %v1279 = vmul.f32 %v538, %v1128
        %v1280 = vmul.f32 %v539, %v1132
        %v1281 = vmul.f32 %v540, %v1136
        %v1282 = vmul.f32 %v541, %v1140
        %v1291 = vcombine.low %v1275, %v1276
        %v1292 = vcombine.high %v1275, %v1276
        %v1293 = vcombine.low %v1277, %v1278
        %v1294 = vcombine.high %v1277, %v1278
        %v1296 = vunpack.c.l.s4 1966171168
        %v1297 = vunpack.c.0.s8 %v1296
        %v1298 = vlaneseq
        %v1299 = vshrl.u32 %v1298, 7
        %v1300 = vsub.s32 %v1297, %v1299
        %v1301 = vrot.slane %v1291, %v1300
        %v1303 = vunpack.c.l.s4 1966171168
        %v1304 = vunpack.c.0.s8 %v1303
        %v1305 = vlaneseq
        %v1306 = vshrl.u32 %v1305, 7
        %v1307 = vsub.s32 %v1304, %v1306
        %v1308 = vrot.slane %v1292, %v1307
        %v1310 = vunpack.c.l.s4 1966171168
        %v1311 = vunpack.c.0.s8 %v1310
        %v1312 = vlaneseq
        %v1313 = vshrl.u32 %v1312, 7
        %v1314 = vsub.s32 %v1311, %v1313
        %v1315 = vrot.slane %v1293, %v1314
        %v1317 = vunpack.c.l.s4 1966171168
        %v1318 = vunpack.c.0.s8 %v1317
        %v1319 = vlaneseq
        %v1320 = vshrl.u32 %v1319, 7
        %v1321 = vsub.s32 %v1318, %v1320
        %v1322 = vrot.slane %v1294, %v1321
        %v1323 = vcombine.low %v1301, %v1315
        %v1324 = vcombine.high %v1301, %v1315
        %v1325 = vcombine.low %v1308, %v1322
        %v1326 = vcombine.high %v1308, %v1322
        %v1328 = vunpack.c.l.s4 1966171168
        %v1329 = vunpack.c.0.s8 %v1328
        %v1330 = vlaneseq
        %v1331 = vshrl.u32 %v1330, 7
        %v1332 = vsub.s32 %v1329, %v1331
        %v1333 = vrot.slane %v1323, %v1332
        %v1335 = vunpack.c.l.s4 1966171168
        %v1336 = vunpack.c.0.s8 %v1335
        %v1337 = vlaneseq
        %v1338 = vshrl.u32 %v1337, 7
        %v1339 = vsub.s32 %v1336, %v1338
        %v1340 = vrot.slane %v1325, %v1339
        %v1342 = vunpack.c.l.s4 1966171168
        %v1343 = vunpack.c.0.s8 %v1342
        %v1344 = vlaneseq
        %v1345 = vshrl.u32 %v1344, 7
        %v1346 = vsub.s32 %v1343, %v1345
        %v1347 = vrot.slane %v1324, %v1346
        %v1349 = vunpack.c.l.s4 1966171168
        %v1350 = vunpack.c.0.s8 %v1349
        %v1351 = vlaneseq
        %v1352 = vshrl.u32 %v1351, 7
        %v1353 = vsub.s32 %v1350, %v1352
        %v1354 = vrot.slane %v1326, %v1353
        %v1355 = vcombine.high %v1333, %v1333
        %v1356 = vcombine.high %v1340, %v1340
        %v1357 = vcombine.high %v1347, %v1347
        %v1358 = vcombine.high %v1354, %v1354
        %v1359 = vcombine.low %v1279, %v1280
        %v1360 = vcombine.high %v1279, %v1280
        %v1361 = vcombine.low %v1281, %v1282
        %v1362 = vcombine.high %v1281, %v1282
        %v1364 = vunpack.c.l.s4 1966171168
        %v1365 = vunpack.c.0.s8 %v1364
        %v1366 = vlaneseq
        %v1367 = vshrl.u32 %v1366, 7
        %v1368 = vsub.s32 %v1365, %v1367
        %v1369 = vrot.slane %v1359, %v1368
        %v1371 = vunpack.c.l.s4 1966171168
        %v1372 = vunpack.c.0.s8 %v1371
        %v1373 = vlaneseq
        %v1374 = vshrl.u32 %v1373, 7
        %v1375 = vsub.s32 %v1372, %v1374
        %v1376 = vrot.slane %v1360, %v1375
        %v1378 = vunpack.c.l.s4 1966171168
        %v1379 = vunpack.c.0.s8 %v1378
        %v1380 = vlaneseq
        %v1381 = vshrl.u32 %v1380, 7
        %v1382 = vsub.s32 %v1379, %v1381
        %v1383 = vrot.slane %v1361, %v1382
        %v1385 = vunpack.c.l.s4 1966171168
        %v1386 = vunpack.c.0.s8 %v1385
        %v1387 = vlaneseq
        %v1388 = vshrl.u32 %v1387, 7
        %v1389 = vsub.s32 %v1386, %v1388
        %v1390 = vrot.slane %v1362, %v1389
        %v1391 = vcombine.low %v1369, %v1383
        %v1392 = vcombine.high %v1369, %v1383
        %v1393 = vcombine.low %v1376, %v1390
        %v1394 = vcombine.high %v1376, %v1390
        %v1396 = vunpack.c.l.s4 1966171168
        %v1397 = vunpack.c.0.s8 %v1396
        %v1398 = vlaneseq
        %v1399 = vshrl.u32 %v1398, 7
        %v1400 = vsub.s32 %v1397, %v1399
        %v1401 = vrot.slane %v1391, %v1400
        %v1403 = vunpack.c.l.s4 1966171168
        %v1404 = vunpack.c.0.s8 %v1403
        %v1405 = vlaneseq
        %v1406 = vshrl.u32 %v1405, 7
        %v1407 = vsub.s32 %v1404, %v1406
        %v1408 = vrot.slane %v1393, %v1407
        %v1410 = vunpack.c.l.s4 1966171168
        %v1411 = vunpack.c.0.s8 %v1410
        %v1412 = vlaneseq
        %v1413 = vshrl.u32 %v1412, 7
        %v1414 = vsub.s32 %v1411, %v1413
        %v1415 = vrot.slane %v1392, %v1414
        %v1417 = vunpack.c.l.s4 1966171168
        %v1418 = vunpack.c.0.s8 %v1417
        %v1419 = vlaneseq
        %v1420 = vshrl.u32 %v1419, 7
        %v1421 = vsub.s32 %v1418, %v1420
        %v1422 = vrot.slane %v1394, %v1421
        %v1423 = vcombine.high %v1401, %v1401
        %v1424 = vcombine.high %v1408, %v1408
        %v1425 = vcombine.high %v1415, %v1415
        %v1426 = vcombine.high %v1422, %v1422
        %v1427 = vlaneseq
        %v1428 = vshrl.u32 %v1427, 7
        %v1429 = vsub.s32 0, %v1428
        %v1430 = vrot.slane %v1333, %v1429
        %v1431 = vlaneseq
        %v1432 = vshrl.u32 %v1431, 7
        %v1433 = vsub.s32 1, %v1432
        %v1434 = vrot.slane %v1333, %v1433
        %v1435 = vlaneseq
        %v1436 = vshrl.u32 %v1435, 7
        %v1437 = vsub.s32 2, %v1436
        %v1438 = vrot.slane %v1333, %v1437
        %v1439 = vlaneseq
        %v1440 = vshrl.u32 %v1439, 7
        %v1441 = vsub.s32 3, %v1440
        %v1442 = vrot.slane %v1333, %v1441
        %v1443 = vlaneseq
        %v1444 = vshrl.u32 %v1443, 7
        %v1445 = vsub.s32 0, %v1444
        %v1446 = vrot.slane %v1347, %v1445
        %v1447 = vlaneseq
        %v1448 = vshrl.u32 %v1447, 7
        %v1449 = vsub.s32 1, %v1448
        %v1450 = vrot.slane %v1347, %v1449
        %v1451 = vlaneseq
        %v1452 = vshrl.u32 %v1451, 7
        %v1453 = vsub.s32 2, %v1452
        %v1454 = vrot.slane %v1347, %v1453
        %v1455 = vlaneseq
        %v1456 = vshrl.u32 %v1455, 7
        %v1457 = vsub.s32 3, %v1456
        %v1458 = vrot.slane %v1347, %v1457
        %v1459 = vlaneseq
        %v1460 = vshrl.u32 %v1459, 7
        %v1461 = vsub.s32 0, %v1460
        %v1462 = vrot.slane %v1355, %v1461
        %v1463 = vlaneseq
        %v1464 = vshrl.u32 %v1463, 7
        %v1465 = vsub.s32 1, %v1464
        %v1466 = vrot.slane %v1355, %v1465
        %v1467 = vlaneseq
        %v1468 = vshrl.u32 %v1467, 7
        %v1469 = vsub.s32 2, %v1468
        %v1470 = vrot.slane %v1355, %v1469
        %v1471 = vlaneseq
        %v1472 = vshrl.u32 %v1471, 7
        %v1473 = vsub.s32 3, %v1472
        %v1474 = vrot.slane %v1355, %v1473
        %v1475 = vlaneseq
        %v1476 = vshrl.u32 %v1475, 7
        %v1477 = vsub.s32 0, %v1476
        %v1478 = vrot.slane %v1357, %v1477
        %v1479 = vlaneseq
        %v1480 = vshrl.u32 %v1479, 7
        %v1481 = vsub.s32 1, %v1480
        %v1482 = vrot.slane %v1357, %v1481
        %v1483 = vlaneseq
        %v1484 = vshrl.u32 %v1483, 7
        %v1485 = vsub.s32 2, %v1484
        %v1486 = vrot.slane %v1357, %v1485
        %v1487 = vlaneseq
        %v1488 = vshrl.u32 %v1487, 7
        %v1489 = vsub.s32 3, %v1488
        %v1490 = vrot.slane %v1357, %v1489
        %v1491 = vlaneseq
        %v1492 = vshrl.u32 %v1491, 7
        %v1493 = vsub.s32 0, %v1492
        %v1494 = vrot.slane %v1340, %v1493
        %v1495 = vlaneseq
        %v1496 = vshrl.u32 %v1495, 7
        %v1497 = vsub.s32 1, %v1496
        %v1498 = vrot.slane %v1340, %v1497
        %v1499 = vlaneseq
        %v1500 = vshrl.u32 %v1499, 7
        %v1501 = vsub.s32 2, %v1500
        %v1502 = vrot.slane %v1340, %v1501
        %v1503 = vlaneseq
        %v1504 = vshrl.u32 %v1503, 7
        %v1505 = vsub.s32 3, %v1504
        %v1506 = vrot.slane %v1340, %v1505
        %v1507 = vlaneseq
        %v1508 = vshrl.u32 %v1507, 7
        %v1509 = vsub.s32 0, %v1508
        %v1510 = vrot.slane %v1354, %v1509
        %v1511 = vlaneseq
        %v1512 = vshrl.u32 %v1511, 7
        %v1513 = vsub.s32 1, %v1512
        %v1514 = vrot.slane %v1354, %v1513
        %v1515 = vlaneseq
        %v1516 = vshrl.u32 %v1515, 7
        %v1517 = vsub.s32 2, %v1516
        %v1518 = vrot.slane %v1354, %v1517
        %v1519 = vlaneseq
        %v1520 = vshrl.u32 %v1519, 7
        %v1521 = vsub.s32 3, %v1520
        %v1522 = vrot.slane %v1354, %v1521
        %v1523 = vlaneseq
        %v1524 = vshrl.u32 %v1523, 7
        %v1525 = vsub.s32 0, %v1524
        %v1526 = vrot.slane %v1356, %v1525
        %v1527 = vlaneseq
        %v1528 = vshrl.u32 %v1527, 7
        %v1529 = vsub.s32 1, %v1528
        %v1530 = vrot.slane %v1356, %v1529
        %v1531 = vlaneseq
        %v1532 = vshrl.u32 %v1531, 7
        %v1533 = vsub.s32 2, %v1532
        %v1534 = vrot.slane %v1356, %v1533
        %v1535 = vlaneseq
        %v1536 = vshrl.u32 %v1535, 7
        %v1537 = vsub.s32 3, %v1536
        %v1538 = vrot.slane %v1356, %v1537
        %v1539 = vlaneseq
        %v1540 = vshrl.u32 %v1539, 7
        %v1541 = vsub.s32 0, %v1540
        %v1542 = vrot.slane %v1358, %v1541
        %v1543 = vlaneseq
        %v1544 = vshrl.u32 %v1543, 7
        %v1545 = vsub.s32 1, %v1544
        %v1546 = vrot.slane %v1358, %v1545
        %v1547 = vlaneseq
        %v1548 = vshrl.u32 %v1547, 7
        %v1549 = vsub.s32 2, %v1548
        %v1550 = vrot.slane %v1358, %v1549
        %v1551 = vlaneseq
        %v1552 = vshrl.u32 %v1551, 7
        %v1553 = vsub.s32 3, %v1552
        %v1554 = vrot.slane %v1358, %v1553
        %v1555 = vlaneseq
        %v1556 = vshrl.u32 %v1555, 7
        %v1557 = vsub.s32 0, %v1556
        %v1558 = vrot.slane %v1401, %v1557
        %v1559 = vlaneseq
        %v1560 = vshrl.u32 %v1559, 7
        %v1561 = vsub.s32 1, %v1560
        %v1562 = vrot.slane %v1401, %v1561
        %v1563 = vlaneseq
        %v1564 = vshrl.u32 %v1563, 7
        %v1565 = vsub.s32 2, %v1564
        %v1566 = vrot.slane %v1401, %v1565
        %v1567 = vlaneseq
        %v1568 = vshrl.u32 %v1567, 7
        %v1569 = vsub.s32 3, %v1568
        %v1570 = vrot.slane %v1401, %v1569
        %v1571 = vlaneseq
        %v1572 = vshrl.u32 %v1571, 7
        %v1573 = vsub.s32 0, %v1572
        %v1574 = vrot.slane %v1415, %v1573
        %v1575 = vlaneseq
        %v1576 = vshrl.u32 %v1575, 7
        %v1577 = vsub.s32 1, %v1576
        %v1578 = vrot.slane %v1415, %v1577
        %v1579 = vlaneseq
        %v1580 = vshrl.u32 %v1579, 7
        %v1581 = vsub.s32 2, %v1580
        %v1582 = vrot.slane %v1415, %v1581
        %v1583 = vlaneseq
        %v1584 = vshrl.u32 %v1583, 7
        %v1585 = vsub.s32 3, %v1584
        %v1586 = vrot.slane %v1415, %v1585
        %v1587 = vlaneseq
        %v1588 = vshrl.u32 %v1587, 7
        %v1589 = vsub.s32 0, %v1588
        %v1590 = vrot.slane %v1423, %v1589
        %v1591 = vlaneseq
        %v1592 = vshrl.u32 %v1591, 7
        %v1593 = vsub.s32 1, %v1592
        %v1594 = vrot.slane %v1423, %v1593
        %v1595 = vlaneseq
        %v1596 = vshrl.u32 %v1595, 7
        %v1597 = vsub.s32 2, %v1596
        %v1598 = vrot.slane %v1423, %v1597
        %v1599 = vlaneseq
        %v1600 = vshrl.u32 %v1599, 7
        %v1601 = vsub.s32 3, %v1600
        %v1602 = vrot.slane %v1423, %v1601
        %v1603 = vlaneseq
        %v1604 = vshrl.u32 %v1603, 7
        %v1605 = vsub.s32 0, %v1604
        %v1606 = vrot.slane %v1425, %v1605
        %v1607 = vlaneseq
        %v1608 = vshrl.u32 %v1607, 7
        %v1609 = vsub.s32 1, %v1608
        %v1610 = vrot.slane %v1425, %v1609
        %v1611 = vlaneseq
        %v1612 = vshrl.u32 %v1611, 7
        %v1613 = vsub.s32 2, %v1612
        %v1614 = vrot.slane %v1425, %v1613
        %v1615 = vlaneseq
        %v1616 = vshrl.u32 %v1615, 7
        %v1617 = vsub.s32 3, %v1616
        %v1618 = vrot.slane %v1425, %v1617
        %v1619 = vlaneseq
        %v1620 = vshrl.u32 %v1619, 7
        %v1621 = vsub.s32 0, %v1620
        %v1622 = vrot.slane %v1408, %v1621
        %v1623 = vlaneseq
        %v1624 = vshrl.u32 %v1623, 7
        %v1625 = vsub.s32 1, %v1624
        %v1626 = vrot.slane %v1408, %v1625
        %v1627 = vlaneseq
        %v1628 = vshrl.u32 %v1627, 7
        %v1629 = vsub.s32 2, %v1628
        %v1630 = vrot.slane %v1408, %v1629
        %v1631 = vlaneseq
        %v1632 = vshrl.u32 %v1631, 7
        %v1633 = vsub.s32 3, %v1632
        %v1634 = vrot.slane %v1408, %v1633
        %v1635 = vlaneseq
        %v1636 = vshrl.u32 %v1635, 7
        %v1637 = vsub.s32 0, %v1636
        %v1638 = vrot.slane %v1422, %v1637
        %v1639 = vlaneseq
        %v1640 = vshrl.u32 %v1639, 7
        %v1641 = vsub.s32 1, %v1640
        %v1642 = vrot.slane %v1422, %v1641
        %v1643 = vlaneseq
        %v1644 = vshrl.u32 %v1643, 7
        %v1645 = vsub.s32 2, %v1644
        %v1646 = vrot.slane %v1422, %v1645
        %v1647 = vlaneseq
        %v1648 = vshrl.u32 %v1647, 7
        %v1649 = vsub.s32 3, %v1648
        %v1650 = vrot.slane %v1422, %v1649
        %v1651 = vlaneseq
        %v1652 = vshrl.u32 %v1651, 7
        %v1653 = vsub.s32 0, %v1652
        %v1654 = vrot.slane %v1424, %v1653
        %v1655 = vlaneseq
        %v1656 = vshrl.u32 %v1655, 7
        %v1657 = vsub.s32 1, %v1656
        %v1658 = vrot.slane %v1424, %v1657
        %v1659 = vlaneseq
        %v1660 = vshrl.u32 %v1659, 7
        %v1661 = vsub.s32 2, %v1660
        %v1662 = vrot.slane %v1424, %v1661
        %v1663 = vlaneseq
        %v1664 = vshrl.u32 %v1663, 7
        %v1665 = vsub.s32 3, %v1664
        %v1666 = vrot.slane %v1424, %v1665
        %v1667 = vlaneseq
        %v1668 = vshrl.u32 %v1667, 7
        %v1669 = vsub.s32 0, %v1668
        %v1670 = vrot.slane %v1426, %v1669
        %v1671 = vlaneseq
        %v1672 = vshrl.u32 %v1671, 7
        %v1673 = vsub.s32 1, %v1672
        %v1674 = vrot.slane %v1426, %v1673
        %v1675 = vlaneseq
        %v1676 = vshrl.u32 %v1675, 7
        %v1677 = vsub.s32 2, %v1676
        %v1678 = vrot.slane %v1426, %v1677
        %v1679 = vlaneseq
        %v1680 = vshrl.u32 %v1679, 7
        %v1681 = vsub.s32 3, %v1680
        %v1682 = vrot.slane %v1426, %v1681
        %v1747 = vsub.f32 %v1267, %v1430
        %v1748 = vsub.f32 %v1268, %v1434
        %v1749 = vsub.f32 %v1269, %v1438
        %v1750 = vsub.f32 %v1270, %v1442
        %v1751 = vsub.f32 %v1267, %v1446
        %v1752 = vsub.f32 %v1268, %v1450
        %v1753 = vsub.f32 %v1269, %v1454
        %v1754 = vsub.f32 %v1270, %v1458
        %v1755 = vsub.f32 %v1267, %v1462
        %v1756 = vsub.f32 %v1268, %v1466
        %v1757 = vsub.f32 %v1269, %v1470
        %v1758 = vsub.f32 %v1270, %v1474
        %v1759 = vsub.f32 %v1267, %v1478
        %v1760 = vsub.f32 %v1268, %v1482
        %v1761 = vsub.f32 %v1269, %v1486
        %v1762 = vsub.f32 %v1270, %v1490
        %v1763 = vsub.f32 %v1267, %v1494
        %v1764 = vsub.f32 %v1268, %v1498
        %v1765 = vsub.f32 %v1269, %v1502
        %v1766 = vsub.f32 %v1270, %v1506
        %v1767 = vsub.f32 %v1267, %v1510
        %v1768 = vsub.f32 %v1268, %v1514
        %v1769 = vsub.f32 %v1269, %v1518
        %v1770 = vsub.f32 %v1270, %v1522
        %v1771 = vsub.f32 %v1267, %v1526
        %v1772 = vsub.f32 %v1268, %v1530
        %v1773 = vsub.f32 %v1269, %v1534
        %v1774 = vsub.f32 %v1270, %v1538
        %v1775 = vsub.f32 %v1267, %v1542
        %v1776 = vsub.f32 %v1268, %v1546
        %v1777 = vsub.f32 %v1269, %v1550
        %v1778 = vsub.f32 %v1270, %v1554
        %v1779 = vsub.f32 %v1271, %v1558
        %v1780 = vsub.f32 %v1272, %v1562
        %v1781 = vsub.f32 %v1273, %v1566
        %v1782 = vsub.f32 %v1274, %v1570
        %v1783 = vsub.f32 %v1271, %v1574
        %v1784 = vsub.f32 %v1272, %v1578
        %v1785 = vsub.f32 %v1273, %v1582
        %v1786 = vsub.f32 %v1274, %v1586
        %v1787 = vsub.f32 %v1271, %v1590
        %v1788 = vsub.f32 %v1272, %v1594
        %v1789 = vsub.f32 %v1273, %v1598
        %v1790 = vsub.f32 %v1274, %v1602
        %v1791 = vsub.f32 %v1271, %v1606
        %v1792 = vsub.f32 %v1272, %v1610
        %v1793 = vsub.f32 %v1273, %v1614
        %v1794 = vsub.f32 %v1274, %v1618
        %v1795 = vsub.f32 %v1271, %v1622
        %v1796 = vsub.f32 %v1272, %v1626
        %v1797 = vsub.f32 %v1273, %v1630
        %v1798 = vsub.f32 %v1274, %v1634
        %v1799 = vsub.f32 %v1271, %v1638
        %v1800 = vsub.f32 %v1272, %v1642
        %v1801 = vsub.f32 %v1273, %v1646
        %v1802 = vsub.f32 %v1274, %v1650
        %v1803 = vsub.f32 %v1271, %v1654
        %v1804 = vsub.f32 %v1272, %v1658
        %v1805 = vsub.f32 %v1273, %v1662
        %v1806 = vsub.f32 %v1274, %v1666
        %v1807 = vsub.f32 %v1271, %v1670
        %v1808 = vsub.f32 %v1272, %v1674
        %v1809 = vsub.f32 %v1273, %v1678
        %v1810 = vsub.f32 %v1274, %v1682
        %v1811 = vmax.f32 %v1747, 0.0
        %v1812 = vmax.f32 %v1748, 0.0
        %v1813 = vmax.f32 %v1749, 0.0
        %v1814 = vmax.f32 %v1750, 0.0
        %v1815 = vmax.f32 %v1751, 0.0
        %v1816 = vmax.f32 %v1752, 0.0
        %v1817 = vmax.f32 %v1753, 0.0
        %v1818 = vmax.f32 %v1754, 0.0
        %v1819 = vmax.f32 %v1755, 0.0
        %v1820 = vmax.f32 %v1756, 0.0
        %v1821 = vmax.f32 %v1757, 0.0
        %v1822 = vmax.f32 %v1758, 0.0
        %v1823 = vmax.f32 %v1759, 0.0
        %v1824 = vmax.f32 %v1760, 0.0
        %v1825 = vmax.f32 %v1761, 0.0
        %v1826 = vmax.f32 %v1762, 0.0
        %v1827 = vmax.f32 %v1763, 0.0
        %v1828 = vmax.f32 %v1764, 0.0
        %v1829 = vmax.f32 %v1765, 0.0
        %v1830 = vmax.f32 %v1766, 0.0
        %v1831 = vmax.f32 %v1767, 0.0
        %v1832 = vmax.f32 %v1768, 0.0
        %v1833 = vmax.f32 %v1769, 0.0
        %v1834 = vmax.f32 %v1770, 0.0
        %v1835 = vmax.f32 %v1771, 0.0
        %v1836 = vmax.f32 %v1772, 0.0
        %v1837 = vmax.f32 %v1773, 0.0
        %v1838 = vmax.f32 %v1774, 0.0
        %v1839 = vmax.f32 %v1775, 0.0
        %v1840 = vmax.f32 %v1776, 0.0
        %v1841 = vmax.f32 %v1777, 0.0
        %v1842 = vmax.f32 %v1778, 0.0
        %v1843 = vmax.f32 %v1779, 0.0
        %v1844 = vmax.f32 %v1780, 0.0
        %v1845 = vmax.f32 %v1781, 0.0
        %v1846 = vmax.f32 %v1782, 0.0
        %v1847 = vmax.f32 %v1783, 0.0
        %v1848 = vmax.f32 %v1784, 0.0
        %v1849 = vmax.f32 %v1785, 0.0
        %v1850 = vmax.f32 %v1786, 0.0
        %v1851 = vmax.f32 %v1787, 0.0
        %v1852 = vmax.f32 %v1788, 0.0
        %v1853 = vmax.f32 %v1789, 0.0
        %v1854 = vmax.f32 %v1790, 0.0
        %v1855 = vmax.f32 %v1791, 0.0
        %v1856 = vmax.f32 %v1792, 0.0
        %v1857 = vmax.f32 %v1793, 0.0
        %v1858 = vmax.f32 %v1794, 0.0
        %v1859 = vmax.f32 %v1795, 0.0
        %v1860 = vmax.f32 %v1796, 0.0
        %v1861 = vmax.f32 %v1797, 0.0
        %v1862 = vmax.f32 %v1798, 0.0
        %v1863 = vmax.f32 %v1799, 0.0
        %v1864 = vmax.f32 %v1800, 0.0
        %v1865 = vmax.f32 %v1801, 0.0
        %v1866 = vmax.f32 %v1802, 0.0
        %v1867 = vmax.f32 %v1803, 0.0
        %v1868 = vmax.f32 %v1804, 0.0
        %v1869 = vmax.f32 %v1805, 0.0
        %v1870 = vmax.f32 %v1806, 0.0
        %v1871 = vmax.f32 %v1807, 0.0
        %v1872 = vmax.f32 %v1808, 0.0
        %v1873 = vmax.f32 %v1809, 0.0
        %v1874 = vmax.f32 %v1810, 0.0
        %v1875 = vpack.c.bf16 %v1811, %v1811
        %v1876 = vpack.c.bf16 %v1812, %v1812
        %v1877 = vpack.c.bf16 %v1813, %v1813
        %v1878 = vpack.c.bf16 %v1814, %v1814
        %v1879 = vpack.c.bf16 %v1815, %v1815
        %v1880 = vpack.c.bf16 %v1816, %v1816
        %v1881 = vpack.c.bf16 %v1817, %v1817
        %v1882 = vpack.c.bf16 %v1818, %v1818
        %v1883 = vpack.c.bf16 %v1819, %v1819
        %v1884 = vpack.c.bf16 %v1820, %v1820
        %v1885 = vpack.c.bf16 %v1821, %v1821
        %v1886 = vpack.c.bf16 %v1822, %v1822
        %v1887 = vpack.c.bf16 %v1823, %v1823
        %v1888 = vpack.c.bf16 %v1824, %v1824
        %v1889 = vpack.c.bf16 %v1825, %v1825
        %v1890 = vpack.c.bf16 %v1826, %v1826
        %v1891 = vpack.c.bf16 %v1827, %v1827
        %v1892 = vpack.c.bf16 %v1828, %v1828
        %v1893 = vpack.c.bf16 %v1829, %v1829
        %v1894 = vpack.c.bf16 %v1830, %v1830
        %v1895 = vpack.c.bf16 %v1831, %v1831
        %v1896 = vpack.c.bf16 %v1832, %v1832
        %v1897 = vpack.c.bf16 %v1833, %v1833
        %v1898 = vpack.c.bf16 %v1834, %v1834
        %v1899 = vpack.c.bf16 %v1835, %v1835
        %v1900 = vpack.c.bf16 %v1836, %v1836
        %v1901 = vpack.c.bf16 %v1837, %v1837
        %v1902 = vpack.c.bf16 %v1838, %v1838
        %v1903 = vpack.c.bf16 %v1839, %v1839
        %v1904 = vpack.c.bf16 %v1840, %v1840
        %v1905 = vpack.c.bf16 %v1841, %v1841
        %v1906 = vpack.c.bf16 %v1842, %v1842
        %v1907 = vpack.c.bf16 %v1843, %v1843
        %v1908 = vpack.c.bf16 %v1844, %v1844
        %v1909 = vpack.c.bf16 %v1845, %v1845
        %v1910 = vpack.c.bf16 %v1846, %v1846
        %v1911 = vpack.c.bf16 %v1847, %v1847
        %v1912 = vpack.c.bf16 %v1848, %v1848
        %v1913 = vpack.c.bf16 %v1849, %v1849
        %v1914 = vpack.c.bf16 %v1850, %v1850
        %v1915 = vpack.c.bf16 %v1851, %v1851
        %v1916 = vpack.c.bf16 %v1852, %v1852
        %v1917 = vpack.c.bf16 %v1853, %v1853
        %v1918 = vpack.c.bf16 %v1854, %v1854
        %v1919 = vpack.c.bf16 %v1855, %v1855
        %v1920 = vpack.c.bf16 %v1856, %v1856
        %v1921 = vpack.c.bf16 %v1857, %v1857
        %v1922 = vpack.c.bf16 %v1858, %v1858
        %v1923 = vpack.c.bf16 %v1859, %v1859
        %v1924 = vpack.c.bf16 %v1860, %v1860
        %v1925 = vpack.c.bf16 %v1861, %v1861
        %v1926 = vpack.c.bf16 %v1862, %v1862
        %v1927 = vpack.c.bf16 %v1863, %v1863
        %v1928 = vpack.c.bf16 %v1864, %v1864
        %v1929 = vpack.c.bf16 %v1865, %v1865
        %v1930 = vpack.c.bf16 %v1866, %v1866
        %v1931 = vpack.c.bf16 %v1867, %v1867
        %v1932 = vpack.c.bf16 %v1868, %v1868
        %v1933 = vpack.c.bf16 %v1869, %v1869
        %v1934 = vpack.c.bf16 %v1870, %v1870
        %v1935 = vpack.c.bf16 %v1871, %v1871
        %v1936 = vpack.c.bf16 %v1872, %v1872
        %v1937 = vpack.c.bf16 %v1873, %v1873
        %v1938 = vpack.c.bf16 %v1874, %v1874
        %v2003 = vunpack.c.l.b16 %v1875
        %v2004 = vunpack.c.l.b16 %v1876
        %v2005 = vunpack.c.l.b16 %v1877
        %v2006 = vunpack.c.l.b16 %v1878
        %v2007 = vunpack.c.l.b16 %v1879
        %v2008 = vunpack.c.l.b16 %v1880
        %v2009 = vunpack.c.l.b16 %v1881
        %v2010 = vunpack.c.l.b16 %v1882
        %v2011 = vunpack.c.l.b16 %v1883
        %v2012 = vunpack.c.l.b16 %v1884
        %v2013 = vunpack.c.l.b16 %v1885
        %v2014 = vunpack.c.l.b16 %v1886
        %v2015 = vunpack.c.l.b16 %v1887
        %v2016 = vunpack.c.l.b16 %v1888
        %v2017 = vunpack.c.l.b16 %v1889
        %v2018 = vunpack.c.l.b16 %v1890
        %v2019 = vunpack.c.l.b16 %v1891
        %v2020 = vunpack.c.l.b16 %v1892
        %v2021 = vunpack.c.l.b16 %v1893
        %v2022 = vunpack.c.l.b16 %v1894
        %v2023 = vunpack.c.l.b16 %v1895
        %v2024 = vunpack.c.l.b16 %v1896
        %v2025 = vunpack.c.l.b16 %v1897
        %v2026 = vunpack.c.l.b16 %v1898
        %v2027 = vunpack.c.l.b16 %v1899
        %v2028 = vunpack.c.l.b16 %v1900
        %v2029 = vunpack.c.l.b16 %v1901
        %v2030 = vunpack.c.l.b16 %v1902
        %v2031 = vunpack.c.l.b16 %v1903
        %v2032 = vunpack.c.l.b16 %v1904
        %v2033 = vunpack.c.l.b16 %v1905
        %v2034 = vunpack.c.l.b16 %v1906
        %v2035 = vunpack.c.l.b16 %v1907
        %v2036 = vunpack.c.l.b16 %v1908
        %v2037 = vunpack.c.l.b16 %v1909
        %v2038 = vunpack.c.l.b16 %v1910
        %v2039 = vunpack.c.l.b16 %v1911
        %v2040 = vunpack.c.l.b16 %v1912
        %v2041 = vunpack.c.l.b16 %v1913
        %v2042 = vunpack.c.l.b16 %v1914
        %v2043 = vunpack.c.l.b16 %v1915
        %v2044 = vunpack.c.l.b16 %v1916
        %v2045 = vunpack.c.l.b16 %v1917
        %v2046 = vunpack.c.l.b16 %v1918
        %v2047 = vunpack.c.l.b16 %v1919
        %v2048 = vunpack.c.l.b16 %v1920
        %v2049 = vunpack.c.l.b16 %v1921
        %v2050 = vunpack.c.l.b16 %v1922
        %v2051 = vunpack.c.l.b16 %v1923
        %v2052 = vunpack.c.l.b16 %v1924
        %v2053 = vunpack.c.l.b16 %v1925
        %v2054 = vunpack.c.l.b16 %v1926
        %v2055 = vunpack.c.l.b16 %v1927
        %v2056 = vunpack.c.l.b16 %v1928
        %v2057 = vunpack.c.l.b16 %v1929
        %v2058 = vunpack.c.l.b16 %v1930
        %v2059 = vunpack.c.l.b16 %v1931
        %v2060 = vunpack.c.l.b16 %v1932
        %v2061 = vunpack.c.l.b16 %v1933
        %v2062 = vunpack.c.l.b16 %v1934
        %v2063 = vunpack.c.l.b16 %v1935
        %v2064 = vunpack.c.l.b16 %v1936
        %v2065 = vunpack.c.l.b16 %v1937
        %v2066 = vunpack.c.l.b16 %v1938
        %v2067 = vld [vmem:[#allocation7] sm:$0xf]
        %v2068 = vld [vmem:[#allocation7 + $0x4] sm:$0xf]
        %v2069 = vld [vmem:[#allocation7 + $0x8] sm:$0xf]
        %v2070 = vld [vmem:[#allocation7 + $0xc] sm:$0xf]
        %v2071 = vld [vmem:[#allocation7 + $0x10] sm:$0xf]
        %v2072 = vld [vmem:[#allocation7 + $0x14] sm:$0xf]
        %v2073 = vld [vmem:[#allocation7 + $0x18] sm:$0xf]
        %v2074 = vld [vmem:[#allocation7 + $0x1c] sm:$0xf]
        %v2075 = vld [vmem:[#allocation7 + $0x20] sm:$0xf]
        %v2076 = vld [vmem:[#allocation7 + $0x24] sm:$0xf]
        %v2077 = vld [vmem:[#allocation7 + $0x28] sm:$0xf]
        %v2078 = vld [vmem:[#allocation7 + $0x2c] sm:$0xf]
        %v2079 = vld [vmem:[#allocation7 + $0x30] sm:$0xf]
        %v2080 = vld [vmem:[#allocation7 + $0x34] sm:$0xf]
        %v2081 = vld [vmem:[#allocation7 + $0x38] sm:$0xf]
        %v2082 = vld [vmem:[#allocation7 + $0x3c] sm:$0xf]
        %v2083 = vld [vmem:[#allocation7 + $0x40] sm:$0xf]
        %v2084 = vld [vmem:[#allocation7 + $0x44] sm:$0xf]
        %v2085 = vld [vmem:[#allocation7 + $0x48] sm:$0xf]
        %v2086 = vld [vmem:[#allocation7 + $0x4c] sm:$0xf]
        %v2087 = vld [vmem:[#allocation7 + $0x50] sm:$0xf]
        %v2088 = vld [vmem:[#allocation7 + $0x54] sm:$0xf]
        %v2089 = vld [vmem:[#allocation7 + $0x58] sm:$0xf]
        %v2090 = vld [vmem:[#allocation7 + $0x5c] sm:$0xf]
        %v2091 = vld [vmem:[#allocation7 + $0x60] sm:$0xf]
        %v2092 = vld [vmem:[#allocation7 + $0x64] sm:$0xf]
        %v2093 = vld [vmem:[#allocation7 + $0x68] sm:$0xf]
        %v2094 = vld [vmem:[#allocation7 + $0x6c] sm:$0xf]
        %v2095 = vld [vmem:[#allocation7 + $0x70] sm:$0xf]
        %v2096 = vld [vmem:[#allocation7 + $0x74] sm:$0xf]
        %v2097 = vld [vmem:[#allocation7 + $0x78] sm:$0xf]
        %v2098 = vld [vmem:[#allocation7 + $0x7c] sm:$0xf]
        %v2099 = vld [vmem:[#allocation7 + $0x80] sm:$0xf]
        %v2100 = vld [vmem:[#allocation7 + $0x84] sm:$0xf]
        %v2101 = vld [vmem:[#allocation7 + $0x88] sm:$0xf]
        %v2102 = vld [vmem:[#allocation7 + $0x8c] sm:$0xf]
        %v2103 = vld [vmem:[#allocation7 + $0x90] sm:$0xf]
        %v2104 = vld [vmem:[#allocation7 + $0x94] sm:$0xf]
        %v2105 = vld [vmem:[#allocation7 + $0x98] sm:$0xf]
        %v2106 = vld [vmem:[#allocation7 + $0x9c] sm:$0xf]
        %v2107 = vld [vmem:[#allocation7 + $0xa0] sm:$0xf]
        %v2108 = vld [vmem:[#allocation7 + $0xa4] sm:$0xf]
        %v2109 = vld [vmem:[#allocation7 + $0xa8] sm:$0xf]
        %v2110 = vld [vmem:[#allocation7 + $0xac] sm:$0xf]
        %v2111 = vld [vmem:[#allocation7 + $0xb0] sm:$0xf]
        %v2112 = vld [vmem:[#allocation7 + $0xb4] sm:$0xf]
        %v2113 = vld [vmem:[#allocation7 + $0xb8] sm:$0xf]
        %v2114 = vld [vmem:[#allocation7 + $0xbc] sm:$0xf]
        %v2115 = vld [vmem:[#allocation7 + $0xc0] sm:$0xf]
        %v2116 = vld [vmem:[#allocation7 + $0xc4] sm:$0xf]
        %v2117 = vld [vmem:[#allocation7 + $0xc8] sm:$0xf]
        %v2118 = vld [vmem:[#allocation7 + $0xcc] sm:$0xf]
        %v2119 = vld [vmem:[#allocation7 + $0xd0] sm:$0xf]
        %v2120 = vld [vmem:[#allocation7 + $0xd4] sm:$0xf]
        %v2121 = vld [vmem:[#allocation7 + $0xd8] sm:$0xf]
        %v2122 = vld [vmem:[#allocation7 + $0xdc] sm:$0xf]
        %v2123 = vld [vmem:[#allocation7 + $0xe0] sm:$0xf]
        %v2124 = vld [vmem:[#allocation7 + $0xe4] sm:$0xf]
        %v2125 = vld [vmem:[#allocation7 + $0xe8] sm:$0xf]
        %v2126 = vld [vmem:[#allocation7 + $0xec] sm:$0xf]
        %v2127 = vld [vmem:[#allocation7 + $0xf0] sm:$0xf]
        %v2128 = vld [vmem:[#allocation7 + $0xf4] sm:$0xf]
        %v2129 = vld [vmem:[#allocation7 + $0xf8] sm:$0xf]
        %v2130 = vld [vmem:[#allocation7 + $0xfc] sm:$0xf]
        %v2131 = vpack.c.b16 %v2007, %v2003
        %v2132 = vpack.c.b16 %v2008, %v2004
        %v2133 = vpack.c.b16 %v2009, %v2005
        %v2134 = vpack.c.b16 %v2010, %v2006
        %v2135 = vpack.c.b16 %v2015, %v2011
        %v2136 = vpack.c.b16 %v2016, %v2012
        %v2137 = vpack.c.b16 %v2017, %v2013
        %v2138 = vpack.c.b16 %v2018, %v2014
        %v2139 = vpack.c.b16 %v2023, %v2019
        %v2140 = vpack.c.b16 %v2024, %v2020
        %v2141 = vpack.c.b16 %v2025, %v2021
        %v2142 = vpack.c.b16 %v2026, %v2022
        %v2143 = vpack.c.b16 %v2031, %v2027
        %v2144 = vpack.c.b16 %v2032, %v2028
        %v2145 = vpack.c.b16 %v2033, %v2029
        %v2146 = vpack.c.b16 %v2034, %v2030
        %v2147 = vpack.c.b16 %v2039, %v2035
        %v2148 = vpack.c.b16 %v2040, %v2036
        %v2149 = vpack.c.b16 %v2041, %v2037
        %v2150 = vpack.c.b16 %v2042, %v2038
        %v2151 = vpack.c.b16 %v2047, %v2043
        %v2152 = vpack.c.b16 %v2048, %v2044
        %v2153 = vpack.c.b16 %v2049, %v2045
        %v2154 = vpack.c.b16 %v2050, %v2046
        %v2155 = vpack.c.b16 %v2055, %v2051
        %v2156 = vpack.c.b16 %v2056, %v2052
        %v2157 = vpack.c.b16 %v2057, %v2053
        %v2158 = vpack.c.b16 %v2058, %v2054
        %v2159 = vpack.c.b16 %v2063, %v2059
        %v2160 = vpack.c.b16 %v2064, %v2060
        %v2161 = vpack.c.b16 %v2065, %v2061
        %v2162 = vpack.c.b16 %v2066, %v2062
        %v2259 = vunpack.c.l.b16 %v2067
        %v2260 = vunpack.c.l.b16 %v2068
        %v2261 = vunpack.c.l.b16 %v2069
        %v2262 = vunpack.c.l.b16 %v2070
        %v2263 = vunpack.c.l.b16 %v2071
        %v2264 = vunpack.c.l.b16 %v2072
        %v2265 = vunpack.c.l.b16 %v2073
        %v2266 = vunpack.c.l.b16 %v2074
        %v2267 = vunpack.c.l.b16 %v2075
        %v2268 = vunpack.c.l.b16 %v2076
        %v2269 = vunpack.c.l.b16 %v2077
        %v2270 = vunpack.c.l.b16 %v2078
        %v2271 = vunpack.c.l.b16 %v2079
        %v2272 = vunpack.c.l.b16 %v2080
        %v2273 = vunpack.c.l.b16 %v2081
        %v2274 = vunpack.c.l.b16 %v2082
        %v2275 = vunpack.c.l.b16 %v2083
        %v2276 = vunpack.c.l.b16 %v2084
        %v2277 = vunpack.c.l.b16 %v2085
        %v2278 = vunpack.c.l.b16 %v2086
        %v2279 = vunpack.c.l.b16 %v2087
        %v2280 = vunpack.c.l.b16 %v2088
        %v2281 = vunpack.c.l.b16 %v2089
        %v2282 = vunpack.c.l.b16 %v2090
        %v2283 = vunpack.c.l.b16 %v2091
        %v2284 = vunpack.c.l.b16 %v2092
        %v2285 = vunpack.c.l.b16 %v2093
        %v2286 = vunpack.c.l.b16 %v2094
        %v2287 = vunpack.c.l.b16 %v2095
        %v2288 = vunpack.c.l.b16 %v2096
        %v2289 = vunpack.c.l.b16 %v2097
        %v2290 = vunpack.c.l.b16 %v2098
        %v2291 = vunpack.c.l.b16 %v2099
        %v2292 = vunpack.c.l.b16 %v2100
        %v2293 = vunpack.c.l.b16 %v2101
        %v2294 = vunpack.c.l.b16 %v2102
        %v2295 = vunpack.c.l.b16 %v2103
        %v2296 = vunpack.c.l.b16 %v2104
        %v2297 = vunpack.c.l.b16 %v2105
        %v2298 = vunpack.c.l.b16 %v2106
        %v2299 = vunpack.c.l.b16 %v2107
        %v2300 = vunpack.c.l.b16 %v2108
        %v2301 = vunpack.c.l.b16 %v2109
        %v2302 = vunpack.c.l.b16 %v2110
        %v2303 = vunpack.c.l.b16 %v2111
        %v2304 = vunpack.c.l.b16 %v2112
        %v2305 = vunpack.c.l.b16 %v2113
        %v2306 = vunpack.c.l.b16 %v2114
        %v2307 = vunpack.c.l.b16 %v2115
        %v2308 = vunpack.c.l.b16 %v2116
        %v2309 = vunpack.c.l.b16 %v2117
        %v2310 = vunpack.c.l.b16 %v2118
        %v2311 = vunpack.c.l.b16 %v2119
        %v2312 = vunpack.c.l.b16 %v2120
        %v2313 = vunpack.c.l.b16 %v2121
        %v2314 = vunpack.c.l.b16 %v2122
        %v2315 = vunpack.c.l.b16 %v2123
        %v2316 = vunpack.c.l.b16 %v2124
        %v2317 = vunpack.c.l.b16 %v2125
        %v2318 = vunpack.c.l.b16 %v2126
        %v2319 = vunpack.c.l.b16 %v2127
        %v2320 = vunpack.c.l.b16 %v2128
        %v2321 = vunpack.c.l.b16 %v2129
        %v2322 = vunpack.c.l.b16 %v2130
        %v2323 = vpack.c.b16 %v2260, %v2259
        %v2324 = vpack.c.b16 %v2262, %v2261
        %v2325 = vpack.c.b16 %v2264, %v2263
        %v2326 = vpack.c.b16 %v2266, %v2265
        %v2327 = vpack.c.b16 %v2268, %v2267
        %v2328 = vpack.c.b16 %v2270, %v2269
        %v2329 = vpack.c.b16 %v2272, %v2271
        %v2330 = vpack.c.b16 %v2274, %v2273
        %v2331 = vpack.c.b16 %v2276, %v2275
        %v2332 = vpack.c.b16 %v2278, %v2277
        %v2333 = vpack.c.b16 %v2280, %v2279
        %v2334 = vpack.c.b16 %v2282, %v2281
        %v2335 = vpack.c.b16 %v2284, %v2283
        %v2336 = vpack.c.b16 %v2286, %v2285
        %v2337 = vpack.c.b16 %v2288, %v2287
        %v2338 = vpack.c.b16 %v2290, %v2289
        %v2339 = vpack.c.b16 %v2292, %v2291
        %v2340 = vpack.c.b16 %v2294, %v2293
        %v2341 = vpack.c.b16 %v2296, %v2295
        %v2342 = vpack.c.b16 %v2298, %v2297
        %v2343 = vpack.c.b16 %v2300, %v2299
        %v2344 = vpack.c.b16 %v2302, %v2301
        %v2345 = vpack.c.b16 %v2304, %v2303
        %v2346 = vpack.c.b16 %v2306, %v2305
        %v2347 = vpack.c.b16 %v2308, %v2307
        %v2348 = vpack.c.b16 %v2310, %v2309
        %v2349 = vpack.c.b16 %v2312, %v2311
        %v2350 = vpack.c.b16 %v2314, %v2313
        %v2351 = vpack.c.b16 %v2316, %v2315
        %v2352 = vpack.c.b16 %v2318, %v2317
        %v2353 = vpack.c.b16 %v2320, %v2319
        %v2354 = vpack.c.b16 %v2322, %v2321
        %2387 = vmatprep.subr.bf16.mxu0 0
        %2388 = vmatpush1.bf16.msra.mxu0 %v2323
        %2389 = vmatprep.subr.bf16.mxu0 0
        %2390 = vmatpush1.bf16.msra.mxu0 %v2324
        %2391 = vmatprep.subr.bf16.mxu0 0
        %2392 = vmatpush1.bf16.msra.mxu0 %v2325
        %2393 = vmatprep.subr.bf16.mxu0 0
        %2394 = vmatpush1.bf16.msra.mxu0 %v2326
        %2395 = vmatprep.subr.bf16.mxu0 0
        %2396 = vmatpush1.bf16.msra.mxu0 %v2327
        %2397 = vmatprep.subr.bf16.mxu0 0
        %2398 = vmatpush1.bf16.msra.mxu0 %v2328
        %2399 = vmatprep.subr.bf16.mxu0 0
        %2400 = vmatpush1.bf16.msra.mxu0 %v2329
        %2401 = vmatprep.subr.bf16.mxu0 0
        %2402 = vmatpush1.bf16.msra.mxu0 %v2330
        %2403 = vmatprep.subr.bf16.mxu0 0
        %2404 = vmatpush1.bf16.msra.mxu0 %v2331
        %2405 = vmatprep.subr.bf16.mxu0 0
        %2406 = vmatpush1.bf16.msra.mxu0 %v2332
        %2407 = vmatprep.subr.bf16.mxu0 0
        %2408 = vmatpush1.bf16.msra.mxu0 %v2333
        %2409 = vmatprep.subr.bf16.mxu0 0
        %2410 = vmatpush1.bf16.msra.mxu0 %v2334
        %2411 = vmatprep.subr.bf16.mxu0 0
        %2412 = vmatpush1.bf16.msra.mxu0 %v2335
        %2413 = vmatprep.subr.bf16.mxu0 0
        %2414 = vmatpush1.bf16.msra.mxu0 %v2336
        %2415 = vmatprep.subr.bf16.mxu0 0
        %2416 = vmatpush1.bf16.msra.mxu0 %v2337
        %2417 = vmatprep.subr.bf16.mxu0 0
        %2418 = vmatpush1.bf16.msra.mxu0 %v2338
        %2419 = vmatprep.mubr.bf16.mxu0 %v2132
        %2420 = vmatmul.mubr.bf16.gmra.mrb[0].mxu0 %v2131
        %v2421 = vpop.f32.mrb[0].mxu0
        %v2422 = vadd.f32 0.0, %v2421
        %v2423 = vpop.f32.mrb[0].mxu0
        %v2424 = vpop.f32.mrb[0].mxu0
        %v2425 = vadd.f32 0.0, %v2424
        %v2426 = vpop.f32.mrb[0].mxu0
        %2427 = vmatprep.mubr.bf16.mxu0 %v2136
        %2428 = vmatmul.mubr.bf16.gmra.mrb[0].mxu0 %v2135
        %v2429 = vpop.f32.mrb[0].mxu0
        %v2430 = vadd.f32 0.0, %v2429
        %v2431 = vpop.f32.mrb[0].mxu0
        %v2432 = vpop.f32.mrb[0].mxu0
        %v2433 = vadd.f32 0.0, %v2432
        %v2434 = vpop.f32.mrb[0].mxu0
        %2435 = vmatprep.mubr.bf16.mxu0 %v2140
        %2436 = vmatmul.mubr.bf16.gmra.mrb[0].mxu0 %v2139
        %v2437 = vpop.f32.mrb[0].mxu0
        %v2438 = vadd.f32 0.0, %v2437
        %v2439 = vpop.f32.mrb[0].mxu0
        %v2440 = vpop.f32.mrb[0].mxu0
        %v2441 = vadd.f32 0.0, %v2440
        %v2442 = vpop.f32.mrb[0].mxu0
        %2443 = vmatprep.mubr.bf16.mxu0 %v2144
        %2444 = vmatmul.mubr.bf16.gmra.mrb[0].mxu0 %v2143
        %v2445 = vpop.f32.mrb[0].mxu0
        %v2446 = vadd.f32 0.0, %v2445
        %v2447 = vpop.f32.mrb[0].mxu0
        %v2448 = vpop.f32.mrb[0].mxu0
        %v2449 = vadd.f32 0.0, %v2448
        %v2450 = vpop.f32.mrb[0].mxu0
        %2451 = vmatprep.mubr.bf16.mxu0 %v2148
        %2452 = vmatmul.mubr.bf16.gmra.mrb[0].mxu0 %v2147
        %v2453 = vpop.f32.mrb[0].mxu0
        %v2454 = vadd.f32 0.0, %v2453
        %v2455 = vpop.f32.mrb[0].mxu0
        %v2456 = vpop.f32.mrb[0].mxu0
        %v2457 = vadd.f32 0.0, %v2456
        %v2458 = vpop.f32.mrb[0].mxu0
        %2459 = vmatprep.mubr.bf16.mxu0 %v2152
        %2460 = vmatmul.mubr.bf16.gmra.mrb[0].mxu0 %v2151
        %v2461 = vpop.f32.mrb[0].mxu0
        %v2462 = vadd.f32 0.0, %v2461
        %v2463 = vpop.f32.mrb[0].mxu0
        %v2464 = vpop.f32.mrb[0].mxu0
        %v2465 = vadd.f32 0.0, %v2464
        %v2466 = vpop.f32.mrb[0].mxu0
        %2467 = vmatprep.mubr.bf16.mxu0 %v2156
        %2468 = vmatmul.mubr.bf16.gmra.mrb[0].mxu0 %v2155
        %v2469 = vpop.f32.mrb[0].mxu0
        %v2470 = vadd.f32 0.0, %v2469
        %v2471 = vpop.f32.mrb[0].mxu0
        %v2472 = vpop.f32.mrb[0].mxu0
        %v2473 = vadd.f32 0.0, %v2472
        %v2474 = vpop.f32.mrb[0].mxu0
        %2475 = vmatprep.mubr.bf16.mxu0 %v2160
        %2476 = vmatmul.mubr.bf16.gmra.mrb[0].mxu0 %v2159
        %v2477 = vpop.f32.mrb[0].mxu0
        %v2478 = vadd.f32 0.0, %v2477
        %v2479 = vpop.f32.mrb[0].mxu0
        %v2480 = vpop.f32.mrb[0].mxu0
        %v2481 = vadd.f32 0.0, %v2480
        %v2482 = vpop.f32.mrb[0].mxu0
        %2483 = vdwg.mxu0
        %2484 = vmatprep.subr.bf16.mxu0 0
        %2485 = vmatpush1.bf16.msra.mxu0 %v2339
        %2486 = vmatprep.subr.bf16.mxu0 0
        %2487 = vmatpush1.bf16.msra.mxu0 %v2340
        %2488 = vmatprep.subr.bf16.mxu0 0
        %2489 = vmatpush1.bf16.msra.mxu0 %v2341
        %2490 = vmatprep.subr.bf16.mxu0 0
        %2491 = vmatpush1.bf16.msra.mxu0 %v2342
        %2492 = vmatprep.subr.bf16.mxu0 0
        %2493 = vmatpush1.bf16.msra.mxu0 %v2343
        %2494 = vmatprep.subr.bf16.mxu0 0
        %2495 = vmatpush1.bf16.msra.mxu0 %v2344
        %2496 = vmatprep.subr.bf16.mxu0 0
        %2497 = vmatpush1.bf16.msra.mxu0 %v2345
        %2498 = vmatprep.subr.bf16.mxu0 0
        %2499 = vmatpush1.bf16.msra.mxu0 %v2346
        %2500 = vmatprep.subr.bf16.mxu0 0
        %2501 = vmatpush1.bf16.msra.mxu0 %v2347
        %2502 = vmatprep.subr.bf16.mxu0 0
        %2503 = vmatpush1.bf16.msra.mxu0 %v2348
        %2504 = vmatprep.subr.bf16.mxu0 0
        %2505 = vmatpush1.bf16.msra.mxu0 %v2349
        %2506 = vmatprep.subr.bf16.mxu0 0
        %2507 = vmatpush1.bf16.msra.mxu0 %v2350
        %2508 = vmatprep.subr.bf16.mxu0 0
        %2509 = vmatpush1.bf16.msra.mxu0 %v2351
        %2510 = vmatprep.subr.bf16.mxu0 0
        %2511 = vmatpush1.bf16.msra.mxu0 %v2352
        %2512 = vmatprep.subr.bf16.mxu0 0
        %2513 = vmatpush1.bf16.msra.mxu0 %v2353
        %2514 = vmatprep.subr.bf16.mxu0 0
        %2515 = vmatpush1.bf16.msra.mxu0 %v2354
        %2516 = vmatprep.mubr.bf16.mxu0 %v2134
        %2517 = vmatmul.mubr.bf16.gmra.mrb[0].mxu0 %v2133
        %v2518 = vpop.f32.mrb[0].mxu0
        %v2519 = vadd.f32 %v2422, %v2518
        %v2520 = vpop.f32.mrb[0].mxu0
        %v2521 = vpop.f32.mrb[0].mxu0
        %v2522 = vadd.f32 %v2425, %v2521
        %v2523 = vpop.f32.mrb[0].mxu0
        %2524 = vmatprep.mubr.bf16.mxu0 %v2138
        %2525 = vmatmul.mubr.bf16.gmra.mrb[0].mxu0 %v2137
        %v2526 = vpop.f32.mrb[0].mxu0
        %v2527 = vadd.f32 %v2430, %v2526
        %v2528 = vpop.f32.mrb[0].mxu0
        %v2529 = vpop.f32.mrb[0].mxu0
        %v2530 = vadd.f32 %v2433, %v2529
        %v2531 = vpop.f32.mrb[0].mxu0
        %2532 = vmatprep.mubr.bf16.mxu0 %v2142
        %2533 = vmatmul.mubr.bf16.gmra.mrb[0].mxu0 %v2141
        %v2534 = vpop.f32.mrb[0].mxu0
        %v2535 = vadd.f32 %v2438, %v2534
        %v2536 = vpop.f32.mrb[0].mxu0
        %v2537 = vpop.f32.mrb[0].mxu0
        %v2538 = vadd.f32 %v2441, %v2537
        %v2539 = vpop.f32.mrb[0].mxu0
        %2540 = vmatprep.mubr.bf16.mxu0 %v2146
        %2541 = vmatmul.mubr.bf16.gmra.mrb[0].mxu0 %v2145
        %v2542 = vpop.f32.mrb[0].mxu0
        %v2543 = vadd.f32 %v2446, %v2542
        %v2544 = vpop.f32.mrb[0].mxu0
        %v2545 = vpop.f32.mrb[0].mxu0
        %v2546 = vadd.f32 %v2449, %v2545
        %v2547 = vpop.f32.mrb[0].mxu0
        %2548 = vmatprep.mubr.bf16.mxu0 %v2150
        %2549 = vmatmul.mubr.bf16.gmra.mrb[0].mxu0 %v2149
        %v2550 = vpop.f32.mrb[0].mxu0
        %v2551 = vadd.f32 %v2454, %v2550
        %v2552 = vpop.f32.mrb[0].mxu0
        %v2553 = vpop.f32.mrb[0].mxu0
        %v2554 = vadd.f32 %v2457, %v2553
        %v2555 = vpop.f32.mrb[0].mxu0
        %2556 = vmatprep.mubr.bf16.mxu0 %v2154
        %2557 = vmatmul.mubr.bf16.gmra.mrb[0].mxu0 %v2153
        %v2558 = vpop.f32.mrb[0].mxu0
        %v2559 = vadd.f32 %v2462, %v2558
        %v2560 = vpop.f32.mrb[0].mxu0
        %v2561 = vpop.f32.mrb[0].mxu0
        %v2562 = vadd.f32 %v2465, %v2561
        %v2563 = vpop.f32.mrb[0].mxu0
        %2564 = vmatprep.mubr.bf16.mxu0 %v2158
        %2565 = vmatmul.mubr.bf16.gmra.mrb[0].mxu0 %v2157
        %v2566 = vpop.f32.mrb[0].mxu0
        %v2567 = vadd.f32 %v2470, %v2566
        %v2568 = vpop.f32.mrb[0].mxu0
        %v2569 = vpop.f32.mrb[0].mxu0
        %v2570 = vadd.f32 %v2473, %v2569
        %v2571 = vpop.f32.mrb[0].mxu0
        %2572 = vmatprep.mubr.bf16.mxu0 %v2162
        %2573 = vmatmul.mubr.bf16.gmra.mrb[0].mxu0 %v2161
        %v2574 = vpop.f32.mrb[0].mxu0
        %v2575 = vadd.f32 %v2478, %v2574
        %v2576 = vpop.f32.mrb[0].mxu0
        %v2577 = vpop.f32.mrb[0].mxu0
        %v2578 = vadd.f32 %v2481, %v2577
        %v2579 = vpop.f32.mrb[0].mxu0
        %2580 = vdwg.mxu0
        %vm2581 = vcmp.gt.s32.totalorder %v698, 0
        %vm2582 = vcmp.gt.s32.totalorder %v698, 1
        %vm2583 = vcmp.gt.s32.totalorder %v698, 2
        %vm2584 = vcmp.gt.s32.totalorder %v698, 3
        %vm2585 = vcmp.gt.s32.totalorder %v698, 4
        %vm2586 = vcmp.gt.s32.totalorder %v698, 5
        %vm2587 = vcmp.gt.s32.totalorder %v698, 6
        %vm2588 = vcmp.gt.s32.totalorder %v698, 7
        %vm2589 = vcmp.gt.s32.totalorder %v702, 0
        %vm2590 = vcmp.gt.s32.totalorder %v702, 1
        %vm2591 = vcmp.gt.s32.totalorder %v702, 2
        %vm2592 = vcmp.gt.s32.totalorder %v702, 3
        %vm2593 = vcmp.gt.s32.totalorder %v702, 4
        %vm2594 = vcmp.gt.s32.totalorder %v702, 5
        %vm2595 = vcmp.gt.s32.totalorder %v702, 6
        %vm2596 = vcmp.gt.s32.totalorder %v702, 7
        %vm2597 = vmand %vm2581, %vm703
        %vm2598 = vmand %vm2582, %vm703
        %vm2599 = vmand %vm2583, %vm703
        %vm2600 = vmand %vm2584, %vm703
        %vm2601 = vmand %vm2585, %vm703
        %vm2602 = vmand %vm2586, %vm703
        %vm2603 = vmand %vm2587, %vm703
        %vm2604 = vmand %vm2588, %vm703
        %vm2605 = vmand %vm2589, %vm704
        %vm2606 = vmand %vm2590, %vm704
        %vm2607 = vmand %vm2591, %vm704
        %vm2608 = vmand %vm2592, %vm704
        %vm2609 = vmand %vm2593, %vm704
        %vm2610 = vmand %vm2594, %vm704
        %vm2611 = vmand %vm2595, %vm704
        %vm2612 = vmand %vm2596, %vm704
        %v2613 = vsel %vm2597, 1, 0
        %v2614 = vsel %vm2598, 1, 0
        %v2615 = vsel %vm2599, 1, 0
        %v2616 = vsel %vm2600, 1, 0
        %v2617 = vsel %vm2601, 1, 0
        %v2618 = vsel %vm2602, 1, 0
        %v2619 = vsel %vm2603, 1, 0
        %v2620 = vsel %vm2604, 1, 0
        %v2621 = vsel %vm2605, 1, 0
        %v2622 = vsel %vm2606, 1, 0
        %v2623 = vsel %vm2607, 1, 0
        %v2624 = vsel %vm2608, 1, 0
        %v2625 = vsel %vm2609, 1, 0
        %v2626 = vsel %vm2610, 1, 0
        %v2627 = vsel %vm2611, 1, 0
        %v2628 = vsel %vm2612, 1, 0
        %v2629 = vcvt.s32.f32 %v2613
        %v2630 = vcvt.s32.f32 %v2614
        %v2631 = vcvt.s32.f32 %v2615
        %v2632 = vcvt.s32.f32 %v2616
        %v2633 = vcvt.s32.f32 %v2617
        %v2634 = vcvt.s32.f32 %v2618
        %v2635 = vcvt.s32.f32 %v2619
        %v2636 = vcvt.s32.f32 %v2620
        %v2637 = vcvt.s32.f32 %v2621
        %v2638 = vcvt.s32.f32 %v2622
        %v2639 = vcvt.s32.f32 %v2623
        %v2640 = vcvt.s32.f32 %v2624
        %v2641 = vcvt.s32.f32 %v2625
        %v2642 = vcvt.s32.f32 %v2626
        %v2643 = vcvt.s32.f32 %v2627
        %v2644 = vcvt.s32.f32 %v2628
        %v2645 = vmul.f32 %v2519, %v2629
        %v2646 = vmul.f32 %v2522, %v2630
        %v2647 = vmul.f32 %v2527, %v2631
        %v2648 = vmul.f32 %v2530, %v2632
        %v2649 = vmul.f32 %v2535, %v2633
        %v2650 = vmul.f32 %v2538, %v2634
        %v2651 = vmul.f32 %v2543, %v2635
        %v2652 = vmul.f32 %v2546, %v2636
        %v2653 = vmul.f32 %v2551, %v2637
        %v2654 = vmul.f32 %v2554, %v2638
        %v2655 = vmul.f32 %v2559, %v2639
        %v2656 = vmul.f32 %v2562, %v2640
        %v2657 = vmul.f32 %v2567, %v2641
        %v2658 = vmul.f32 %v2570, %v2642
        %v2659 = vmul.f32 %v2575, %v2643
        %v2660 = vmul.f32 %v2578, %v2644
        %v2661 = vrot.slane %v2645, 4
        %v2662 = vadd.f32 %v2645, %v2661
        %v2663 = vrot.slane %v2662, 2
        %v2664 = vadd.f32 %v2662, %v2663
        %v2665 = vrot.slane %v2664, 1
        %v2666 = vadd.f32 %v2664, %v2665
        %v2667 = vrot.slane %v2646, 4
        %v2668 = vadd.f32 %v2646, %v2667
        %v2669 = vrot.slane %v2668, 2
        %v2670 = vadd.f32 %v2668, %v2669
        %v2671 = vrot.slane %v2670, 1
        %v2672 = vadd.f32 %v2670, %v2671
        %v2673 = vrot.slane %v2647, 4
        %v2674 = vadd.f32 %v2647, %v2673
        %v2675 = vrot.slane %v2674, 2
        %v2676 = vadd.f32 %v2674, %v2675
        %v2677 = vrot.slane %v2676, 1
        %v2678 = vadd.f32 %v2676, %v2677
        %v2679 = vrot.slane %v2648, 4
        %v2680 = vadd.f32 %v2648, %v2679
        %v2681 = vrot.slane %v2680, 2
        %v2682 = vadd.f32 %v2680, %v2681
        %v2683 = vrot.slane %v2682, 1
        %v2684 = vadd.f32 %v2682, %v2683
        %v2685 = vrot.slane %v2649, 4
        %v2686 = vadd.f32 %v2649, %v2685
        %v2687 = vrot.slane %v2686, 2
        %v2688 = vadd.f32 %v2686, %v2687
        %v2689 = vrot.slane %v2688, 1
        %v2690 = vadd.f32 %v2688, %v2689
        %v2691 = vrot.slane %v2650, 4
        %v2692 = vadd.f32 %v2650, %v2691
        %v2693 = vrot.slane %v2692, 2
        %v2694 = vadd.f32 %v2692, %v2693
        %v2695 = vrot.slane %v2694, 1
        %v2696 = vadd.f32 %v2694, %v2695
        %v2697 = vrot.slane %v2651, 4
        %v2698 = vadd.f32 %v2651, %v2697
        %v2699 = vrot.slane %v2698, 2
        %v2700 = vadd.f32 %v2698, %v2699
        %v2701 = vrot.slane %v2700, 1
        %v2702 = vadd.f32 %v2700, %v2701
        %v2703 = vrot.slane %v2652, 4
        %v2704 = vadd.f32 %v2652, %v2703
        %v2705 = vrot.slane %v2704, 2
        %v2706 = vadd.f32 %v2704, %v2705
        %v2707 = vrot.slane %v2706, 1
        %v2708 = vadd.f32 %v2706, %v2707
        %v2709 = vrot.slane %v2653, 4
        %v2710 = vadd.f32 %v2653, %v2709
        %v2711 = vrot.slane %v2710, 2
        %v2712 = vadd.f32 %v2710, %v2711
        %v2713 = vrot.slane %v2712, 1
        %v2714 = vadd.f32 %v2712, %v2713
        %v2715 = vrot.slane %v2654, 4
        %v2716 = vadd.f32 %v2654, %v2715
        %v2717 = vrot.slane %v2716, 2
        %v2718 = vadd.f32 %v2716, %v2717
        %v2719 = vrot.slane %v2718, 1
        %v2720 = vadd.f32 %v2718, %v2719
        %v2721 = vrot.slane %v2655, 4
        %v2722 = vadd.f32 %v2655, %v2721
        %v2723 = vrot.slane %v2722, 2
        %v2724 = vadd.f32 %v2722, %v2723
        %v2725 = vrot.slane %v2724, 1
        %v2726 = vadd.f32 %v2724, %v2725
        %v2727 = vrot.slane %v2656, 4
        %v2728 = vadd.f32 %v2656, %v2727
        %v2729 = vrot.slane %v2728, 2
        %v2730 = vadd.f32 %v2728, %v2729
        %v2731 = vrot.slane %v2730, 1
        %v2732 = vadd.f32 %v2730, %v2731
        %v2733 = vrot.slane %v2657, 4
        %v2734 = vadd.f32 %v2657, %v2733
        %v2735 = vrot.slane %v2734, 2
        %v2736 = vadd.f32 %v2734, %v2735
        %v2737 = vrot.slane %v2736, 1
        %v2738 = vadd.f32 %v2736, %v2737
        %v2739 = vrot.slane %v2658, 4
        %v2740 = vadd.f32 %v2658, %v2739
        %v2741 = vrot.slane %v2740, 2
        %v2742 = vadd.f32 %v2740, %v2741
        %v2743 = vrot.slane %v2742, 1
        %v2744 = vadd.f32 %v2742, %v2743
        %v2745 = vrot.slane %v2659, 4
        %v2746 = vadd.f32 %v2659, %v2745
        %v2747 = vrot.slane %v2746, 2
        %v2748 = vadd.f32 %v2746, %v2747
        %v2749 = vrot.slane %v2748, 1
        %v2750 = vadd.f32 %v2748, %v2749
        %v2751 = vrot.slane %v2660, 4
        %v2752 = vadd.f32 %v2660, %v2751
        %v2753 = vrot.slane %v2752, 2
        %v2754 = vadd.f32 %v2752, %v2753
        %v2755 = vrot.slane %v2754, 1
        %v2756 = vadd.f32 %v2754, %v2755
        %v2757 = vadd.f32 %v2666, %v2672
        %v2758 = vadd.f32 %v2757, %v2678
        %v2759 = vadd.f32 %v2758, %v2684
        %v2760 = vadd.f32 %v2759, %v2690
        %v2761 = vadd.f32 %v2760, %v2696
        %v2762 = vadd.f32 %v2761, %v2702
        %v2763 = vadd.f32 %v2762, %v2708
        %v2764 = vadd.f32 %v2714, %v2720
        %v2765 = vadd.f32 %v2764, %v2726
        %v2766 = vadd.f32 %v2765, %v2732
        %v2767 = vadd.f32 %v2766, %v2738
        %v2768 = vadd.f32 %v2767, %v2744
        %v2769 = vadd.f32 %v2768, %v2750
        %v2770 = vadd.f32 %v2769, %v2756
        %v2771 = vmul.f32 %v2763, %v422
        %v2772 = vmul.f32 %v2770, %v423
        %v2773 = vmul.f32 %v2645, %v2645
        %v2774 = vmul.f32 %v2646, %v2646
        %v2775 = vmul.f32 %v2647, %v2647
        %v2776 = vmul.f32 %v2648, %v2648
        %v2777 = vmul.f32 %v2649, %v2649
        %v2778 = vmul.f32 %v2650, %v2650
        %v2779 = vmul.f32 %v2651, %v2651
        %v2780 = vmul.f32 %v2652, %v2652
        %v2781 = vmul.f32 %v2653, %v2653
        %v2782 = vmul.f32 %v2654, %v2654
        %v2783 = vmul.f32 %v2655, %v2655
        %v2784 = vmul.f32 %v2656, %v2656
        %v2785 = vmul.f32 %v2657, %v2657
        %v2786 = vmul.f32 %v2658, %v2658
        %v2787 = vmul.f32 %v2659, %v2659
        %v2788 = vmul.f32 %v2660, %v2660
        %v2789 = vrot.slane %v2773, 4
        %v2790 = vadd.f32 %v2773, %v2789
        %v2791 = vrot.slane %v2790, 2
        %v2792 = vadd.f32 %v2790, %v2791
        %v2793 = vrot.slane %v2792, 1
        %v2794 = vadd.f32 %v2792, %v2793
        %v2795 = vrot.slane %v2774, 4
        %v2796 = vadd.f32 %v2774, %v2795
        %v2797 = vrot.slane %v2796, 2
        %v2798 = vadd.f32 %v2796, %v2797
        %v2799 = vrot.slane %v2798, 1
        %v2800 = vadd.f32 %v2798, %v2799
        %v2801 = vrot.slane %v2775, 4
        %v2802 = vadd.f32 %v2775, %v2801
        %v2803 = vrot.slane %v2802, 2
        %v2804 = vadd.f32 %v2802, %v2803
        %v2805 = vrot.slane %v2804, 1
        %v2806 = vadd.f32 %v2804, %v2805
        %v2807 = vrot.slane %v2776, 4
        %v2808 = vadd.f32 %v2776, %v2807
        %v2809 = vrot.slane %v2808, 2
        %v2810 = vadd.f32 %v2808, %v2809
        %v2811 = vrot.slane %v2810, 1
        %v2812 = vadd.f32 %v2810, %v2811
        %v2813 = vrot.slane %v2777, 4
        %v2814 = vadd.f32 %v2777, %v2813
        %v2815 = vrot.slane %v2814, 2
        %v2816 = vadd.f32 %v2814, %v2815
        %v2817 = vrot.slane %v2816, 1
        %v2818 = vadd.f32 %v2816, %v2817
        %v2819 = vrot.slane %v2778, 4
        %v2820 = vadd.f32 %v2778, %v2819
        %v2821 = vrot.slane %v2820, 2
        %v2822 = vadd.f32 %v2820, %v2821
        %v2823 = vrot.slane %v2822, 1
        %v2824 = vadd.f32 %v2822, %v2823
        %v2825 = vrot.slane %v2779, 4
        %v2826 = vadd.f32 %v2779, %v2825
        %v2827 = vrot.slane %v2826, 2
        %v2828 = vadd.f32 %v2826, %v2827
        %v2829 = vrot.slane %v2828, 1
        %v2830 = vadd.f32 %v2828, %v2829
        %v2831 = vrot.slane %v2780, 4
        %v2832 = vadd.f32 %v2780, %v2831
        %v2833 = vrot.slane %v2832, 2
        %v2834 = vadd.f32 %v2832, %v2833
        %v2835 = vrot.slane %v2834, 1
        %v2836 = vadd.f32 %v2834, %v2835
        %v2837 = vrot.slane %v2781, 4
        %v2838 = vadd.f32 %v2781, %v2837
        %v2839 = vrot.slane %v2838, 2
        %v2840 = vadd.f32 %v2838, %v2839
        %v2841 = vrot.slane %v2840, 1
        %v2842 = vadd.f32 %v2840, %v2841
        %v2843 = vrot.slane %v2782, 4
        %v2844 = vadd.f32 %v2782, %v2843
        %v2845 = vrot.slane %v2844, 2
        %v2846 = vadd.f32 %v2844, %v2845
        %v2847 = vrot.slane %v2846, 1
        %v2848 = vadd.f32 %v2846, %v2847
        %v2849 = vrot.slane %v2783, 4
        %v2850 = vadd.f32 %v2783, %v2849
        %v2851 = vrot.slane %v2850, 2
        %v2852 = vadd.f32 %v2850, %v2851
        %v2853 = vrot.slane %v2852, 1
        %v2854 = vadd.f32 %v2852, %v2853
        %v2855 = vrot.slane %v2784, 4
        %v2856 = vadd.f32 %v2784, %v2855
        %v2857 = vrot.slane %v2856, 2
        %v2858 = vadd.f32 %v2856, %v2857
        %v2859 = vrot.slane %v2858, 1
        %v2860 = vadd.f32 %v2858, %v2859
        %v2861 = vrot.slane %v2785, 4
        %v2862 = vadd.f32 %v2785, %v2861
        %v2863 = vrot.slane %v2862, 2
        %v2864 = vadd.f32 %v2862, %v2863
        %v2865 = vrot.slane %v2864, 1
        %v2866 = vadd.f32 %v2864, %v2865
        %v2867 = vrot.slane %v2786, 4
        %v2868 = vadd.f32 %v2786, %v2867
        %v2869 = vrot.slane %v2868, 2
        %v2870 = vadd.f32 %v2868, %v2869
        %v2871 = vrot.slane %v2870, 1
        %v2872 = vadd.f32 %v2870, %v2871
        %v2873 = vrot.slane %v2787, 4
        %v2874 = vadd.f32 %v2787, %v2873
        %v2875 = vrot.slane %v2874, 2
        %v2876 = vadd.f32 %v2874, %v2875
        %v2877 = vrot.slane %v2876, 1
        %v2878 = vadd.f32 %v2876, %v2877
        %v2879 = vrot.slane %v2788, 4
        %v2880 = vadd.f32 %v2788, %v2879
        %v2881 = vrot.slane %v2880, 2
        %v2882 = vadd.f32 %v2880, %v2881
        %v2883 = vrot.slane %v2882, 1
        %v2884 = vadd.f32 %v2882, %v2883
        %v2885 = vadd.f32 %v2794, %v2800
        %v2886 = vadd.f32 %v2885, %v2806
        %v2887 = vadd.f32 %v2886, %v2812
        %v2888 = vadd.f32 %v2887, %v2818
        %v2889 = vadd.f32 %v2888, %v2824
        %v2890 = vadd.f32 %v2889, %v2830
        %v2891 = vadd.f32 %v2890, %v2836
        %v2892 = vadd.f32 %v2842, %v2848
        %v2893 = vadd.f32 %v2892, %v2854
        %v2894 = vadd.f32 %v2893, %v2860
        %v2895 = vadd.f32 %v2894, %v2866
        %v2896 = vadd.f32 %v2895, %v2872
        %v2897 = vadd.f32 %v2896, %v2878
        %v2898 = vadd.f32 %v2897, %v2884
        %v2899 = vmul.f32 %v2891, %v422
        %v2900 = vmul.f32 %v2898, %v423
        %v2901 = vmul.f32 %v2771, %v2771
        %v2902 = vmul.f32 %v2772, %v2772
        %v2903 = vsub.f32 %v2899, %v2901
        %v2904 = vsub.f32 %v2900, %v2902
        %v2905 = vmax.f32 %v2903, 0.0
        %v2906 = vmax.f32 %v2904, 0.0
        %v2907 = vld [vmem:[%s8] sm:$0x1]
        %v2908 = vadd.f32 %v2905, 1e-05
        %v2909 = vadd.f32 %v2906, 1e-05
        %v2910 = vrsqrt.pop %v2908
        %v2911 = vrsqrt.pop %v2909
        %v2912 = vmul.f32 %v2907, %v2910
        %v2913 = vmul.f32 %v2907, %v2911
        %v2914 = vld [vmem:[%s9] sm:$0x1]
        %v2915 = vmul.f32 %v2771, %v2912
        %v2916 = vmul.f32 %v2772, %v2913
        %v2917 = vsub.f32 %v2914, %v2915
        %v2918 = vsub.f32 %v2914, %v2916
        %v2921 = vlaneseq
        %v2922 = vshrl.u32 %v2921, 7
        %v2923 = vsub.s32 0, %v2922
        %v2924 = vrot.slane %v2912, %v2923
        %v2925 = vlaneseq
        %v2926 = vshrl.u32 %v2925, 7
        %v2927 = vsub.s32 0, %v2926
        %v2928 = vrot.slane %v2913, %v2927
        %v2931 = vmul.f32 %v2519, %v2924
        %v2932 = vmul.f32 %v2522, %v2924
        %v2933 = vmul.f32 %v2527, %v2924
        %v2934 = vmul.f32 %v2530, %v2924
        %v2935 = vmul.f32 %v2535, %v2924
        %v2936 = vmul.f32 %v2538, %v2924
        %v2937 = vmul.f32 %v2543, %v2924
        %v2938 = vmul.f32 %v2546, %v2924
        %v2939 = vmul.f32 %v2551, %v2928
        %v2940 = vmul.f32 %v2554, %v2928
        %v2941 = vmul.f32 %v2559, %v2928
        %v2942 = vmul.f32 %v2562, %v2928
        %v2943 = vmul.f32 %v2567, %v2928
        %v2944 = vmul.f32 %v2570, %v2928
        %v2945 = vmul.f32 %v2575, %v2928
        %v2946 = vmul.f32 %v2578, %v2928
        %v2949 = vlaneseq
        %v2950 = vshrl.u32 %v2949, 7
        %v2951 = vsub.s32 0, %v2950
        %v2952 = vrot.slane %v2917, %v2951
        %v2953 = vlaneseq
        %v2954 = vshrl.u32 %v2953, 7
        %v2955 = vsub.s32 0, %v2954
        %v2956 = vrot.slane %v2918, %v2955
        %v2959 = vadd.f32 %v2931, %v2952
        %v2960 = vadd.f32 %v2932, %v2952
        %v2961 = vadd.f32 %v2933, %v2952
        %v2962 = vadd.f32 %v2934, %v2952
        %v2963 = vadd.f32 %v2935, %v2952
        %v2964 = vadd.f32 %v2936, %v2952
        %v2965 = vadd.f32 %v2937, %v2952
        %v2966 = vadd.f32 %v2938, %v2952
        %v2967 = vadd.f32 %v2939, %v2956
        %v2968 = vadd.f32 %v2940, %v2956
        %v2969 = vadd.f32 %v2941, %v2956
        %v2970 = vadd.f32 %v2942, %v2956
        %v2971 = vadd.f32 %v2943, %v2956
        %v2972 = vadd.f32 %v2944, %v2956
        %v2973 = vadd.f32 %v2945, %v2956
        %v2974 = vadd.f32 %v2946, %v2956
        %v2975 = vmul.f32 %v2959, %v2629
        %v2976 = vmul.f32 %v2960, %v2630
        %v2977 = vmul.f32 %v2961, %v2631
        %v2978 = vmul.f32 %v2962, %v2632
        %v2979 = vmul.f32 %v2963, %v2633
        %v2980 = vmul.f32 %v2964, %v2634
        %v2981 = vmul.f32 %v2965, %v2635
        %v2982 = vmul.f32 %v2966, %v2636
        %v2983 = vmul.f32 %v2967, %v2637
        %v2984 = vmul.f32 %v2968, %v2638
        %v2985 = vmul.f32 %v2969, %v2639
        %v2986 = vmul.f32 %v2970, %v2640
        %v2987 = vmul.f32 %v2971, %v2641
        %v2988 = vmul.f32 %v2972, %v2642
        %v2989 = vmul.f32 %v2973, %v2643
        %v2990 = vmul.f32 %v2974, %v2644
        %v2991 = vmax.f32 %v2975, 0.0
        %v2992 = vmax.f32 %v2976, 0.0
        %v2993 = vmax.f32 %v2977, 0.0
        %v2994 = vmax.f32 %v2978, 0.0
        %v2995 = vmax.f32 %v2979, 0.0
        %v2996 = vmax.f32 %v2980, 0.0
        %v2997 = vmax.f32 %v2981, 0.0
        %v2998 = vmax.f32 %v2982, 0.0
        %v2999 = vmax.f32 %v2983, 0.0
        %v3000 = vmax.f32 %v2984, 0.0
        %v3001 = vmax.f32 %v2985, 0.0
        %v3002 = vmax.f32 %v2986, 0.0
        %v3003 = vmax.f32 %v2987, 0.0
        %v3004 = vmax.f32 %v2988, 0.0
        %v3005 = vmax.f32 %v2989, 0.0
        %v3006 = vmax.f32 %v2990, 0.0
        %v3007 = vrot.slane %v2991, 4
        %v3008 = vmax.f32 %v2991, %v3007
        %v3009 = vrot.slane %v3008, 2
        %v3010 = vmax.f32 %v3008, %v3009
        %v3011 = vrot.slane %v3010, 1
        %v3012 = vmax.f32 %v3010, %v3011
        %v3013 = vrot.slane %v2992, 4
        %v3014 = vmax.f32 %v2992, %v3013
        %v3015 = vrot.slane %v3014, 2
        %v3016 = vmax.f32 %v3014, %v3015
        %v3017 = vrot.slane %v3016, 1
        %v3018 = vmax.f32 %v3016, %v3017
        %v3019 = vrot.slane %v2993, 4
        %v3020 = vmax.f32 %v2993, %v3019
        %v3021 = vrot.slane %v3020, 2
        %v3022 = vmax.f32 %v3020, %v3021
        %v3023 = vrot.slane %v3022, 1
        %v3024 = vmax.f32 %v3022, %v3023
        %v3025 = vrot.slane %v2994, 4
        %v3026 = vmax.f32 %v2994, %v3025
        %v3027 = vrot.slane %v3026, 2
        %v3028 = vmax.f32 %v3026, %v3027
        %v3029 = vrot.slane %v3028, 1
        %v3030 = vmax.f32 %v3028, %v3029
        %v3031 = vrot.slane %v2995, 4
        %v3032 = vmax.f32 %v2995, %v3031
        %v3033 = vrot.slane %v3032, 2
        %v3034 = vmax.f32 %v3032, %v3033
        %v3035 = vrot.slane %v3034, 1
        %v3036 = vmax.f32 %v3034, %v3035
        %v3037 = vrot.slane %v2996, 4
        %v3038 = vmax.f32 %v2996, %v3037
        %v3039 = vrot.slane %v3038, 2
        %v3040 = vmax.f32 %v3038, %v3039
        %v3041 = vrot.slane %v3040, 1
        %v3042 = vmax.f32 %v3040, %v3041
        %v3043 = vrot.slane %v2997, 4
        %v3044 = vmax.f32 %v2997, %v3043
        %v3045 = vrot.slane %v3044, 2
        %v3046 = vmax.f32 %v3044, %v3045
        %v3047 = vrot.slane %v3046, 1
        %v3048 = vmax.f32 %v3046, %v3047
        %v3049 = vrot.slane %v2998, 4
        %v3050 = vmax.f32 %v2998, %v3049
        %v3051 = vrot.slane %v3050, 2
        %v3052 = vmax.f32 %v3050, %v3051
        %v3053 = vrot.slane %v3052, 1
        %v3054 = vmax.f32 %v3052, %v3053
        %v3055 = vrot.slane %v2999, 4
        %v3056 = vmax.f32 %v2999, %v3055
        %v3057 = vrot.slane %v3056, 2
        %v3058 = vmax.f32 %v3056, %v3057
        %v3059 = vrot.slane %v3058, 1
        %v3060 = vmax.f32 %v3058, %v3059
        %v3061 = vrot.slane %v3000, 4
        %v3062 = vmax.f32 %v3000, %v3061
        %v3063 = vrot.slane %v3062, 2
        %v3064 = vmax.f32 %v3062, %v3063
        %v3065 = vrot.slane %v3064, 1
        %v3066 = vmax.f32 %v3064, %v3065
        %v3067 = vrot.slane %v3001, 4
        %v3068 = vmax.f32 %v3001, %v3067
        %v3069 = vrot.slane %v3068, 2
        %v3070 = vmax.f32 %v3068, %v3069
        %v3071 = vrot.slane %v3070, 1
        %v3072 = vmax.f32 %v3070, %v3071
        %v3073 = vrot.slane %v3002, 4
        %v3074 = vmax.f32 %v3002, %v3073
        %v3075 = vrot.slane %v3074, 2
        %v3076 = vmax.f32 %v3074, %v3075
        %v3077 = vrot.slane %v3076, 1
        %v3078 = vmax.f32 %v3076, %v3077
        %v3079 = vrot.slane %v3003, 4
        %v3080 = vmax.f32 %v3003, %v3079
        %v3081 = vrot.slane %v3080, 2
        %v3082 = vmax.f32 %v3080, %v3081
        %v3083 = vrot.slane %v3082, 1
        %v3084 = vmax.f32 %v3082, %v3083
        %v3085 = vrot.slane %v3004, 4
        %v3086 = vmax.f32 %v3004, %v3085
        %v3087 = vrot.slane %v3086, 2
        %v3088 = vmax.f32 %v3086, %v3087
        %v3089 = vrot.slane %v3088, 1
        %v3090 = vmax.f32 %v3088, %v3089
        %v3091 = vrot.slane %v3005, 4
        %v3092 = vmax.f32 %v3005, %v3091
        %v3093 = vrot.slane %v3092, 2
        %v3094 = vmax.f32 %v3092, %v3093
        %v3095 = vrot.slane %v3094, 1
        %v3096 = vmax.f32 %v3094, %v3095
        %v3097 = vrot.slane %v3006, 4
        %v3098 = vmax.f32 %v3006, %v3097
        %v3099 = vrot.slane %v3098, 2
        %v3100 = vmax.f32 %v3098, %v3099
        %v3101 = vrot.slane %v3100, 1
        %v3102 = vmax.f32 %v3100, %v3101
        %vm3119 = vcmask 1041409
        %v3120 = vsel %vm3119, %v3018, %v3012
        %vm3121 = vcmask 1042434
        %v3122 = vsel %vm3121, %v3024, %v3120
        %vm3123 = vcmask 1043459
        %v3124 = vsel %vm3123, %v3030, %v3122
        %vm3125 = vcmask 1044484
        %v3126 = vsel %vm3125, %v3036, %v3124
        %vm3127 = vcmask 1045509
        %v3128 = vsel %vm3127, %v3042, %v3126
        %vm3129 = vcmask 1046534
        %v3130 = vsel %vm3129, %v3048, %v3128
        %vm3131 = vcmask 1047559
        %v3132 = vsel %vm3131, %v3054, %v3130
        %v3133 = vsel %vm3119, %v3066, %v3060
        %v3134 = vsel %vm3121, %v3072, %v3133
        %v3135 = vsel %vm3123, %v3078, %v3134
        %v3136 = vsel %vm3125, %v3084, %v3135
        %v3137 = vsel %vm3127, %v3090, %v3136
        %v3138 = vsel %vm3129, %v3096, %v3137
        %v3139 = vsel %vm3131, %v3102, %v3138
        %3142 = vst [vmem:[%s379] sm:$0xff] %v3132
        %3143 = vst [vmem:[%s379 + $0x8] sm:$0xff] %v3139
        %s3144 = sand.u32 %s239, 1
        %s3145 = scalar_lea.sflag [#allocation6], %s3144
        %s3146 = sand.u32 %s239, 1
        %s3147 = smul.addr %s3146, 16
        %s3148 = scalar_lea.vmem [#allocation9], %s3147
        // Predicated region
        $region65: #{tpu_custom_call.1} parent=55 // pred_check
          %p3149 = pneg %p249
        $region66: #{tpu_custom_call.1} parent=55 // pred_check_branch
          %3151 = sbr.rel (%p3149) target = $region68
        $region67: #{tpu_custom_call.1} parent=55 // pred_region
          %s3152 = smul.u32 2, %s32
          %s3154 = ssub.s32 256, 256
          %3155 = vsyncadd %s3145, %s3154
          %s3156 = smul.addr %s3152, 128
          %s3157 = scalar_lea.hbm %s10, %s3156
          %s3158 = sshll.u32 %s3148, 4
          %s3159 = int_to_ptr.vmem [resolvable:$true] %s3158
          %3164 = dma.vmem_to_hbm [thread:$0]  %s3159, 256, %s3157, %s3145, 128, 128, 8
        $region68: #{tpu_custom_call.1} parent=55 // pred_fallthru
          _
      $region56: #{tpu_custom_call.1} parent=5 // pred_fallthru
        _
      %p3165 = scmp.le.s32.totalorder 2, %s27
      // Predicated region
      $region69: #{tpu_custom_call.1} parent=5 // pred_check
        %p3166 = pneg %p3165
      $region70: #{tpu_custom_call.1} parent=5 // pred_check_branch
        %3168 = sbr.rel (%p3166) target = $region72
      $region71: #{tpu_custom_call.1} parent=5 // pred_region
        %s3169 = ssub.s32 %s27, 2
        // Predicated region
        $region73: #{tpu_custom_call.1} parent=71 // pred_check
          %p3170 = pneg %p255
        $region74: #{tpu_custom_call.1} parent=71 // pred_check_branch
          %3172 = sbr.rel (%p3170) target = $region76
        $region75: #{tpu_custom_call.1} parent=71 // pred_region
          %s3173 = sand.u32 %s240, 1
          %s3174 = scalar_lea.sflag [#allocation6], %s3173
          %s3175 = sand.u32 %s240, 1
          %s3176 = smul.addr %s3175, 16
          %s3177 = scalar_lea.vmem [#allocation9], %s3176
          %3178 = dma.done %s3174, 256
        $region76: #{tpu_custom_call.1} parent=71 // pred_fallthru
          _
      $region72: #{tpu_custom_call.1} parent=5 // pred_fallthru
        _
    $region6: #{tpu_custom_call.1} parent=1 // loop_footer
      %s31 = sadd.s32 1, %s27
    $region7: #{tpu_custom_call.1} parent=1 // loop_footer_branch
      %26 = sbr.rel target = $region3
    $region8: #{tpu_custom_call.1} parent=1 // loop_exit
      _
    %3179 = vsyncpa [#allocation5], 1
    %s3180 = scalar_lea.sflag [#allocation5], 1
    %3181 = vsyncpa %s3180, 1
    %3182 = vsyncpa [#allocation8], 1
    %3183 = vsyncpa [#allocation6], 1
    %s3184 = scalar_lea.sflag [#allocation6], 1
    %3185 = vsyncpa %s3184, 1

</llo_original>
